<compile_context>
chip_gen: v7x
topology: tpu7x:2x2x1
jax: 0.10.0
libtpu: 0.0.40
codegen_flags: <defaults>
</compile_context>

<pallas_src>
import functools
import math

import jax
import jax.numpy as jnp
import numpy as np
from jax import lax
from jax.experimental import pallas as pl
from jax.experimental.pallas import tpu as pltpu


# ----------------------------------------------------------------------------
# Helpers
# ----------------------------------------------------------------------------
def _round_up(n, m):
    return (n + m - 1) // m * m


def _pick_time_tile(t, cap=128):
    """Largest divisor of t that is <= cap (time is a leading/untiled dim, no 8/128 rule)."""
    best = 1
    for cand in range(1, min(t, cap) + 1):
        if t % cand == 0:
            best = cand
    # TODO(synk): for awkward (e.g. prime) T > cap this falls back to tile=1; a padded +
    # per-step-masked variant would avoid that cliff.
    return best


# ----------------------------------------------------------------------------
# Pallas kernels
# ----------------------------------------------------------------------------
def gru_layer_kernel(unroll, x_f_ref, x_b_ref, win_f_ref, win_b_ref, bin_ref,
                     whh_ref, bhh_ref, out_f_ref, out_b_ref, h_ref):
    """TILE_T steps of both GRU directions, fused.

    x_f_ref : (TILE_T, B, F) bf16 input chunk in forward time order (chunk c).
    x_b_ref : (TILE_T, B, F) bf16 input chunk in reversed chunk order (chunk n-1-c);
              consumed row-reversed inside the chunk.
    win_*   : (F, 6H) bf16 zero-widened gate-major input weights per direction.
    bin     : (1, 6H) f32 merged input biases (b_ih_f + b_ih_b, disjoint positions).
    whh     : (2H, 6H) bf16 block-diagonal gate-major recurrent weights (both directions).
    bhh     : (1, 6H) f32 merged recurrent biases.
    out_*   : (TILE_T, B, H) bf16 per-direction hidden outputs.
    h_ref   : (B, 2H) f32 VMEM scratch, carried across grid steps ([h_f | h_b]).
    Gate-major column blocks (width H): r_f | r_b | z_f | z_b | n_f | n_b.
    """
    c = pl.program_id(0)

    @pl.when(c == 0)
    def _init():
        h_ref[...] = jnp.zeros_like(h_ref)

    tt, bsz, hsz = out_f_ref.shape
    h2, h4, h6 = 2 * hsz, 4 * hsz, 6 * hsz

    # Hoisted out of the per-timestep loop: weight loads and bias broadcasts
    # (JAX does not CSE broadcast_in_dim inside loops).
    win_f = win_f_ref[...]                               # bf16 (F, 6H)
    win_b = win_b_ref[...]                               # bf16 (F, 6H)
    whh = whh_ref[...]                                   # bf16 (2H, 6H)
    bin_v = jnp.broadcast_to(bin_ref[...], (bsz, h6))    # f32
    bhh_v = jnp.broadcast_to(bhh_ref[...], (bsz, h6))    # f32

    def step(i, h_cat):
        j = tt - 1 - i
        # Input projection for both directions. These dots do not depend on h, so they
        # pipeline under the serial recurrence chain.
        gi = (jnp.dot(x_f_ref[i], win_f, preferred_element_type=jnp.float32)
              + jnp.dot(x_b_ref[j], win_b, preferred_element_type=jnp.float32)
              + bin_v)
        # ONE block-diagonal MXU matmul per step for both directions (h-dependent).
        gh = jnp.dot(h_cat.astype(jnp.bfloat16), whh,
                     preferred_element_type=jnp.float32) + bhh_v
        # Fused gate math: sigmoid over contiguous 4H (=128 lanes for H=32), tanh over 2H.
        rz = jax.nn.sigmoid(gi[:, :h4] + gh[:, :h4])     # [r_f|r_b|z_f|z_b]
        r, z = rz[:, :h2], rz[:, h2:]
        n = jnp.tanh(gi[:, h4:] + r * gh[:, h4:])        # [n_f|n_b]
        h_new = (1.0 - z) * n + z * h_cat                # [h_f'|h_b']
        out_f_ref[i] = h_new[:, :hsz].astype(out_f_ref.dtype)
        out_b_ref[j] = h_new[:, hsz:].astype(out_b_ref.dtype)
        return h_new

    h_ref[...] = lax.fori_loop(0, tt, step, h_ref[...], unroll=unroll)


def matmul_bias_kernel(x_ref, w_ref, b_ref, o_ref):
    acc = jnp.dot(x_ref[...], w_ref[...], preferred_element_type=jnp.float32)
    o_ref[...] = (acc + b_ref[...]).astype(o_ref.dtype)


# ----------------------------------------------------------------------------
# Pallas wrappers
# ----------------------------------------------------------------------------
def run_gru_layer(inp, lw, hidden_size):
    """Fused fwd+bwd GRU layer over the whole sequence. inp: (T, B, F) bf16."""
    t, bsz, f = inp.shape
    h = hidden_size
    tile_t = _pick_time_tile(t)
    n_chunks = t // tile_t
    unroll = True if tile_t <= 32 else 8

    kernel = functools.partial(gru_layer_kernel, unroll)
    out_f, out_b = pl.pallas_call(
        kernel,
        out_shape=(jax.ShapeDtypeStruct((t, bsz, h), jnp.bfloat16),
                   jax.ShapeDtypeStruct((t, bsz, h), jnp.bfloat16)),
        grid=(n_chunks,),
        in_specs=[
            pl.BlockSpec((tile_t, bsz, f), lambda c: (c, 0, 0)),                 # fwd chunks
            pl.BlockSpec((tile_t, bsz, f), lambda c: (n_chunks - 1 - c, 0, 0)),  # bwd chunks
            pl.BlockSpec((f, 6 * h), lambda c: (0, 0)),                          # W_in fwd (wide)
            pl.BlockSpec((f, 6 * h), lambda c: (0, 0)),                          # W_in bwd (wide)
            pl.BlockSpec((1, 6 * h), lambda c: (0, 0)),                          # b_in (merged)
            pl.BlockSpec((2 * h, 6 * h), lambda c: (0, 0)),                      # W_hh block-diag
            pl.BlockSpec((1, 6 * h), lambda c: (0, 0)),                          # b_hh (merged)
        ],
        out_specs=(
            pl.BlockSpec((tile_t, bsz, h), lambda c: (c, 0, 0)),
            pl.BlockSpec((tile_t, bsz, h), lambda c: (n_chunks - 1 - c, 0, 0)),
        ),
        scratch_shapes=[pltpu.VMEM((bsz, 2 * h), jnp.float32)],
        compiler_params=pltpu.CompilerParams(dimension_semantics=("arbitrary",)),
    )(inp, inp, lw["win_f"], lw["win_b"], lw["b_in"], lw["whh"], lw["b_hh"])
    return out_f, out_b


def fc_pallas(x2d, w, b, num_classes):
    """(N, 2H) bf16 @ (2H, C_pad) bf16 + b, f32 accumulation, lane-dense (128-wide) stores."""
    n, f = x2d.shape
    c_pad = w.shape[1]
    n_pad = _round_up(n, 8)
    tile_n = min(n_pad, 512)
    n_pad = _round_up(n_pad, tile_n)
    if n_pad != n:
        x2d = jnp.pad(x2d, ((0, n_pad - n), (0, 0)))
    out = pl.pallas_call(
        matmul_bias_kernel,
        out_shape=jax.ShapeDtypeStruct((n_pad, c_pad), jnp.float32),
        grid=(n_pad // tile_n,),
        in_specs=[pl.BlockSpec((tile_n, f), lambda i: (i, 0)),
                  pl.BlockSpec((f, c_pad), lambda i: (0, 0)),
                  pl.BlockSpec((1, c_pad), lambda i: (0, 0))],
        out_specs=pl.BlockSpec((tile_n, c_pad), lambda i: (i, 0)),
        compiler_params=pltpu.CompilerParams(dimension_semantics=("parallel",)),
    )(x2d, w, b)
    return out[:n, :num_classes]


def birnn_gru_forward(x, prep, hidden_size, num_layers, num_classes):
    t, bsz, _ = x.shape
    h = hidden_size
    inp = x.astype(jnp.bfloat16)
    for l in range(num_layers):
        out_f, out_b = run_gru_layer(inp, prep["layers"][l], h)
        inp = jnp.concatenate([out_f, out_b], axis=-1)       # (T, B, 2H) bf16
        # TODO(synk): inter-layer dropout (p=0.3) is stochastic; implemented as identity
        # (PyTorch eval-mode semantics).
    logits = fc_pallas(inp.reshape(t * bsz, 2 * h), prep["fc_w"], prep["fc_b"], num_classes)
    return logits.reshape(t, bsz, num_classes)


# ----------------------------------------------------------------------------
# Parameter init (PyTorch layout) and one-time kernel-layout preparation
# ----------------------------------------------------------------------------
def init_params(key, input_size, hidden_size, num_layers, num_classes):
    H = hidden_size
    k = 1.0 / math.sqrt(H)
    params = {"layers": []}
    for l in range(num_layers):
        in_size = input_size if l == 0 else 2 * H
        dirs = []
        for _d in range(2):
            key, k1, k2, k3, k4 = jax.random.split(key, 5)
            w_ih = jax.random.uniform(k1, (3 * H, in_size), jnp.float32, -k, k)
            w_hh = jax.random.uniform(k2, (3 * H, H), jnp.float32, -k, k)
            b_ih = jax.random.uniform(k3, (3 * H,), jnp.float32, -k, k)
            b_hh = jax.random.uniform(k4, (3 * H,), jnp.float32, -k, k)
            dirs.append((w_ih, w_hh, b_ih, b_hh))
        params["layers"].append(tuple(dirs))
    kf = 1.0 / math.sqrt(2 * H)
    key, k1, k2 = jax.random.split(key, 3)
    params["fc_w"] = jax.random.uniform(k1, (num_classes, 2 * H), jnp.float32, -kf, kf)
    params["fc_b"] = jax.random.uniform(k2, (num_classes,), jnp.float32, -kf, kf)
    return params


def prepare_params(params, input_size, hidden_size, num_layers, num_classes):
    """Pre-fuse / pre-cast weights once (gate-major block layout, bf16 MXU operands).

    Gate-major column blocks of width H: [r_f | r_b | z_f | z_b | n_f | n_b].
    """
    H = hidden_size
    prep = {"layers": []}

    def widen_in(w_ih, d):                       # (3H, Din) -> (Din, 6H), zero elsewhere
        wt = w_ih.T                              # (Din, 3H), gate cols [r|z|n]
        wide = jnp.zeros((wt.shape[0], 6 * H), jnp.float32)
        for g in range(3):
            blk = 2 * g + d
            wide = wide.at[:, blk * H:(blk + 1) * H].set(wt[:, g * H:(g + 1) * H])
        return wide

    def widen_vec(b, d):                         # (3H,) -> (6H,), zero elsewhere
        wide = jnp.zeros((6 * H,), jnp.float32)
        for g in range(3):
            blk = 2 * g + d
            wide = wide.at[blk * H:(blk + 1) * H].set(b[g * H:(g + 1) * H])
        return wide

    for l in range(num_layers):
        (wih_f, whh_f, bih_f, bhh_f), (wih_b, whh_b, bih_b, bhh_b) = params["layers"][l]

        win_f = widen_in(wih_f, 0).astype(jnp.bfloat16)
        win_b = widen_in(wih_b, 1).astype(jnp.bfloat16)
        b_in = (widen_vec(bih_f, 0) + widen_vec(bih_b, 1)).reshape(1, 6 * H)

        whh = jnp.zeros((2 * H, 6 * H), jnp.float32)     # block-diagonal, gate-major
        for d, w in enumerate((whh_f, whh_b)):
            wt = w.T                                     # (H, 3H)
            for g in range(3):
                blk = 2 * g + d
                whh = whh.at[d * H:(d + 1) * H,
                             blk * H:(blk + 1) * H].set(wt[:, g * H:(g + 1) * H])
        b_hh = (widen_vec(bhh_f, 0) + widen_vec(bhh_b, 1)).reshape(1, 6 * H)

        prep["layers"].append({"win_f": win_f, "win_b": win_b, "b_in": b_in,
                               "whh": whh.astype(jnp.bfloat16), "b_hh": b_hh})

    c_pad = _round_up(max(num_classes, 1), 128)
    fc_wt = params["fc_w"].T                              # (2H, C)
    prep["fc_w"] = (jnp.zeros((2 * H, c_pad), jnp.float32)
                    .at[:, :num_classes].set(fc_wt).astype(jnp.bfloat16))
    prep["fc_b"] = jnp.zeros((1, c_pad), jnp.float32).at[0, :num_classes].set(params["fc_b"])
    return prep


# ----------------------------------------------------------------------------
# Pure-JAX reference (mirrors the kernel's bf16-operand / f32-accumulate matmuls)
# ----------------------------------------------------------------------------
def _bf16_dot(a, b):
    return jnp.dot(a.astype(jnp.bfloat16), b.astype(jnp.bfloat16),
                   preferred_element_type=jnp.float32)


def gru_dir_ref(x, w_ih, w_hh, b_ih, b_hh, hsz):
    t, bsz, din = x.shape
    gi = (_bf16_dot(x.reshape(t * bsz, din), w_ih.T) + b_ih).reshape(t, bsz, 3 * hsz)

    def step(hid, gi_t):
        gh = _bf16_dot(hid, w_hh.T) + b_hh
        r = jax.nn.sigmoid(gi_t[:, :hsz] + gh[:, :hsz])
        z = jax.nn.sigmoid(gi_t[:, hsz:2 * hsz] + gh[:, hsz:2 * hsz])
        n = jnp.tanh(gi_t[:, 2 * hsz:] + r * gh[:, 2 * hsz:])
        h_new = (1.0 - z) * n + z * hid
        return h_new, h_new

    h0 = jnp.zeros((bsz, hsz), jnp.float32)
    _, ys = lax.scan(step, h0, gi)
    return ys


def birnn_gru_ref(x, params, hidden_size, num_layers, num_classes):
    inp = x
    for l in range(num_layers):
        (wih_f, whh_f, bih_f, bhh_f), (wih_b, whh_b, bih_b, bhh_b) = params["layers"][l]
        out_f = gru_dir_ref(inp, wih_f, whh_f, bih_f, bhh_f, hidden_size)
        out_b = gru_dir_ref(inp[::-1], wih_b, whh_b, bih_b, bhh_b, hidden_size)[::-1]
        inp = jnp.concatenate([out_f, out_b], axis=-1)
    t, bsz, f = inp.shape
    logits = _bf16_dot(inp.reshape(t * bsz, f), params["fc_w"].T) + params["fc_b"]
    return logits.reshape(t, bsz, num_classes)


# ----------------------------------------------------------------------------
if __name__ == "__main__":
    # Small shapes consistent with the module: x is (seq, batch, input_size).
    T, B = 8, 2
    input_size, hidden_size, num_layers, num_classes = 16, 32, 2, 10

    key = jax.random.PRNGKey(0)
    key, kx = jax.random.split(key)
    x = jax.random.normal(kx, (T, B, input_size), jnp.float32)
    params = init_params(key, input_size, hidden_size, num_layers, num_classes)
    prep = prepare_params(params, input_size, hidden_size, num_layers, num_classes)

    fwd = jax.jit(functools.partial(birnn_gru_forward, hidden_size=hidden_size,
                                    num_layers=num_layers, num_classes=num_classes))
    out = jax.block_until_ready(fwd(x, prep))

    ref_fn = jax.jit(functools.partial(birnn_gru_ref, hidden_size=hidden_size,
                                       num_layers=num_layers, num_classes=num_classes))
    ref = jax.block_until_ready(ref_fn(x, params))

    assert out.shape == (T, B, num_classes), out.shape
    # Kernel and reference both use bf16 MXU operands with f32 accumulation; residual
    # differences come only from accumulation order / transcendental lowering.
    np.testing.assert_allclose(np.asarray(out), np.asarray(ref), rtol=1e-2, atol=1e-2)
    print("KERNEL_OK")
</pallas_src>

<mosaic_0001>
module attributes {stable_mosaic.version = 11 : i64} {
  func.func @gru_layer_kernel(%arg0: i32, %arg1: memref<8x2x64xbf16, #tpu.memory_space<vmem>>, %arg2: memref<8x2x64xbf16, #tpu.memory_space<vmem>>, %arg3: memref<64x192xbf16, #tpu.memory_space<vmem>>, %arg4: memref<64x192xbf16, #tpu.memory_space<vmem>>, %arg5: memref<1x192xf32, #tpu.memory_space<vmem>>, %arg6: memref<64x192xbf16, #tpu.memory_space<vmem>>, %arg7: memref<1x192xf32, #tpu.memory_space<vmem>>, %arg8: memref<8x2x32xbf16, #tpu.memory_space<vmem>>, %arg9: memref<8x2x32xbf16, #tpu.memory_space<vmem>>, %arg10: memref<2x64xf32, #tpu.memory_space<vmem>>) attributes {dimension_semantics = [#tpu.dimension_semantics<arbitrary>], iteration_bounds = array<i64: 1>, scalar_prefetch = 0 : i64, scratch_operands = 1 : i64, tpu.core_type = #tpu.core_type<tc>, window_params = [{transform_indices = @transform_0, window_bounds = array<i64: 8, 2, 64>}, {transform_indices = @transform_1, window_bounds = array<i64: 8, 2, 64>}, {pipeline_mode = #tpu.pipeline_mode<synchronous>, transform_indices = @transform_2, window_bounds = array<i64: 64, 192>}, {pipeline_mode = #tpu.pipeline_mode<synchronous>, transform_indices = @transform_3, window_bounds = array<i64: 64, 192>}, {pipeline_mode = #tpu.pipeline_mode<synchronous>, transform_indices = @transform_4, window_bounds = array<i64: 1, 192>}, {pipeline_mode = #tpu.pipeline_mode<synchronous>, transform_indices = @transform_5, window_bounds = array<i64: 64, 192>}, {pipeline_mode = #tpu.pipeline_mode<synchronous>, transform_indices = @transform_6, window_bounds = array<i64: 1, 192>}, {transform_indices = @transform_7, window_bounds = array<i64: 8, 2, 32>}, {transform_indices = @transform_8, window_bounds = array<i64: 8, 2, 32>}]} {
    %c0_i32 = arith.constant 0 : i32
    %0 = arith.cmpi eq, %arg0, %c0_i32 : i32
    %1 = arith.extui %0 : i1 to i32
    %c0_i32_0 = arith.constant 0 : i32
    %2 = arith.cmpi ne, %1, %c0_i32_0 : i32
    scf.if %2 {
      %cst_126 = arith.constant 0.000000e+00 : f32
      %382 = vector.broadcast %cst_126 : f32 to vector<2x64xf32>
      %c0_127 = arith.constant 0 : index
      %c0_128 = arith.constant 0 : index
      %383 = vector.load %arg10[%c0_127, %c0_128] : memref<2x64xf32, #tpu.memory_space<vmem>>, vector<2x64xf32>
      tpu.vector_store %arg10[%c0_127, %c0_128], %382 {strides = array<i32>} : memref<2x64xf32, #tpu.memory_space<vmem>>, vector<2x64xf32>,
    } else {
    }
    %c0 = arith.constant 0 : index
    %c0_1 = arith.constant 0 : index
    %3 = vector.load %arg3[%c0, %c0_1] : memref<64x192xbf16, #tpu.memory_space<vmem>>, vector<64x192xbf16>
    %c0_2 = arith.constant 0 : index
    %c0_3 = arith.constant 0 : index
    %4 = vector.load %arg4[%c0_2, %c0_3] : memref<64x192xbf16, #tpu.memory_space<vmem>>, vector<64x192xbf16>
    %c0_4 = arith.constant 0 : index
    %c0_5 = arith.constant 0 : index
    %5 = vector.load %arg6[%c0_4, %c0_5] : memref<64x192xbf16, #tpu.memory_space<vmem>>, vector<64x192xbf16>
    %c0_6 = arith.constant 0 : index
    %c0_7 = arith.constant 0 : index
    %6 = vector.load %arg5[%c0_6, %c0_7] : memref<1x192xf32, #tpu.memory_space<vmem>>, vector<1x192xf32>
    %7 = vector.shape_cast %6 : vector<1x192xf32> to vector<1x192xf32>
    %8 = vector.broadcast %7 : vector<1x192xf32> to vector<2x192xf32>
    %c0_8 = arith.constant 0 : index
    %c0_9 = arith.constant 0 : index
    %9 = vector.load %arg7[%c0_8, %c0_9] : memref<1x192xf32, #tpu.memory_space<vmem>>, vector<1x192xf32>
    %10 = vector.shape_cast %9 : vector<1x192xf32> to vector<1x192xf32>
    %11 = vector.broadcast %10 : vector<1x192xf32> to vector<2x192xf32>
    %c0_10 = arith.constant 0 : index
    %c0_11 = arith.constant 0 : index
    %12 = vector.load %arg10[%c0_10, %c0_11] : memref<2x64xf32, #tpu.memory_space<vmem>>, vector<2x64xf32>
    %c0_i32_12 = arith.constant 0 : i32
    %c7_i32 = arith.constant 7 : i32
    %13 = arith.subi %c7_i32, %c0_i32_12 : i32
    %14 = arith.index_cast %c0_i32_12 : i32 to index
    %c0_13 = arith.constant 0 : index
    %c0_14 = arith.constant 0 : index
    %15 = vector.load %arg1[%14, %c0_13, %c0_14] : memref<8x2x64xbf16, #tpu.memory_space<vmem>>, vector<1x2x64xbf16>
    %16 = vector.shape_cast %15 : vector<1x2x64xbf16> to vector<2x64xbf16>
    %cst = arith.constant dense<0.000000e+00> : vector<2x192xf32>
    %17 = tpu.matmul %16, %3, %cst {dimension_numbers = #tpu.dot_dimension_numbers<[1], [0], [0], [1], [0, 0, 1, 1], [], []>} : vector<2x64xbf16>, vector<64x192xbf16>, vector<2x192xf32> -> vector<2x192xf32>
    %18 = arith.index_cast %13 : i32 to index
    %c0_15 = arith.constant 0 : index
    %c0_16 = arith.constant 0 : index
    %19 = vector.load %arg2[%18, %c0_15, %c0_16] : memref<8x2x64xbf16, #tpu.memory_space<vmem>>, vector<1x2x64xbf16>
    %20 = vector.shape_cast %19 : vector<1x2x64xbf16> to vector<2x64xbf16>
    %cst_17 = arith.constant dense<0.000000e+00> : vector<2x192xf32>
    %21 = tpu.matmul %20, %4, %cst_17 {dimension_numbers = #tpu.dot_dimension_numbers<[1], [0], [0], [1], [0, 0, 1, 1], [], []>} : vector<2x64xbf16>, vector<64x192xbf16>, vector<2x192xf32> -> vector<2x192xf32>
    %22 = arith.addf %17, %21 : vector<2x192xf32>
    %23 = arith.addf %22, %8 : vector<2x192xf32>
    %24 = arith.truncf %12 : vector<2x64xf32> to vector<2x64xbf16>
    %cst_18 = arith.constant dense<0.000000e+00> : vector<2x192xf32>
    %25 = tpu.matmul %24, %5, %cst_18 {dimension_numbers = #tpu.dot_dimension_numbers<[1], [0], [0], [1], [0, 0, 1, 1], [], []>} : vector<2x64xbf16>, vector<64x192xbf16>, vector<2x192xf32> -> vector<2x192xf32>
    %26 = arith.addf %25, %11 : vector<2x192xf32>
    %27 = vector.extract_strided_slice %23 {offsets = [0, 0], sizes = [2, 128], strides = [1, 1]} : vector<2x192xf32> to vector<2x128xf32>
    %28 = vector.extract_strided_slice %26 {offsets = [0, 0], sizes = [2, 128], strides = [1, 1]} : vector<2x192xf32> to vector<2x128xf32>
    %29 = arith.addf %27, %28 : vector<2x128xf32>
    %30 = arith.negf %29 : vector<2x128xf32>
    %31 = math.exp %30 : vector<2x128xf32>
    %cst_19 = arith.constant 1.000000e+00 : f32
    %32 = vector.broadcast %cst_19 : f32 to vector<2x128xf32>
    %33 = arith.addf %32, %31 : vector<2x128xf32>
    %34 = arith.divf %32, %33 : vector<2x128xf32>
    %35 = vector.extract_strided_slice %34 {offsets = [0, 0], sizes = [2, 64], strides = [1, 1]} : vector<2x128xf32> to vector<2x64xf32>
    %36 = vector.extract_strided_slice %34 {offsets = [0, 64], sizes = [2, 64], strides = [1, 1]} : vector<2x128xf32> to vector<2x64xf32>
    %37 = vector.extract_strided_slice %23 {offsets = [0, 128], sizes = [2, 64], strides = [1, 1]} : vector<2x192xf32> to vector<2x64xf32>
    %38 = vector.extract_strided_slice %26 {offsets = [0, 128], sizes = [2, 64], strides = [1, 1]} : vector<2x192xf32> to vector<2x64xf32>
    %39 = arith.mulf %35, %38 : vector<2x64xf32>
    %40 = arith.addf %37, %39 : vector<2x64xf32>
    %41 = math.tanh %40 : vector<2x64xf32>
    %cst_20 = arith.constant 1.000000e+00 : f32
    %42 = vector.broadcast %cst_20 : f32 to vector<2x64xf32>
    %43 = arith.subf %42, %36 : vector<2x64xf32>
    %44 = arith.mulf %43, %41 : vector<2x64xf32>
    %45 = arith.mulf %36, %12 : vector<2x64xf32>
    %46 = arith.addf %44, %45 : vector<2x64xf32>
    %47 = vector.extract_strided_slice %46 {offsets = [0, 0], sizes = [2, 32], strides = [1, 1]} : vector<2x64xf32> to vector<2x32xf32>
    %48 = arith.truncf %47 : vector<2x32xf32> to vector<2x32xbf16>
    %49 = arith.index_cast %c0_i32_12 : i32 to index
    %c0_21 = arith.constant 0 : index
    %c0_22 = arith.constant 0 : index
    %50 = vector.load %arg8[%49, %c0_21, %c0_22] : memref<8x2x32xbf16, #tpu.memory_space<vmem>>, vector<1x2x32xbf16>
    %51 = vector.shape_cast %50 : vector<1x2x32xbf16> to vector<2x32xbf16>
    %52 = vector.shape_cast %48 : vector<2x32xbf16> to vector<1x2x32xbf16>
    tpu.vector_store %arg8[%49, %c0_21, %c0_22], %52 {strides = array<i32>} : memref<8x2x32xbf16, #tpu.memory_space<vmem>>, vector<1x2x32xbf16>,
    %53 = vector.extract_strided_slice %46 {offsets = [0, 32], sizes = [2, 32], strides = [1, 1]} : vector<2x64xf32> to vector<2x32xf32>
    %54 = arith.truncf %53 : vector<2x32xf32> to vector<2x32xbf16>
    %55 = arith.index_cast %13 : i32 to index
    %c0_23 = arith.constant 0 : index
    %c0_24 = arith.constant 0 : index
    %56 = vector.load %arg9[%55, %c0_23, %c0_24] : memref<8x2x32xbf16, #tpu.memory_space<vmem>>, vector<1x2x32xbf16>
    %57 = vector.shape_cast %56 : vector<1x2x32xbf16> to vector<2x32xbf16>
    %58 = vector.shape_cast %54 : vector<2x32xbf16> to vector<1x2x32xbf16>
    tpu.vector_store %arg9[%55, %c0_23, %c0_24], %58 {strides = array<i32>} : memref<8x2x32xbf16, #tpu.memory_space<vmem>>, vector<1x2x32xbf16>,
    %c1_i32 = arith.constant 1 : i32
    %c7_i32_25 = arith.constant 7 : i32
    %59 = arith.subi %c7_i32_25, %c1_i32 : i32
    %60 = arith.index_cast %c1_i32 : i32 to index
    %c0_26 = arith.constant 0 : index
    %c0_27 = arith.constant 0 : index
    %61 = vector.load %arg1[%60, %c0_26, %c0_27] : memref<8x2x64xbf16, #tpu.memory_space<vmem>>, vector<1x2x64xbf16>
    %62 = vector.shape_cast %61 : vector<1x2x64xbf16> to vector<2x64xbf16>
    %cst_28 = arith.constant dense<0.000000e+00> : vector<2x192xf32>
    %63 = tpu.matmul %62, %3, %cst_28 {dimension_numbers = #tpu.dot_dimension_numbers<[1], [0], [0], [1], [0, 0, 1, 1], [], []>} : vector<2x64xbf16>, vector<64x192xbf16>, vector<2x192xf32> -> vector<2x192xf32>
    %64 = arith.index_cast %59 : i32 to index
    %c0_29 = arith.constant 0 : index
    %c0_30 = arith.constant 0 : index
    %65 = vector.load %arg2[%64, %c0_29, %c0_30] : memref<8x2x64xbf16, #tpu.memory_space<vmem>>, vector<1x2x64xbf16>
    %66 = vector.shape_cast %65 : vector<1x2x64xbf16> to vector<2x64xbf16>
    %cst_31 = arith.constant dense<0.000000e+00> : vector<2x192xf32>
    %67 = tpu.matmul %66, %4, %cst_31 {dimension_numbers = #tpu.dot_dimension_numbers<[1], [0], [0], [1], [0, 0, 1, 1], [], []>} : vector<2x64xbf16>, vector<64x192xbf16>, vector<2x192xf32> -> vector<2x192xf32>
    %68 = arith.addf %63, %67 : vector<2x192xf32>
    %69 = arith.addf %68, %8 : vector<2x192xf32>
    %70 = arith.truncf %46 : vector<2x64xf32> to vector<2x64xbf16>
    %cst_32 = arith.constant dense<0.000000e+00> : vector<2x192xf32>
    %71 = tpu.matmul %70, %5, %cst_32 {dimension_numbers = #tpu.dot_dimension_numbers<[1], [0], [0], [1], [0, 0, 1, 1], [], []>} : vector<2x64xbf16>, vector<64x192xbf16>, vector<2x192xf32> -> vector<2x192xf32>
    %72 = arith.addf %71, %11 : vector<2x192xf32>
    %73 = vector.extract_strided_slice %69 {offsets = [0, 0], sizes = [2, 128], strides = [1, 1]} : vector<2x192xf32> to vector<2x128xf32>
    %74 = vector.extract_strided_slice %72 {offsets = [0, 0], sizes = [2, 128], strides = [1, 1]} : vector<2x192xf32> to vector<2x128xf32>
    %75 = arith.addf %73, %74 : vector<2x128xf32>
    %76 = arith.negf %75 : vector<2x128xf32>
    %77 = math.exp %76 : vector<2x128xf32>
    %cst_33 = arith.constant 1.000000e+00 : f32
    %78 = vector.broadcast %cst_33 : f32 to vector<2x128xf32>
    %79 = arith.addf %78, %77 : vector<2x128xf32>
    %80 = arith.divf %78, %79 : vector<2x128xf32>
    %81 = vector.extract_strided_slice %80 {offsets = [0, 0], sizes = [2, 64], strides = [1, 1]} : vector<2x128xf32> to vector<2x64xf32>
    %82 = vector.extract_strided_slice %80 {offsets = [0, 64], sizes = [2, 64], strides = [1, 1]} : vector<2x128xf32> to vector<2x64xf32>
    %83 = vector.extract_strided_slice %69 {offsets = [0, 128], sizes = [2, 64], strides = [1, 1]} : vector<2x192xf32> to vector<2x64xf32>
    %84 = vector.extract_strided_slice %72 {offsets = [0, 128], sizes = [2, 64], strides = [1, 1]} : vector<2x192xf32> to vector<2x64xf32>
    %85 = arith.mulf %81, %84 : vector<2x64xf32>
    %86 = arith.addf %83, %85 : vector<2x64xf32>
    %87 = math.tanh %86 : vector<2x64xf32>
    %cst_34 = arith.constant 1.000000e+00 : f32
    %88 = vector.broadcast %cst_34 : f32 to vector<2x64xf32>
    %89 = arith.subf %88, %82 : vector<2x64xf32>
    %90 = arith.mulf %89, %87 : vector<2x64xf32>
    %91 = arith.mulf %82, %46 : vector<2x64xf32>
    %92 = arith.addf %90, %91 : vector<2x64xf32>
    %93 = vector.extract_strided_slice %92 {offsets = [0, 0], sizes = [2, 32], strides = [1, 1]} : vector<2x64xf32> to vector<2x32xf32>
    %94 = arith.truncf %93 : vector<2x32xf32> to vector<2x32xbf16>
    %95 = arith.index_cast %c1_i32 : i32 to index
    %c0_35 = arith.constant 0 : index
    %c0_36 = arith.constant 0 : index
    %96 = vector.load %arg8[%95, %c0_35, %c0_36] : memref<8x2x32xbf16, #tpu.memory_space<vmem>>, vector<1x2x32xbf16>
    %97 = vector.shape_cast %96 : vector<1x2x32xbf16> to vector<2x32xbf16>
    %98 = vector.shape_cast %94 : vector<2x32xbf16> to vector<1x2x32xbf16>
    tpu.vector_store %arg8[%95, %c0_35, %c0_36], %98 {strides = array<i32>} : memref<8x2x32xbf16, #tpu.memory_space<vmem>>, vector<1x2x32xbf16>,
    %99 = vector.extract_strided_slice %92 {offsets = [0, 32], sizes = [2, 32], strides = [1, 1]} : vector<2x64xf32> to vector<2x32xf32>
    %100 = arith.truncf %99 : vector<2x32xf32> to vector<2x32xbf16>
    %101 = arith.index_cast %59 : i32 to index
    %c0_37 = arith.constant 0 : index
    %c0_38 = arith.constant 0 : index
    %102 = vector.load %arg9[%101, %c0_37, %c0_38] : memref<8x2x32xbf16, #tpu.memory_space<vmem>>, vector<1x2x32xbf16>
    %103 = vector.shape_cast %102 : vector<1x2x32xbf16> to vector<2x32xbf16>
    %104 = vector.shape_cast %100 : vector<2x32xbf16> to vector<1x2x32xbf16>
    tpu.vector_store %arg9[%101, %c0_37, %c0_38], %104 {strides = array<i32>} : memref<8x2x32xbf16, #tpu.memory_space<vmem>>, vector<1x2x32xbf16>,
    %c2_i32 = arith.constant 2 : i32
    %c7_i32_39 = arith.constant 7 : i32
    %105 = arith.subi %c7_i32_39, %c2_i32 : i32
    %106 = arith.index_cast %c2_i32 : i32 to index
    %c0_40 = arith.constant 0 : index
    %c0_41 = arith.constant 0 : index
    %107 = vector.load %arg1[%106, %c0_40, %c0_41] : memref<8x2x64xbf16, #tpu.memory_space<vmem>>, vector<1x2x64xbf16>
    %108 = vector.shape_cast %107 : vector<1x2x64xbf16> to vector<2x64xbf16>
    %cst_42 = arith.constant dense<0.000000e+00> : vector<2x192xf32>
    %109 = tpu.matmul %108, %3, %cst_42 {dimension_numbers = #tpu.dot_dimension_numbers<[1], [0], [0], [1], [0, 0, 1, 1], [], []>} : vector<2x64xbf16>, vector<64x192xbf16>, vector<2x192xf32> -> vector<2x192xf32>
    %110 = arith.index_cast %105 : i32 to index
    %c0_43 = arith.constant 0 : index
    %c0_44 = arith.constant 0 : index
    %111 = vector.load %arg2[%110, %c0_43, %c0_44] : memref<8x2x64xbf16, #tpu.memory_space<vmem>>, vector<1x2x64xbf16>
    %112 = vector.shape_cast %111 : vector<1x2x64xbf16> to vector<2x64xbf16>
    %cst_45 = arith.constant dense<0.000000e+00> : vector<2x192xf32>
    %113 = tpu.matmul %112, %4, %cst_45 {dimension_numbers = #tpu.dot_dimension_numbers<[1], [0], [0], [1], [0, 0, 1, 1], [], []>} : vector<2x64xbf16>, vector<64x192xbf16>, vector<2x192xf32> -> vector<2x192xf32>
    %114 = arith.addf %109, %113 : vector<2x192xf32>
    %115 = arith.addf %114, %8 : vector<2x192xf32>
    %116 = arith.truncf %92 : vector<2x64xf32> to vector<2x64xbf16>
    %cst_46 = arith.constant dense<0.000000e+00> : vector<2x192xf32>
    %117 = tpu.matmul %116, %5, %cst_46 {dimension_numbers = #tpu.dot_dimension_numbers<[1], [0], [0], [1], [0, 0, 1, 1], [], []>} : vector<2x64xbf16>, vector<64x192xbf16>, vector<2x192xf32> -> vector<2x192xf32>
    %118 = arith.addf %117, %11 : vector<2x192xf32>
    %119 = vector.extract_strided_slice %115 {offsets = [0, 0], sizes = [2, 128], strides = [1, 1]} : vector<2x192xf32> to vector<2x128xf32>
    %120 = vector.extract_strided_slice %118 {offsets = [0, 0], sizes = [2, 128], strides = [1, 1]} : vector<2x192xf32> to vector<2x128xf32>
    %121 = arith.addf %119, %120 : vector<2x128xf32>
    %122 = arith.negf %121 : vector<2x128xf32>
    %123 = math.exp %122 : vector<2x128xf32>
    %cst_47 = arith.constant 1.000000e+00 : f32
    %124 = vector.broadcast %cst_47 : f32 to vector<2x128xf32>
    %125 = arith.addf %124, %123 : vector<2x128xf32>
    %126 = arith.divf %124, %125 : vector<2x128xf32>
    %127 = vector.extract_strided_slice %126 {offsets = [0, 0], sizes = [2, 64], strides = [1, 1]} : vector<2x128xf32> to vector<2x64xf32>
    %128 = vector.extract_strided_slice %126 {offsets = [0, 64], sizes = [2, 64], strides = [1, 1]} : vector<2x128xf32> to vector<2x64xf32>
    %129 = vector.extract_strided_slice %115 {offsets = [0, 128], sizes = [2, 64], strides = [1, 1]} : vector<2x192xf32> to vector<2x64xf32>
    %130 = vector.extract_strided_slice %118 {offsets = [0, 128], sizes = [2, 64], strides = [1, 1]} : vector<2x192xf32> to vector<2x64xf32>
    %131 = arith.mulf %127, %130 : vector<2x64xf32>
    %132 = arith.addf %129, %131 : vector<2x64xf32>
    %133 = math.tanh %132 : vector<2x64xf32>
    %cst_48 = arith.constant 1.000000e+00 : f32
    %134 = vector.broadcast %cst_48 : f32 to vector<2x64xf32>
    %135 = arith.subf %134, %128 : vector<2x64xf32>
    %136 = arith.mulf %135, %133 : vector<2x64xf32>
    %137 = arith.mulf %128, %92 : vector<2x64xf32>
    %138 = arith.addf %136, %137 : vector<2x64xf32>
    %139 = vector.extract_strided_slice %138 {offsets = [0, 0], sizes = [2, 32], strides = [1, 1]} : vector<2x64xf32> to vector<2x32xf32>
    %140 = arith.truncf %139 : vector<2x32xf32> to vector<2x32xbf16>
    %141 = arith.index_cast %c2_i32 : i32 to index
    %c0_49 = arith.constant 0 : index
    %c0_50 = arith.constant 0 : index
    %142 = vector.load %arg8[%141, %c0_49, %c0_50] : memref<8x2x32xbf16, #tpu.memory_space<vmem>>, vector<1x2x32xbf16>
    %143 = vector.shape_cast %142 : vector<1x2x32xbf16> to vector<2x32xbf16>
    %144 = vector.shape_cast %140 : vector<2x32xbf16> to vector<1x2x32xbf16>
    tpu.vector_store %arg8[%141, %c0_49, %c0_50], %144 {strides = array<i32>} : memref<8x2x32xbf16, #tpu.memory_space<vmem>>, vector<1x2x32xbf16>,
    %145 = vector.extract_strided_slice %138 {offsets = [0, 32], sizes = [2, 32], strides = [1, 1]} : vector<2x64xf32> to vector<2x32xf32>
    %146 = arith.truncf %145 : vector<2x32xf32> to vector<2x32xbf16>
    %147 = arith.index_cast %105 : i32 to index
    %c0_51 = arith.constant 0 : index
    %c0_52 = arith.constant 0 : index
    %148 = vector.load %arg9[%147, %c0_51, %c0_52] : memref<8x2x32xbf16, #tpu.memory_space<vmem>>, vector<1x2x32xbf16>
    %149 = vector.shape_cast %148 : vector<1x2x32xbf16> to vector<2x32xbf16>
    %150 = vector.shape_cast %146 : vector<2x32xbf16> to vector<1x2x32xbf16>
    tpu.vector_store %arg9[%147, %c0_51, %c0_52], %150 {strides = array<i32>} : memref<8x2x32xbf16, #tpu.memory_space<vmem>>, vector<1x2x32xbf16>,
    %c3_i32 = arith.constant 3 : i32
    %c7_i32_53 = arith.constant 7 : i32
    %151 = arith.subi %c7_i32_53, %c3_i32 : i32
    %152 = arith.index_cast %c3_i32 : i32 to index
    %c0_54 = arith.constant 0 : index
    %c0_55 = arith.constant 0 : index
    %153 = vector.load %arg1[%152, %c0_54, %c0_55] : memref<8x2x64xbf16, #tpu.memory_space<vmem>>, vector<1x2x64xbf16>
    %154 = vector.shape_cast %153 : vector<1x2x64xbf16> to vector<2x64xbf16>
    %cst_56 = arith.constant dense<0.000000e+00> : vector<2x192xf32>
    %155 = tpu.matmul %154, %3, %cst_56 {dimension_numbers = #tpu.dot_dimension_numbers<[1], [0], [0], [1], [0, 0, 1, 1], [], []>} : vector<2x64xbf16>, vector<64x192xbf16>, vector<2x192xf32> -> vector<2x192xf32>
    %156 = arith.index_cast %151 : i32 to index
    %c0_57 = arith.constant 0 : index
    %c0_58 = arith.constant 0 : index
    %157 = vector.load %arg2[%156, %c0_57, %c0_58] : memref<8x2x64xbf16, #tpu.memory_space<vmem>>, vector<1x2x64xbf16>
    %158 = vector.shape_cast %157 : vector<1x2x64xbf16> to vector<2x64xbf16>
    %cst_59 = arith.constant dense<0.000000e+00> : vector<2x192xf32>
    %159 = tpu.matmul %158, %4, %cst_59 {dimension_numbers = #tpu.dot_dimension_numbers<[1], [0], [0], [1], [0, 0, 1, 1], [], []>} : vector<2x64xbf16>, vector<64x192xbf16>, vector<2x192xf32> -> vector<2x192xf32>
    %160 = arith.addf %155, %159 : vector<2x192xf32>
    %161 = arith.addf %160, %8 : vector<2x192xf32>
    %162 = arith.truncf %138 : vector<2x64xf32> to vector<2x64xbf16>
    %cst_60 = arith.constant dense<0.000000e+00> : vector<2x192xf32>
    %163 = tpu.matmul %162, %5, %cst_60 {dimension_numbers = #tpu.dot_dimension_numbers<[1], [0], [0], [1], [0, 0, 1, 1], [], []>} : vector<2x64xbf16>, vector<64x192xbf16>, vector<2x192xf32> -> vector<2x192xf32>
    %164 = arith.addf %163, %11 : vector<2x192xf32>
    %165 = vector.extract_strided_slice %161 {offsets = [0, 0], sizes = [2, 128], strides = [1, 1]} : vector<2x192xf32> to vector<2x128xf32>
    %166 = vector.extract_strided_slice %164 {offsets = [0, 0], sizes = [2, 128], strides = [1, 1]} : vector<2x192xf32> to vector<2x128xf32>
    %167 = arith.addf %165, %166 : vector<2x128xf32>
    %168 = arith.negf %167 : vector<2x128xf32>
    %169 = math.exp %168 : vector<2x128xf32>
    %cst_61 = arith.constant 1.000000e+00 : f32
    %170 = vector.broadcast %cst_61 : f32 to vector<2x128xf32>
    %171 = arith.addf %170, %169 : vector<2x128xf32>
    %172 = arith.divf %170, %171 : vector<2x128xf32>
    %173 = vector.extract_strided_slice %172 {offsets = [0, 0], sizes = [2, 64], strides = [1, 1]} : vector<2x128xf32> to vector<2x64xf32>
    %174 = vector.extract_strided_slice %172 {offsets = [0, 64], sizes = [2, 64], strides = [1, 1]} : vector<2x128xf32> to vector<2x64xf32>
    %175 = vector.extract_strided_slice %161 {offsets = [0, 128], sizes = [2, 64], strides = [1, 1]} : vector<2x192xf32> to vector<2x64xf32>
    %176 = vector.extract_strided_slice %164 {offsets = [0, 128], sizes = [2, 64], strides = [1, 1]} : vector<2x192xf32> to vector<2x64xf32>
    %177 = arith.mulf %173, %176 : vector<2x64xf32>
    %178 = arith.addf %175, %177 : vector<2x64xf32>
    %179 = math.tanh %178 : vector<2x64xf32>
    %cst_62 = arith.constant 1.000000e+00 : f32
    %180 = vector.broadcast %cst_62 : f32 to vector<2x64xf32>
    %181 = arith.subf %180, %174 : vector<2x64xf32>
    %182 = arith.mulf %181, %179 : vector<2x64xf32>
    %183 = arith.mulf %174, %138 : vector<2x64xf32>
    %184 = arith.addf %182, %183 : vector<2x64xf32>
    %185 = vector.extract_strided_slice %184 {offsets = [0, 0], sizes = [2, 32], strides = [1, 1]} : vector<2x64xf32> to vector<2x32xf32>
    %186 = arith.truncf %185 : vector<2x32xf32> to vector<2x32xbf16>
    %187 = arith.index_cast %c3_i32 : i32 to index
    %c0_63 = arith.constant 0 : index
    %c0_64 = arith.constant 0 : index
    %188 = vector.load %arg8[%187, %c0_63, %c0_64] : memref<8x2x32xbf16, #tpu.memory_space<vmem>>, vector<1x2x32xbf16>
    %189 = vector.shape_cast %188 : vector<1x2x32xbf16> to vector<2x32xbf16>
    %190 = vector.shape_cast %186 : vector<2x32xbf16> to vector<1x2x32xbf16>
    tpu.vector_store %arg8[%187, %c0_63, %c0_64], %190 {strides = array<i32>} : memref<8x2x32xbf16, #tpu.memory_space<vmem>>, vector<1x2x32xbf16>,
    %191 = vector.extract_strided_slice %184 {offsets = [0, 32], sizes = [2, 32], strides = [1, 1]} : vector<2x64xf32> to vector<2x32xf32>
    %192 = arith.truncf %191 : vector<2x32xf32> to vector<2x32xbf16>
    %193 = arith.index_cast %151 : i32 to index
    %c0_65 = arith.constant 0 : index
    %c0_66 = arith.constant 0 : index
    %194 = vector.load %arg9[%193, %c0_65, %c0_66] : memref<8x2x32xbf16, #tpu.memory_space<vmem>>, vector<1x2x32xbf16>
    %195 = vector.shape_cast %194 : vector<1x2x32xbf16> to vector<2x32xbf16>
    %196 = vector.shape_cast %192 : vector<2x32xbf16> to vector<1x2x32xbf16>
    tpu.vector_store %arg9[%193, %c0_65, %c0_66], %196 {strides = array<i32>} : memref<8x2x32xbf16, #tpu.memory_space<vmem>>, vector<1x2x32xbf16>,
    %c4_i32 = arith.constant 4 : i32
    %c7_i32_67 = arith.constant 7 : i32
    %197 = arith.subi %c7_i32_67, %c4_i32 : i32
    %198 = arith.index_cast %c4_i32 : i32 to index
    %c0_68 = arith.constant 0 : index
    %c0_69 = arith.constant 0 : index
    %199 = vector.load %arg1[%198, %c0_68, %c0_69] : memref<8x2x64xbf16, #tpu.memory_space<vmem>>, vector<1x2x64xbf16>
    %200 = vector.shape_cast %199 : vector<1x2x64xbf16> to vector<2x64xbf16>
    %cst_70 = arith.constant dense<0.000000e+00> : vector<2x192xf32>
    %201 = tpu.matmul %200, %3, %cst_70 {dimension_numbers = #tpu.dot_dimension_numbers<[1], [0], [0], [1], [0, 0, 1, 1], [], []>} : vector<2x64xbf16>, vector<64x192xbf16>, vector<2x192xf32> -> vector<2x192xf32>
    %202 = arith.index_cast %197 : i32 to index
    %c0_71 = arith.constant 0 : index
    %c0_72 = arith.constant 0 : index
    %203 = vector.load %arg2[%202, %c0_71, %c0_72] : memref<8x2x64xbf16, #tpu.memory_space<vmem>>, vector<1x2x64xbf16>
    %204 = vector.shape_cast %203 : vector<1x2x64xbf16> to vector<2x64xbf16>
    %cst_73 = arith.constant dense<0.000000e+00> : vector<2x192xf32>
    %205 = tpu.matmul %204, %4, %cst_73 {dimension_numbers = #tpu.dot_dimension_numbers<[1], [0], [0], [1], [0, 0, 1, 1], [], []>} : vector<2x64xbf16>, vector<64x192xbf16>, vector<2x192xf32> -> vector<2x192xf32>
    %206 = arith.addf %201, %205 : vector<2x192xf32>
    %207 = arith.addf %206, %8 : vector<2x192xf32>
    %208 = arith.truncf %184 : vector<2x64xf32> to vector<2x64xbf16>
    %cst_74 = arith.constant dense<0.000000e+00> : vector<2x192xf32>
    %209 = tpu.matmul %208, %5, %cst_74 {dimension_numbers = #tpu.dot_dimension_numbers<[1], [0], [0], [1], [0, 0, 1, 1], [], []>} : vector<2x64xbf16>, vector<64x192xbf16>, vector<2x192xf32> -> vector<2x192xf32>
    %210 = arith.addf %209, %11 : vector<2x192xf32>
    %211 = vector.extract_strided_slice %207 {offsets = [0, 0], sizes = [2, 128], strides = [1, 1]} : vector<2x192xf32> to vector<2x128xf32>
    %212 = vector.extract_strided_slice %210 {offsets = [0, 0], sizes = [2, 128], strides = [1, 1]} : vector<2x192xf32> to vector<2x128xf32>
    %213 = arith.addf %211, %212 : vector<2x128xf32>
    %214 = arith.negf %213 : vector<2x128xf32>
    %215 = math.exp %214 : vector<2x128xf32>
    %cst_75 = arith.constant 1.000000e+00 : f32
    %216 = vector.broadcast %cst_75 : f32 to vector<2x128xf32>
    %217 = arith.addf %216, %215 : vector<2x128xf32>
    %218 = arith.divf %216, %217 : vector<2x128xf32>
    %219 = vector.extract_strided_slice %218 {offsets = [0, 0], sizes = [2, 64], strides = [1, 1]} : vector<2x128xf32> to vector<2x64xf32>
    %220 = vector.extract_strided_slice %218 {offsets = [0, 64], sizes = [2, 64], strides = [1, 1]} : vector<2x128xf32> to vector<2x64xf32>
    %221 = vector.extract_strided_slice %207 {offsets = [0, 128], sizes = [2, 64], strides = [1, 1]} : vector<2x192xf32> to vector<2x64xf32>
    %222 = vector.extract_strided_slice %210 {offsets = [0, 128], sizes = [2, 64], strides = [1, 1]} : vector<2x192xf32> to vector<2x64xf32>
    %223 = arith.mulf %219, %222 : vector<2x64xf32>
    %224 = arith.addf %221, %223 : vector<2x64xf32>
    %225 = math.tanh %224 : vector<2x64xf32>
    %cst_76 = arith.constant 1.000000e+00 : f32
    %226 = vector.broadcast %cst_76 : f32 to vector<2x64xf32>
    %227 = arith.subf %226, %220 : vector<2x64xf32>
    %228 = arith.mulf %227, %225 : vector<2x64xf32>
    %229 = arith.mulf %220, %184 : vector<2x64xf32>
    %230 = arith.addf %228, %229 : vector<2x64xf32>
    %231 = vector.extract_strided_slice %230 {offsets = [0, 0], sizes = [2, 32], strides = [1, 1]} : vector<2x64xf32> to vector<2x32xf32>
    %232 = arith.truncf %231 : vector<2x32xf32> to vector<2x32xbf16>
    %233 = arith.index_cast %c4_i32 : i32 to index
    %c0_77 = arith.constant 0 : index
    %c0_78 = arith.constant 0 : index
    %234 = vector.load %arg8[%233, %c0_77, %c0_78] : memref<8x2x32xbf16, #tpu.memory_space<vmem>>, vector<1x2x32xbf16>
    %235 = vector.shape_cast %234 : vector<1x2x32xbf16> to vector<2x32xbf16>
    %236 = vector.shape_cast %232 : vector<2x32xbf16> to vector<1x2x32xbf16>
    tpu.vector_store %arg8[%233, %c0_77, %c0_78], %236 {strides = array<i32>} : memref<8x2x32xbf16, #tpu.memory_space<vmem>>, vector<1x2x32xbf16>,
    %237 = vector.extract_strided_slice %230 {offsets = [0, 32], sizes = [2, 32], strides = [1, 1]} : vector<2x64xf32> to vector<2x32xf32>
    %238 = arith.truncf %237 : vector<2x32xf32> to vector<2x32xbf16>
    %239 = arith.index_cast %197 : i32 to index
    %c0_79 = arith.constant 0 : index
    %c0_80 = arith.constant 0 : index
    %240 = vector.load %arg9[%239, %c0_79, %c0_80] : memref<8x2x32xbf16, #tpu.memory_space<vmem>>, vector<1x2x32xbf16>
    %241 = vector.shape_cast %240 : vector<1x2x32xbf16> to vector<2x32xbf16>
    %242 = vector.shape_cast %238 : vector<2x32xbf16> to vector<1x2x32xbf16>
    tpu.vector_store %arg9[%239, %c0_79, %c0_80], %242 {strides = array<i32>} : memref<8x2x32xbf16, #tpu.memory_space<vmem>>, vector<1x2x32xbf16>,
    %c5_i32 = arith.constant 5 : i32
    %c7_i32_81 = arith.constant 7 : i32
    %243 = arith.subi %c7_i32_81, %c5_i32 : i32
    %244 = arith.index_cast %c5_i32 : i32 to index
    %c0_82 = arith.constant 0 : index
    %c0_83 = arith.constant 0 : index
    %245 = vector.load %arg1[%244, %c0_82, %c0_83] : memref<8x2x64xbf16, #tpu.memory_space<vmem>>, vector<1x2x64xbf16>
    %246 = vector.shape_cast %245 : vector<1x2x64xbf16> to vector<2x64xbf16>
    %cst_84 = arith.constant dense<0.000000e+00> : vector<2x192xf32>
    %247 = tpu.matmul %246, %3, %cst_84 {dimension_numbers = #tpu.dot_dimension_numbers<[1], [0], [0], [1], [0, 0, 1, 1], [], []>} : vector<2x64xbf16>, vector<64x192xbf16>, vector<2x192xf32> -> vector<2x192xf32>
    %248 = arith.index_cast %243 : i32 to index
    %c0_85 = arith.constant 0 : index
    %c0_86 = arith.constant 0 : index
    %249 = vector.load %arg2[%248, %c0_85, %c0_86] : memref<8x2x64xbf16, #tpu.memory_space<vmem>>, vector<1x2x64xbf16>
    %250 = vector.shape_cast %249 : vector<1x2x64xbf16> to vector<2x64xbf16>
    %cst_87 = arith.constant dense<0.000000e+00> : vector<2x192xf32>
    %251 = tpu.matmul %250, %4, %cst_87 {dimension_numbers = #tpu.dot_dimension_numbers<[1], [0], [0], [1], [0, 0, 1, 1], [], []>} : vector<2x64xbf16>, vector<64x192xbf16>, vector<2x192xf32> -> vector<2x192xf32>
    %252 = arith.addf %247, %251 : vector<2x192xf32>
    %253 = arith.addf %252, %8 : vector<2x192xf32>
    %254 = arith.truncf %230 : vector<2x64xf32> to vector<2x64xbf16>
    %cst_88 = arith.constant dense<0.000000e+00> : vector<2x192xf32>
    %255 = tpu.matmul %254, %5, %cst_88 {dimension_numbers = #tpu.dot_dimension_numbers<[1], [0], [0], [1], [0, 0, 1, 1], [], []>} : vector<2x64xbf16>, vector<64x192xbf16>, vector<2x192xf32> -> vector<2x192xf32>
    %256 = arith.addf %255, %11 : vector<2x192xf32>
    %257 = vector.extract_strided_slice %253 {offsets = [0, 0], sizes = [2, 128], strides = [1, 1]} : vector<2x192xf32> to vector<2x128xf32>
    %258 = vector.extract_strided_slice %256 {offsets = [0, 0], sizes = [2, 128], strides = [1, 1]} : vector<2x192xf32> to vector<2x128xf32>
    %259 = arith.addf %257, %258 : vector<2x128xf32>
    %260 = arith.negf %259 : vector<2x128xf32>
    %261 = math.exp %260 : vector<2x128xf32>
    %cst_89 = arith.constant 1.000000e+00 : f32
    %262 = vector.broadcast %cst_89 : f32 to vector<2x128xf32>
    %263 = arith.addf %262, %261 : vector<2x128xf32>
    %264 = arith.divf %262, %263 : vector<2x128xf32>
    %265 = vector.extract_strided_slice %264 {offsets = [0, 0], sizes = [2, 64], strides = [1, 1]} : vector<2x128xf32> to vector<2x64xf32>
    %266 = vector.extract_strided_slice %264 {offsets = [0, 64], sizes = [2, 64], strides = [1, 1]} : vector<2x128xf32> to vector<2x64xf32>
    %267 = vector.extract_strided_slice %253 {offsets = [0, 128], sizes = [2, 64], strides = [1, 1]} : vector<2x192xf32> to vector<2x64xf32>
    %268 = vector.extract_strided_slice %256 {offsets = [0, 128], sizes = [2, 64], strides = [1, 1]} : vector<2x192xf32> to vector<2x64xf32>
    %269 = arith.mulf %265, %268 : vector<2x64xf32>
    %270 = arith.addf %267, %269 : vector<2x64xf32>
    %271 = math.tanh %270 : vector<2x64xf32>
    %cst_90 = arith.constant 1.000000e+00 : f32
    %272 = vector.broadcast %cst_90 : f32 to vector<2x64xf32>
    %273 = arith.subf %272, %266 : vector<2x64xf32>
    %274 = arith.mulf %273, %271 : vector<2x64xf32>
    %275 = arith.mulf %266, %230 : vector<2x64xf32>
    %276 = arith.addf %274, %275 : vector<2x64xf32>
    %277 = vector.extract_strided_slice %276 {offsets = [0, 0], sizes = [2, 32], strides = [1, 1]} : vector<2x64xf32> to vector<2x32xf32>
    %278 = arith.truncf %277 : vector<2x32xf32> to vector<2x32xbf16>
    %279 = arith.index_cast %c5_i32 : i32 to index
    %c0_91 = arith.constant 0 : index
    %c0_92 = arith.constant 0 : index
    %280 = vector.load %arg8[%279, %c0_91, %c0_92] : memref<8x2x32xbf16, #tpu.memory_space<vmem>>, vector<1x2x32xbf16>
    %281 = vector.shape_cast %280 : vector<1x2x32xbf16> to vector<2x32xbf16>
    %282 = vector.shape_cast %278 : vector<2x32xbf16> to vector<1x2x32xbf16>
    tpu.vector_store %arg8[%279, %c0_91, %c0_92], %282 {strides = array<i32>} : memref<8x2x32xbf16, #tpu.memory_space<vmem>>, vector<1x2x32xbf16>,
    %283 = vector.extract_strided_slice %276 {offsets = [0, 32], sizes = [2, 32], strides = [1, 1]} : vector<2x64xf32> to vector<2x32xf32>
    %284 = arith.truncf %283 : vector<2x32xf32> to vector<2x32xbf16>
    %285 = arith.index_cast %243 : i32 to index
    %c0_93 = arith.constant 0 : index
    %c0_94 = arith.constant 0 : index
    %286 = vector.load %arg9[%285, %c0_93, %c0_94] : memref<8x2x32xbf16, #tpu.memory_space<vmem>>, vector<1x2x32xbf16>
    %287 = vector.shape_cast %286 : vector<1x2x32xbf16> to vector<2x32xbf16>
    %288 = vector.shape_cast %284 : vector<2x32xbf16> to vector<1x2x32xbf16>
    tpu.vector_store %arg9[%285, %c0_93, %c0_94], %288 {strides = array<i32>} : memref<8x2x32xbf16, #tpu.memory_space<vmem>>, vector<1x2x32xbf16>,
    %c6_i32 = arith.constant 6 : i32
    %c7_i32_95 = arith.constant 7 : i32
    %289 = arith.subi %c7_i32_95, %c6_i32 : i32
    %290 = arith.index_cast %c6_i32 : i32 to index
    %c0_96 = arith.constant 0 : index
    %c0_97 = arith.constant 0 : index
    %291 = vector.load %arg1[%290, %c0_96, %c0_97] : memref<8x2x64xbf16, #tpu.memory_space<vmem>>, vector<1x2x64xbf16>
    %292 = vector.shape_cast %291 : vector<1x2x64xbf16> to vector<2x64xbf16>
    %cst_98 = arith.constant dense<0.000000e+00> : vector<2x192xf32>
    %293 = tpu.matmul %292, %3, %cst_98 {dimension_numbers = #tpu.dot_dimension_numbers<[1], [0], [0], [1], [0, 0, 1, 1], [], []>} : vector<2x64xbf16>, vector<64x192xbf16>, vector<2x192xf32> -> vector<2x192xf32>
    %294 = arith.index_cast %289 : i32 to index
    %c0_99 = arith.constant 0 : index
    %c0_100 = arith.constant 0 : index
    %295 = vector.load %arg2[%294, %c0_99, %c0_100] : memref<8x2x64xbf16, #tpu.memory_space<vmem>>, vector<1x2x64xbf16>
    %296 = vector.shape_cast %295 : vector<1x2x64xbf16> to vector<2x64xbf16>
    %cst_101 = arith.constant dense<0.000000e+00> : vector<2x192xf32>
    %297 = tpu.matmul %296, %4, %cst_101 {dimension_numbers = #tpu.dot_dimension_numbers<[1], [0], [0], [1], [0, 0, 1, 1], [], []>} : vector<2x64xbf16>, vector<64x192xbf16>, vector<2x192xf32> -> vector<2x192xf32>
    %298 = arith.addf %293, %297 : vector<2x192xf32>
    %299 = arith.addf %298, %8 : vector<2x192xf32>
    %300 = arith.truncf %276 : vector<2x64xf32> to vector<2x64xbf16>
    %cst_102 = arith.constant dense<0.000000e+00> : vector<2x192xf32>
    %301 = tpu.matmul %300, %5, %cst_102 {dimension_numbers = #tpu.dot_dimension_numbers<[1], [0], [0], [1], [0, 0, 1, 1], [], []>} : vector<2x64xbf16>, vector<64x192xbf16>, vector<2x192xf32> -> vector<2x192xf32>
    %302 = arith.addf %301, %11 : vector<2x192xf32>
    %303 = vector.extract_strided_slice %299 {offsets = [0, 0], sizes = [2, 128], strides = [1, 1]} : vector<2x192xf32> to vector<2x128xf32>
    %304 = vector.extract_strided_slice %302 {offsets = [0, 0], sizes = [2, 128], strides = [1, 1]} : vector<2x192xf32> to vector<2x128xf32>
    %305 = arith.addf %303, %304 : vector<2x128xf32>
    %306 = arith.negf %305 : vector<2x128xf32>
    %307 = math.exp %306 : vector<2x128xf32>
    %cst_103 = arith.constant 1.000000e+00 : f32
    %308 = vector.broadcast %cst_103 : f32 to vector<2x128xf32>
    %309 = arith.addf %308, %307 : vector<2x128xf32>
    %310 = arith.divf %308, %309 : vector<2x128xf32>
    %311 = vector.extract_strided_slice %310 {offsets = [0, 0], sizes = [2, 64], strides = [1, 1]} : vector<2x128xf32> to vector<2x64xf32>
    %312 = vector.extract_strided_slice %310 {offsets = [0, 64], sizes = [2, 64], strides = [1, 1]} : vector<2x128xf32> to vector<2x64xf32>
    %313 = vector.extract_strided_slice %299 {offsets = [0, 128], sizes = [2, 64], strides = [1, 1]} : vector<2x192xf32> to vector<2x64xf32>
    %314 = vector.extract_strided_slice %302 {offsets = [0, 128], sizes = [2, 64], strides = [1, 1]} : vector<2x192xf32> to vector<2x64xf32>
    %315 = arith.mulf %311, %314 : vector<2x64xf32>
    %316 = arith.addf %313, %315 : vector<2x64xf32>
    %317 = math.tanh %316 : vector<2x64xf32>
    %cst_104 = arith.constant 1.000000e+00 : f32
    %318 = vector.broadcast %cst_104 : f32 to vector<2x64xf32>
    %319 = arith.subf %318, %312 : vector<2x64xf32>
    %320 = arith.mulf %319, %317 : vector<2x64xf32>
    %321 = arith.mulf %312, %276 : vector<2x64xf32>
    %322 = arith.addf %320, %321 : vector<2x64xf32>
    %323 = vector.extract_strided_slice %322 {offsets = [0, 0], sizes = [2, 32], strides = [1, 1]} : vector<2x64xf32> to vector<2x32xf32>
    %324 = arith.truncf %323 : vector<2x32xf32> to vector<2x32xbf16>
    %325 = arith.index_cast %c6_i32 : i32 to index
    %c0_105 = arith.constant 0 : index
    %c0_106 = arith.constant 0 : index
    %326 = vector.load %arg8[%325, %c0_105, %c0_106] : memref<8x2x32xbf16, #tpu.memory_space<vmem>>, vector<1x2x32xbf16>
    %327 = vector.shape_cast %326 : vector<1x2x32xbf16> to vector<2x32xbf16>
    %328 = vector.shape_cast %324 : vector<2x32xbf16> to vector<1x2x32xbf16>
    tpu.vector_store %arg8[%325, %c0_105, %c0_106], %328 {strides = array<i32>} : memref<8x2x32xbf16, #tpu.memory_space<vmem>>, vector<1x2x32xbf16>,
    %329 = vector.extract_strided_slice %322 {offsets = [0, 32], sizes = [2, 32], strides = [1, 1]} : vector<2x64xf32> to vector<2x32xf32>
    %330 = arith.truncf %329 : vector<2x32xf32> to vector<2x32xbf16>
    %331 = arith.index_cast %289 : i32 to index
    %c0_107 = arith.constant 0 : index
    %c0_108 = arith.constant 0 : index
    %332 = vector.load %arg9[%331, %c0_107, %c0_108] : memref<8x2x32xbf16, #tpu.memory_space<vmem>>, vector<1x2x32xbf16>
    %333 = vector.shape_cast %332 : vector<1x2x32xbf16> to vector<2x32xbf16>
    %334 = vector.shape_cast %330 : vector<2x32xbf16> to vector<1x2x32xbf16>
    tpu.vector_store %arg9[%331, %c0_107, %c0_108], %334 {strides = array<i32>} : memref<8x2x32xbf16, #tpu.memory_space<vmem>>, vector<1x2x32xbf16>,
    %c7_i32_109 = arith.constant 7 : i32
    %c7_i32_110 = arith.constant 7 : i32
    %335 = arith.subi %c7_i32_110, %c7_i32_109 : i32
    %336 = arith.index_cast %c7_i32_109 : i32 to index
    %c0_111 = arith.constant 0 : index
    %c0_112 = arith.constant 0 : index
    %337 = vector.load %arg1[%336, %c0_111, %c0_112] : memref<8x2x64xbf16, #tpu.memory_space<vmem>>, vector<1x2x64xbf16>
    %338 = vector.shape_cast %337 : vector<1x2x64xbf16> to vector<2x64xbf16>
    %cst_113 = arith.constant dense<0.000000e+00> : vector<2x192xf32>
    %339 = tpu.matmul %338, %3, %cst_113 {dimension_numbers = #tpu.dot_dimension_numbers<[1], [0], [0], [1], [0, 0, 1, 1], [], []>} : vector<2x64xbf16>, vector<64x192xbf16>, vector<2x192xf32> -> vector<2x192xf32>
    %340 = arith.index_cast %335 : i32 to index
    %c0_114 = arith.constant 0 : index
    %c0_115 = arith.constant 0 : index
    %341 = vector.load %arg2[%340, %c0_114, %c0_115] : memref<8x2x64xbf16, #tpu.memory_space<vmem>>, vector<1x2x64xbf16>
    %342 = vector.shape_cast %341 : vector<1x2x64xbf16> to vector<2x64xbf16>
    %cst_116 = arith.constant dense<0.000000e+00> : vector<2x192xf32>
    %343 = tpu.matmul %342, %4, %cst_116 {dimension_numbers = #tpu.dot_dimension_numbers<[1], [0], [0], [1], [0, 0, 1, 1], [], []>} : vector<2x64xbf16>, vector<64x192xbf16>, vector<2x192xf32> -> vector<2x192xf32>
    %344 = arith.addf %339, %343 : vector<2x192xf32>
    %345 = arith.addf %344, %8 : vector<2x192xf32>
    %346 = arith.truncf %322 : vector<2x64xf32> to vector<2x64xbf16>
    %cst_117 = arith.constant dense<0.000000e+00> : vector<2x192xf32>
    %347 = tpu.matmul %346, %5, %cst_117 {dimension_numbers = #tpu.dot_dimension_numbers<[1], [0], [0], [1], [0, 0, 1, 1], [], []>} : vector<2x64xbf16>, vector<64x192xbf16>, vector<2x192xf32> -> vector<2x192xf32>
    %348 = arith.addf %347, %11 : vector<2x192xf32>
    %349 = vector.extract_strided_slice %345 {offsets = [0, 0], sizes = [2, 128], strides = [1, 1]} : vector<2x192xf32> to vector<2x128xf32>
    %350 = vector.extract_strided_slice %348 {offsets = [0, 0], sizes = [2, 128], strides = [1, 1]} : vector<2x192xf32> to vector<2x128xf32>
    %351 = arith.addf %349, %350 : vector<2x128xf32>
    %352 = arith.negf %351 : vector<2x128xf32>
    %353 = math.exp %352 : vector<2x128xf32>
    %cst_118 = arith.constant 1.000000e+00 : f32
    %354 = vector.broadcast %cst_118 : f32 to vector<2x128xf32>
    %355 = arith.addf %354, %353 : vector<2x128xf32>
    %356 = arith.divf %354, %355 : vector<2x128xf32>
    %357 = vector.extract_strided_slice %356 {offsets = [0, 0], sizes = [2, 64], strides = [1, 1]} : vector<2x128xf32> to vector<2x64xf32>
    %358 = vector.extract_strided_slice %356 {offsets = [0, 64], sizes = [2, 64], strides = [1, 1]} : vector<2x128xf32> to vector<2x64xf32>
    %359 = vector.extract_strided_slice %345 {offsets = [0, 128], sizes = [2, 64], strides = [1, 1]} : vector<2x192xf32> to vector<2x64xf32>
    %360 = vector.extract_strided_slice %348 {offsets = [0, 128], sizes = [2, 64], strides = [1, 1]} : vector<2x192xf32> to vector<2x64xf32>
    %361 = arith.mulf %357, %360 : vector<2x64xf32>
    %362 = arith.addf %359, %361 : vector<2x64xf32>
    %363 = math.tanh %362 : vector<2x64xf32>
    %cst_119 = arith.constant 1.000000e+00 : f32
    %364 = vector.broadcast %cst_119 : f32 to vector<2x64xf32>
    %365 = arith.subf %364, %358 : vector<2x64xf32>
    %366 = arith.mulf %365, %363 : vector<2x64xf32>
    %367 = arith.mulf %358, %322 : vector<2x64xf32>
    %368 = arith.addf %366, %367 : vector<2x64xf32>
    %369 = vector.extract_strided_slice %368 {offsets = [0, 0], sizes = [2, 32], strides = [1, 1]} : vector<2x64xf32> to vector<2x32xf32>
    %370 = arith.truncf %369 : vector<2x32xf32> to vector<2x32xbf16>
    %371 = arith.index_cast %c7_i32_109 : i32 to index
    %c0_120 = arith.constant 0 : index
    %c0_121 = arith.constant 0 : index
    %372 = vector.load %arg8[%371, %c0_120, %c0_121] : memref<8x2x32xbf16, #tpu.memory_space<vmem>>, vector<1x2x32xbf16>
    %373 = vector.shape_cast %372 : vector<1x2x32xbf16> to vector<2x32xbf16>
    %374 = vector.shape_cast %370 : vector<2x32xbf16> to vector<1x2x32xbf16>
    tpu.vector_store %arg8[%371, %c0_120, %c0_121], %374 {strides = array<i32>} : memref<8x2x32xbf16, #tpu.memory_space<vmem>>, vector<1x2x32xbf16>,
    %375 = vector.extract_strided_slice %368 {offsets = [0, 32], sizes = [2, 32], strides = [1, 1]} : vector<2x64xf32> to vector<2x32xf32>
    %376 = arith.truncf %375 : vector<2x32xf32> to vector<2x32xbf16>
    %377 = arith.index_cast %335 : i32 to index
    %c0_122 = arith.constant 0 : index
    %c0_123 = arith.constant 0 : index
    %378 = vector.load %arg9[%377, %c0_122, %c0_123] : memref<8x2x32xbf16, #tpu.memory_space<vmem>>, vector<1x2x32xbf16>
    %379 = vector.shape_cast %378 : vector<1x2x32xbf16> to vector<2x32xbf16>
    %380 = vector.shape_cast %376 : vector<2x32xbf16> to vector<1x2x32xbf16>
    tpu.vector_store %arg9[%377, %c0_122, %c0_123], %380 {strides = array<i32>} : memref<8x2x32xbf16, #tpu.memory_space<vmem>>, vector<1x2x32xbf16>,
    %c8_i32 = arith.constant 8 : i32
    %c0_124 = arith.constant 0 : index
    %c0_125 = arith.constant 0 : index
    %381 = vector.load %arg10[%c0_124, %c0_125] : memref<2x64xf32, #tpu.memory_space<vmem>>, vector<2x64xf32>
    tpu.vector_store %arg10[%c0_124, %c0_125], %368 {strides = array<i32>} : memref<2x64xf32, #tpu.memory_space<vmem>>, vector<2x64xf32>,
    return
  }
  func.func @transform_0(%arg0: i32) -> (i32, i32, i32) {
    %c0_i32 = arith.constant 0 : i32
    %c0_i32_0 = arith.constant 0 : i32
    %c0_i32_1 = arith.constant 0 : i32
    return %arg0, %c0_i32, %c0_i32_0 : i32, i32, i32
  }
  func.func @transform_1(%arg0: i32) -> (i32, i32, i32) {
    %c0_i32 = arith.constant 0 : i32
    %0 = arith.subi %c0_i32, %arg0 : i32
    %c0_i32_0 = arith.constant 0 : i32
    %c0_i32_1 = arith.constant 0 : i32
    %c0_i32_2 = arith.constant 0 : i32
    return %0, %c0_i32_0, %c0_i32_1 : i32, i32, i32
  }
  func.func @transform_2(%arg0: i32) -> (i32, i32) {
    %c0_i32 = arith.constant 0 : i32
    %c0_i32_0 = arith.constant 0 : i32
    %c0_i32_1 = arith.constant 0 : i32
    return %c0_i32, %c0_i32_0 : i32, i32
  }
  func.func @transform_3(%arg0: i32) -> (i32, i32) {
    %c0_i32 = arith.constant 0 : i32
    %c0_i32_0 = arith.constant 0 : i32
    %c0_i32_1 = arith.constant 0 : i32
    return %c0_i32, %c0_i32_0 : i32, i32
  }
  func.func @transform_4(%arg0: i32) -> (i32, i32) {
    %c0_i32 = arith.constant 0 : i32
    %c0_i32_0 = arith.constant 0 : i32
    %c0_i32_1 = arith.constant 0 : i32
    return %c0_i32, %c0_i32_0 : i32, i32
  }
  func.func @transform_5(%arg0: i32) -> (i32, i32) {
    %c0_i32 = arith.constant 0 : i32
    %c0_i32_0 = arith.constant 0 : i32
    %c0_i32_1 = arith.constant 0 : i32
    return %c0_i32, %c0_i32_0 : i32, i32
  }
  func.func @transform_6(%arg0: i32) -> (i32, i32) {
    %c0_i32 = arith.constant 0 : i32
    %c0_i32_0 = arith.constant 0 : i32
    %c0_i32_1 = arith.constant 0 : i32
    return %c0_i32, %c0_i32_0 : i32, i32
  }
  func.func @transform_7(%arg0: i32) -> (i32, i32, i32) {
    %c0_i32 = arith.constant 0 : i32
    %c0_i32_0 = arith.constant 0 : i32
    %c0_i32_1 = arith.constant 0 : i32
    return %arg0, %c0_i32, %c0_i32_0 : i32, i32, i32
  }
  func.func @transform_8(%arg0: i32) -> (i32, i32, i32) {
    %c0_i32 = arith.constant 0 : i32
    %0 = arith.subi %c0_i32, %arg0 : i32
    %c0_i32_0 = arith.constant 0 : i32
    %c0_i32_1 = arith.constant 0 : i32
    %c0_i32_2 = arith.constant 0 : i32
    return %0, %c0_i32_0, %c0_i32_1 : i32, i32, i32
  }
}

module attributes {stable_mosaic.version = 11 : i64} {
  func.func @gru_layer_kernel(%arg0: i32, %arg1: memref<8x2x16xbf16, #tpu.memory_space<vmem>>, %arg2: memref<8x2x16xbf16, #tpu.memory_space<vmem>>, %arg3: memref<16x192xbf16, #tpu.memory_space<vmem>>, %arg4: memref<16x192xbf16, #tpu.memory_space<vmem>>, %arg5: memref<1x192xf32, #tpu.memory_space<vmem>>, %arg6: memref<64x192xbf16, #tpu.memory_space<vmem>>, %arg7: memref<1x192xf32, #tpu.memory_space<vmem>>, %arg8: memref<8x2x32xbf16, #tpu.memory_space<vmem>>, %arg9: memref<8x2x32xbf16, #tpu.memory_space<vmem>>, %arg10: memref<2x64xf32, #tpu.memory_space<vmem>>) attributes {dimension_semantics = [#tpu.dimension_semantics<arbitrary>], iteration_bounds = array<i64: 1>, scalar_prefetch = 0 : i64, scratch_operands = 1 : i64, tpu.core_type = #tpu.core_type<tc>, window_params = [{transform_indices = @transform_0, window_bounds = array<i64: 8, 2, 16>}, {transform_indices = @transform_1, window_bounds = array<i64: 8, 2, 16>}, {pipeline_mode = #tpu.pipeline_mode<synchronous>, transform_indices = @transform_2, window_bounds = array<i64: 16, 192>}, {pipeline_mode = #tpu.pipeline_mode<synchronous>, transform_indices = @transform_3, window_bounds = array<i64: 16, 192>}, {pipeline_mode = #tpu.pipeline_mode<synchronous>, transform_indices = @transform_4, window_bounds = array<i64: 1, 192>}, {pipeline_mode = #tpu.pipeline_mode<synchronous>, transform_indices = @transform_5, window_bounds = array<i64: 64, 192>}, {pipeline_mode = #tpu.pipeline_mode<synchronous>, transform_indices = @transform_6, window_bounds = array<i64: 1, 192>}, {transform_indices = @transform_7, window_bounds = array<i64: 8, 2, 32>}, {transform_indices = @transform_8, window_bounds = array<i64: 8, 2, 32>}]} {
    %c0_i32 = arith.constant 0 : i32
    %0 = arith.cmpi eq, %arg0, %c0_i32 : i32
    %1 = arith.extui %0 : i1 to i32
    %c0_i32_0 = arith.constant 0 : i32
    %2 = arith.cmpi ne, %1, %c0_i32_0 : i32
    scf.if %2 {
      %cst_126 = arith.constant 0.000000e+00 : f32
      %382 = vector.broadcast %cst_126 : f32 to vector<2x64xf32>
      %c0_127 = arith.constant 0 : index
      %c0_128 = arith.constant 0 : index
      %383 = vector.load %arg10[%c0_127, %c0_128] : memref<2x64xf32, #tpu.memory_space<vmem>>, vector<2x64xf32>
      tpu.vector_store %arg10[%c0_127, %c0_128], %382 {strides = array<i32>} : memref<2x64xf32, #tpu.memory_space<vmem>>, vector<2x64xf32>,
    } else {
    }
    %c0 = arith.constant 0 : index
    %c0_1 = arith.constant 0 : index
    %3 = vector.load %arg3[%c0, %c0_1] : memref<16x192xbf16, #tpu.memory_space<vmem>>, vector<16x192xbf16>
    %c0_2 = arith.constant 0 : index
    %c0_3 = arith.constant 0 : index
    %4 = vector.load %arg4[%c0_2, %c0_3] : memref<16x192xbf16, #tpu.memory_space<vmem>>, vector<16x192xbf16>
    %c0_4 = arith.constant 0 : index
    %c0_5 = arith.constant 0 : index
    %5 = vector.load %arg6[%c0_4, %c0_5] : memref<64x192xbf16, #tpu.memory_space<vmem>>, vector<64x192xbf16>
    %c0_6 = arith.constant 0 : index
    %c0_7 = arith.constant 0 : index
    %6 = vector.load %arg5[%c0_6, %c0_7] : memref<1x192xf32, #tpu.memory_space<vmem>>, vector<1x192xf32>
    %7 = vector.shape_cast %6 : vector<1x192xf32> to vector<1x192xf32>
    %8 = vector.broadcast %7 : vector<1x192xf32> to vector<2x192xf32>
    %c0_8 = arith.constant 0 : index
    %c0_9 = arith.constant 0 : index
    %9 = vector.load %arg7[%c0_8, %c0_9] : memref<1x192xf32, #tpu.memory_space<vmem>>, vector<1x192xf32>
    %10 = vector.shape_cast %9 : vector<1x192xf32> to vector<1x192xf32>
    %11 = vector.broadcast %10 : vector<1x192xf32> to vector<2x192xf32>
    %c0_10 = arith.constant 0 : index
    %c0_11 = arith.constant 0 : index
    %12 = vector.load %arg10[%c0_10, %c0_11] : memref<2x64xf32, #tpu.memory_space<vmem>>, vector<2x64xf32>
    %c0_i32_12 = arith.constant 0 : i32
    %c7_i32 = arith.constant 7 : i32
    %13 = arith.subi %c7_i32, %c0_i32_12 : i32
    %14 = arith.index_cast %c0_i32_12 : i32 to index
    %c0_13 = arith.constant 0 : index
    %c0_14 = arith.constant 0 : index
    %15 = vector.load %arg1[%14, %c0_13, %c0_14] : memref<8x2x16xbf16, #tpu.memory_space<vmem>>, vector<1x2x16xbf16>
    %16 = vector.shape_cast %15 : vector<1x2x16xbf16> to vector<2x16xbf16>
    %cst = arith.constant dense<0.000000e+00> : vector<2x192xf32>
    %17 = tpu.matmul %16, %3, %cst {dimension_numbers = #tpu.dot_dimension_numbers<[1], [0], [0], [1], [0, 0, 1, 1], [], []>} : vector<2x16xbf16>, vector<16x192xbf16>, vector<2x192xf32> -> vector<2x192xf32>
    %18 = arith.index_cast %13 : i32 to index
    %c0_15 = arith.constant 0 : index
    %c0_16 = arith.constant 0 : index
    %19 = vector.load %arg2[%18, %c0_15, %c0_16] : memref<8x2x16xbf16, #tpu.memory_space<vmem>>, vector<1x2x16xbf16>
    %20 = vector.shape_cast %19 : vector<1x2x16xbf16> to vector<2x16xbf16>
    %cst_17 = arith.constant dense<0.000000e+00> : vector<2x192xf32>
    %21 = tpu.matmul %20, %4, %cst_17 {dimension_numbers = #tpu.dot_dimension_numbers<[1], [0], [0], [1], [0, 0, 1, 1], [], []>} : vector<2x16xbf16>, vector<16x192xbf16>, vector<2x192xf32> -> vector<2x192xf32>
    %22 = arith.addf %17, %21 : vector<2x192xf32>
    %23 = arith.addf %22, %8 : vector<2x192xf32>
    %24 = arith.truncf %12 : vector<2x64xf32> to vector<2x64xbf16>
    %cst_18 = arith.constant dense<0.000000e+00> : vector<2x192xf32>
    %25 = tpu.matmul %24, %5, %cst_18 {dimension_numbers = #tpu.dot_dimension_numbers<[1], [0], [0], [1], [0, 0, 1, 1], [], []>} : vector<2x64xbf16>, vector<64x192xbf16>, vector<2x192xf32> -> vector<2x192xf32>
    %26 = arith.addf %25, %11 : vector<2x192xf32>
    %27 = vector.extract_strided_slice %23 {offsets = [0, 0], sizes = [2, 128], strides = [1, 1]} : vector<2x192xf32> to vector<2x128xf32>
    %28 = vector.extract_strided_slice %26 {offsets = [0, 0], sizes = [2, 128], strides = [1, 1]} : vector<2x192xf32> to vector<2x128xf32>
    %29 = arith.addf %27, %28 : vector<2x128xf32>
    %30 = arith.negf %29 : vector<2x128xf32>
    %31 = math.exp %30 : vector<2x128xf32>
    %cst_19 = arith.constant 1.000000e+00 : f32
    %32 = vector.broadcast %cst_19 : f32 to vector<2x128xf32>
    %33 = arith.addf %32, %31 : vector<2x128xf32>
    %34 = arith.divf %32, %33 : vector<2x128xf32>
    %35 = vector.extract_strided_slice %34 {offsets = [0, 0], sizes = [2, 64], strides = [1, 1]} : vector<2x128xf32> to vector<2x64xf32>
    %36 = vector.extract_strided_slice %34 {offsets = [0, 64], sizes = [2, 64], strides = [1, 1]} : vector<2x128xf32> to vector<2x64xf32>
    %37 = vector.extract_strided_slice %23 {offsets = [0, 128], sizes = [2, 64], strides = [1, 1]} : vector<2x192xf32> to vector<2x64xf32>
    %38 = vector.extract_strided_slice %26 {offsets = [0, 128], sizes = [2, 64], strides = [1, 1]} : vector<2x192xf32> to vector<2x64xf32>
    %39 = arith.mulf %35, %38 : vector<2x64xf32>
    %40 = arith.addf %37, %39 : vector<2x64xf32>
    %41 = math.tanh %40 : vector<2x64xf32>
    %cst_20 = arith.constant 1.000000e+00 : f32
    %42 = vector.broadcast %cst_20 : f32 to vector<2x64xf32>
    %43 = arith.subf %42, %36 : vector<2x64xf32>
    %44 = arith.mulf %43, %41 : vector<2x64xf32>
    %45 = arith.mulf %36, %12 : vector<2x64xf32>
    %46 = arith.addf %44, %45 : vector<2x64xf32>
    %47 = vector.extract_strided_slice %46 {offsets = [0, 0], sizes = [2, 32], strides = [1, 1]} : vector<2x64xf32> to vector<2x32xf32>
    %48 = arith.truncf %47 : vector<2x32xf32> to vector<2x32xbf16>
    %49 = arith.index_cast %c0_i32_12 : i32 to index
    %c0_21 = arith.constant 0 : index
    %c0_22 = arith.constant 0 : index
    %50 = vector.load %arg8[%49, %c0_21, %c0_22] : memref<8x2x32xbf16, #tpu.memory_space<vmem>>, vector<1x2x32xbf16>
    %51 = vector.shape_cast %50 : vector<1x2x32xbf16> to vector<2x32xbf16>
    %52 = vector.shape_cast %48 : vector<2x32xbf16> to vector<1x2x32xbf16>
    tpu.vector_store %arg8[%49, %c0_21, %c0_22], %52 {strides = array<i32>} : memref<8x2x32xbf16, #tpu.memory_space<vmem>>, vector<1x2x32xbf16>,
    %53 = vector.extract_strided_slice %46 {offsets = [0, 32], sizes = [2, 32], strides = [1, 1]} : vector<2x64xf32> to vector<2x32xf32>
    %54 = arith.truncf %53 : vector<2x32xf32> to vector<2x32xbf16>
    %55 = arith.index_cast %13 : i32 to index
    %c0_23 = arith.constant 0 : index
    %c0_24 = arith.constant 0 : index
    %56 = vector.load %arg9[%55, %c0_23, %c0_24] : memref<8x2x32xbf16, #tpu.memory_space<vmem>>, vector<1x2x32xbf16>
    %57 = vector.shape_cast %56 : vector<1x2x32xbf16> to vector<2x32xbf16>
    %58 = vector.shape_cast %54 : vector<2x32xbf16> to vector<1x2x32xbf16>
    tpu.vector_store %arg9[%55, %c0_23, %c0_24], %58 {strides = array<i32>} : memref<8x2x32xbf16, #tpu.memory_space<vmem>>, vector<1x2x32xbf16>,
    %c1_i32 = arith.constant 1 : i32
    %c7_i32_25 = arith.constant 7 : i32
    %59 = arith.subi %c7_i32_25, %c1_i32 : i32
    %60 = arith.index_cast %c1_i32 : i32 to index
    %c0_26 = arith.constant 0 : index
    %c0_27 = arith.constant 0 : index
    %61 = vector.load %arg1[%60, %c0_26, %c0_27] : memref<8x2x16xbf16, #tpu.memory_space<vmem>>, vector<1x2x16xbf16>
    %62 = vector.shape_cast %61 : vector<1x2x16xbf16> to vector<2x16xbf16>
    %cst_28 = arith.constant dense<0.000000e+00> : vector<2x192xf32>
    %63 = tpu.matmul %62, %3, %cst_28 {dimension_numbers = #tpu.dot_dimension_numbers<[1], [0], [0], [1], [0, 0, 1, 1], [], []>} : vector<2x16xbf16>, vector<16x192xbf16>, vector<2x192xf32> -> vector<2x192xf32>
    %64 = arith.index_cast %59 : i32 to index
    %c0_29 = arith.constant 0 : index
    %c0_30 = arith.constant 0 : index
    %65 = vector.load %arg2[%64, %c0_29, %c0_30] : memref<8x2x16xbf16, #tpu.memory_space<vmem>>, vector<1x2x16xbf16>
    %66 = vector.shape_cast %65 : vector<1x2x16xbf16> to vector<2x16xbf16>
    %cst_31 = arith.constant dense<0.000000e+00> : vector<2x192xf32>
    %67 = tpu.matmul %66, %4, %cst_31 {dimension_numbers = #tpu.dot_dimension_numbers<[1], [0], [0], [1], [0, 0, 1, 1], [], []>} : vector<2x16xbf16>, vector<16x192xbf16>, vector<2x192xf32> -> vector<2x192xf32>
    %68 = arith.addf %63, %67 : vector<2x192xf32>
    %69 = arith.addf %68, %8 : vector<2x192xf32>
    %70 = arith.truncf %46 : vector<2x64xf32> to vector<2x64xbf16>
    %cst_32 = arith.constant dense<0.000000e+00> : vector<2x192xf32>
    %71 = tpu.matmul %70, %5, %cst_32 {dimension_numbers = #tpu.dot_dimension_numbers<[1], [0], [0], [1], [0, 0, 1, 1], [], []>} : vector<2x64xbf16>, vector<64x192xbf16>, vector<2x192xf32> -> vector<2x192xf32>
    %72 = arith.addf %71, %11 : vector<2x192xf32>
    %73 = vector.extract_strided_slice %69 {offsets = [0, 0], sizes = [2, 128], strides = [1, 1]} : vector<2x192xf32> to vector<2x128xf32>
    %74 = vector.extract_strided_slice %72 {offsets = [0, 0], sizes = [2, 128], strides = [1, 1]} : vector<2x192xf32> to vector<2x128xf32>
    %75 = arith.addf %73, %74 : vector<2x128xf32>
    %76 = arith.negf %75 : vector<2x128xf32>
    %77 = math.exp %76 : vector<2x128xf32>
    %cst_33 = arith.constant 1.000000e+00 : f32
    %78 = vector.broadcast %cst_33 : f32 to vector<2x128xf32>
    %79 = arith.addf %78, %77 : vector<2x128xf32>
    %80 = arith.divf %78, %79 : vector<2x128xf32>
    %81 = vector.extract_strided_slice %80 {offsets = [0, 0], sizes = [2, 64], strides = [1, 1]} : vector<2x128xf32> to vector<2x64xf32>
    %82 = vector.extract_strided_slice %80 {offsets = [0, 64], sizes = [2, 64], strides = [1, 1]} : vector<2x128xf32> to vector<2x64xf32>
    %83 = vector.extract_strided_slice %69 {offsets = [0, 128], sizes = [2, 64], strides = [1, 1]} : vector<2x192xf32> to vector<2x64xf32>
    %84 = vector.extract_strided_slice %72 {offsets = [0, 128], sizes = [2, 64], strides = [1, 1]} : vector<2x192xf32> to vector<2x64xf32>
    %85 = arith.mulf %81, %84 : vector<2x64xf32>
    %86 = arith.addf %83, %85 : vector<2x64xf32>
    %87 = math.tanh %86 : vector<2x64xf32>
    %cst_34 = arith.constant 1.000000e+00 : f32
    %88 = vector.broadcast %cst_34 : f32 to vector<2x64xf32>
    %89 = arith.subf %88, %82 : vector<2x64xf32>
    %90 = arith.mulf %89, %87 : vector<2x64xf32>
    %91 = arith.mulf %82, %46 : vector<2x64xf32>
    %92 = arith.addf %90, %91 : vector<2x64xf32>
    %93 = vector.extract_strided_slice %92 {offsets = [0, 0], sizes = [2, 32], strides = [1, 1]} : vector<2x64xf32> to vector<2x32xf32>
    %94 = arith.truncf %93 : vector<2x32xf32> to vector<2x32xbf16>
    %95 = arith.index_cast %c1_i32 : i32 to index
    %c0_35 = arith.constant 0 : index
    %c0_36 = arith.constant 0 : index
    %96 = vector.load %arg8[%95, %c0_35, %c0_36] : memref<8x2x32xbf16, #tpu.memory_space<vmem>>, vector<1x2x32xbf16>
    %97 = vector.shape_cast %96 : vector<1x2x32xbf16> to vector<2x32xbf16>
    %98 = vector.shape_cast %94 : vector<2x32xbf16> to vector<1x2x32xbf16>
    tpu.vector_store %arg8[%95, %c0_35, %c0_36], %98 {strides = array<i32>} : memref<8x2x32xbf16, #tpu.memory_space<vmem>>, vector<1x2x32xbf16>,
    %99 = vector.extract_strided_slice %92 {offsets = [0, 32], sizes = [2, 32], strides = [1, 1]} : vector<2x64xf32> to vector<2x32xf32>
    %100 = arith.truncf %99 : vector<2x32xf32> to vector<2x32xbf16>
    %101 = arith.index_cast %59 : i32 to index
    %c0_37 = arith.constant 0 : index
    %c0_38 = arith.constant 0 : index
    %102 = vector.load %arg9[%101, %c0_37, %c0_38] : memref<8x2x32xbf16, #tpu.memory_space<vmem>>, vector<1x2x32xbf16>
    %103 = vector.shape_cast %102 : vector<1x2x32xbf16> to vector<2x32xbf16>
    %104 = vector.shape_cast %100 : vector<2x32xbf16> to vector<1x2x32xbf16>
    tpu.vector_store %arg9[%101, %c0_37, %c0_38], %104 {strides = array<i32>} : memref<8x2x32xbf16, #tpu.memory_space<vmem>>, vector<1x2x32xbf16>,
    %c2_i32 = arith.constant 2 : i32
    %c7_i32_39 = arith.constant 7 : i32
    %105 = arith.subi %c7_i32_39, %c2_i32 : i32
    %106 = arith.index_cast %c2_i32 : i32 to index
    %c0_40 = arith.constant 0 : index
    %c0_41 = arith.constant 0 : index
    %107 = vector.load %arg1[%106, %c0_40, %c0_41] : memref<8x2x16xbf16, #tpu.memory_space<vmem>>, vector<1x2x16xbf16>
    %108 = vector.shape_cast %107 : vector<1x2x16xbf16> to vector<2x16xbf16>
    %cst_42 = arith.constant dense<0.000000e+00> : vector<2x192xf32>
    %109 = tpu.matmul %108, %3, %cst_42 {dimension_numbers = #tpu.dot_dimension_numbers<[1], [0], [0], [1], [0, 0, 1, 1], [], []>} : vector<2x16xbf16>, vector<16x192xbf16>, vector<2x192xf32> -> vector<2x192xf32>
    %110 = arith.index_cast %105 : i32 to index
    %c0_43 = arith.constant 0 : index
    %c0_44 = arith.constant 0 : index
    %111 = vector.load %arg2[%110, %c0_43, %c0_44] : memref<8x2x16xbf16, #tpu.memory_space<vmem>>, vector<1x2x16xbf16>
    %112 = vector.shape_cast %111 : vector<1x2x16xbf16> to vector<2x16xbf16>
    %cst_45 = arith.constant dense<0.000000e+00> : vector<2x192xf32>
    %113 = tpu.matmul %112, %4, %cst_45 {dimension_numbers = #tpu.dot_dimension_numbers<[1], [0], [0], [1], [0, 0, 1, 1], [], []>} : vector<2x16xbf16>, vector<16x192xbf16>, vector<2x192xf32> -> vector<2x192xf32>
    %114 = arith.addf %109, %113 : vector<2x192xf32>
    %115 = arith.addf %114, %8 : vector<2x192xf32>
    %116 = arith.truncf %92 : vector<2x64xf32> to vector<2x64xbf16>
    %cst_46 = arith.constant dense<0.000000e+00> : vector<2x192xf32>
    %117 = tpu.matmul %116, %5, %cst_46 {dimension_numbers = #tpu.dot_dimension_numbers<[1], [0], [0], [1], [0, 0, 1, 1], [], []>} : vector<2x64xbf16>, vector<64x192xbf16>, vector<2x192xf32> -> vector<2x192xf32>
    %118 = arith.addf %117, %11 : vector<2x192xf32>
    %119 = vector.extract_strided_slice %115 {offsets = [0, 0], sizes = [2, 128], strides = [1, 1]} : vector<2x192xf32> to vector<2x128xf32>
    %120 = vector.extract_strided_slice %118 {offsets = [0, 0], sizes = [2, 128], strides = [1, 1]} : vector<2x192xf32> to vector<2x128xf32>
    %121 = arith.addf %119, %120 : vector<2x128xf32>
    %122 = arith.negf %121 : vector<2x128xf32>
    %123 = math.exp %122 : vector<2x128xf32>
    %cst_47 = arith.constant 1.000000e+00 : f32
    %124 = vector.broadcast %cst_47 : f32 to vector<2x128xf32>
    %125 = arith.addf %124, %123 : vector<2x128xf32>
    %126 = arith.divf %124, %125 : vector<2x128xf32>
    %127 = vector.extract_strided_slice %126 {offsets = [0, 0], sizes = [2, 64], strides = [1, 1]} : vector<2x128xf32> to vector<2x64xf32>
    %128 = vector.extract_strided_slice %126 {offsets = [0, 64], sizes = [2, 64], strides = [1, 1]} : vector<2x128xf32> to vector<2x64xf32>
    %129 = vector.extract_strided_slice %115 {offsets = [0, 128], sizes = [2, 64], strides = [1, 1]} : vector<2x192xf32> to vector<2x64xf32>
    %130 = vector.extract_strided_slice %118 {offsets = [0, 128], sizes = [2, 64], strides = [1, 1]} : vector<2x192xf32> to vector<2x64xf32>
    %131 = arith.mulf %127, %130 : vector<2x64xf32>
    %132 = arith.addf %129, %131 : vector<2x64xf32>
    %133 = math.tanh %132 : vector<2x64xf32>
    %cst_48 = arith.constant 1.000000e+00 : f32
    %134 = vector.broadcast %cst_48 : f32 to vector<2x64xf32>
    %135 = arith.subf %134, %128 : vector<2x64xf32>
    %136 = arith.mulf %135, %133 : vector<2x64xf32>
    %137 = arith.mulf %128, %92 : vector<2x64xf32>
    %138 = arith.addf %136, %137 : vector<2x64xf32>
    %139 = vector.extract_strided_slice %138 {offsets = [0, 0], sizes = [2, 32], strides = [1, 1]} : vector<2x64xf32> to vector<2x32xf32>
    %140 = arith.truncf %139 : vector<2x32xf32> to vector<2x32xbf16>
    %141 = arith.index_cast %c2_i32 : i32 to index
    %c0_49 = arith.constant 0 : index
    %c0_50 = arith.constant 0 : index
    %142 = vector.load %arg8[%141, %c0_49, %c0_50] : memref<8x2x32xbf16, #tpu.memory_space<vmem>>, vector<1x2x32xbf16>
    %143 = vector.shape_cast %142 : vector<1x2x32xbf16> to vector<2x32xbf16>
    %144 = vector.shape_cast %140 : vector<2x32xbf16> to vector<1x2x32xbf16>
    tpu.vector_store %arg8[%141, %c0_49, %c0_50], %144 {strides = array<i32>} : memref<8x2x32xbf16, #tpu.memory_space<vmem>>, vector<1x2x32xbf16>,
    %145 = vector.extract_strided_slice %138 {offsets = [0, 32], sizes = [2, 32], strides = [1, 1]} : vector<2x64xf32> to vector<2x32xf32>
    %146 = arith.truncf %145 : vector<2x32xf32> to vector<2x32xbf16>
    %147 = arith.index_cast %105 : i32 to index
    %c0_51 = arith.constant 0 : index
    %c0_52 = arith.constant 0 : index
    %148 = vector.load %arg9[%147, %c0_51, %c0_52] : memref<8x2x32xbf16, #tpu.memory_space<vmem>>, vector<1x2x32xbf16>
    %149 = vector.shape_cast %148 : vector<1x2x32xbf16> to vector<2x32xbf16>
    %150 = vector.shape_cast %146 : vector<2x32xbf16> to vector<1x2x32xbf16>
    tpu.vector_store %arg9[%147, %c0_51, %c0_52], %150 {strides = array<i32>} : memref<8x2x32xbf16, #tpu.memory_space<vmem>>, vector<1x2x32xbf16>,
    %c3_i32 = arith.constant 3 : i32
    %c7_i32_53 = arith.constant 7 : i32
    %151 = arith.subi %c7_i32_53, %c3_i32 : i32
    %152 = arith.index_cast %c3_i32 : i32 to index
    %c0_54 = arith.constant 0 : index
    %c0_55 = arith.constant 0 : index
    %153 = vector.load %arg1[%152, %c0_54, %c0_55] : memref<8x2x16xbf16, #tpu.memory_space<vmem>>, vector<1x2x16xbf16>
    %154 = vector.shape_cast %153 : vector<1x2x16xbf16> to vector<2x16xbf16>
    %cst_56 = arith.constant dense<0.000000e+00> : vector<2x192xf32>
    %155 = tpu.matmul %154, %3, %cst_56 {dimension_numbers = #tpu.dot_dimension_numbers<[1], [0], [0], [1], [0, 0, 1, 1], [], []>} : vector<2x16xbf16>, vector<16x192xbf16>, vector<2x192xf32> -> vector<2x192xf32>
    %156 = arith.index_cast %151 : i32 to index
    %c0_57 = arith.constant 0 : index
    %c0_58 = arith.constant 0 : index
    %157 = vector.load %arg2[%156, %c0_57, %c0_58] : memref<8x2x16xbf16, #tpu.memory_space<vmem>>, vector<1x2x16xbf16>
    %158 = vector.shape_cast %157 : vector<1x2x16xbf16> to vector<2x16xbf16>
    %cst_59 = arith.constant dense<0.000000e+00> : vector<2x192xf32>
    %159 = tpu.matmul %158, %4, %cst_59 {dimension_numbers = #tpu.dot_dimension_numbers<[1], [0], [0], [1], [0, 0, 1, 1], [], []>} : vector<2x16xbf16>, vector<16x192xbf16>, vector<2x192xf32> -> vector<2x192xf32>
    %160 = arith.addf %155, %159 : vector<2x192xf32>
    %161 = arith.addf %160, %8 : vector<2x192xf32>
    %162 = arith.truncf %138 : vector<2x64xf32> to vector<2x64xbf16>
    %cst_60 = arith.constant dense<0.000000e+00> : vector<2x192xf32>
    %163 = tpu.matmul %162, %5, %cst_60 {dimension_numbers = #tpu.dot_dimension_numbers<[1], [0], [0], [1], [0, 0, 1, 1], [], []>} : vector<2x64xbf16>, vector<64x192xbf16>, vector<2x192xf32> -> vector<2x192xf32>
    %164 = arith.addf %163, %11 : vector<2x192xf32>
    %165 = vector.extract_strided_slice %161 {offsets = [0, 0], sizes = [2, 128], strides = [1, 1]} : vector<2x192xf32> to vector<2x128xf32>
    %166 = vector.extract_strided_slice %164 {offsets = [0, 0], sizes = [2, 128], strides = [1, 1]} : vector<2x192xf32> to vector<2x128xf32>
    %167 = arith.addf %165, %166 : vector<2x128xf32>
    %168 = arith.negf %167 : vector<2x128xf32>
    %169 = math.exp %168 : vector<2x128xf32>
    %cst_61 = arith.constant 1.000000e+00 : f32
    %170 = vector.broadcast %cst_61 : f32 to vector<2x128xf32>
    %171 = arith.addf %170, %169 : vector<2x128xf32>
    %172 = arith.divf %170, %171 : vector<2x128xf32>
    %173 = vector.extract_strided_slice %172 {offsets = [0, 0], sizes = [2, 64], strides = [1, 1]} : vector<2x128xf32> to vector<2x64xf32>
    %174 = vector.extract_strided_slice %172 {offsets = [0, 64], sizes = [2, 64], strides = [1, 1]} : vector<2x128xf32> to vector<2x64xf32>
    %175 = vector.extract_strided_slice %161 {offsets = [0, 128], sizes = [2, 64], strides = [1, 1]} : vector<2x192xf32> to vector<2x64xf32>
    %176 = vector.extract_strided_slice %164 {offsets = [0, 128], sizes = [2, 64], strides = [1, 1]} : vector<2x192xf32> to vector<2x64xf32>
    %177 = arith.mulf %173, %176 : vector<2x64xf32>
    %178 = arith.addf %175, %177 : vector<2x64xf32>
    %179 = math.tanh %178 : vector<2x64xf32>
    %cst_62 = arith.constant 1.000000e+00 : f32
    %180 = vector.broadcast %cst_62 : f32 to vector<2x64xf32>
    %181 = arith.subf %180, %174 : vector<2x64xf32>
    %182 = arith.mulf %181, %179 : vector<2x64xf32>
    %183 = arith.mulf %174, %138 : vector<2x64xf32>
    %184 = arith.addf %182, %183 : vector<2x64xf32>
    %185 = vector.extract_strided_slice %184 {offsets = [0, 0], sizes = [2, 32], strides = [1, 1]} : vector<2x64xf32> to vector<2x32xf32>
    %186 = arith.truncf %185 : vector<2x32xf32> to vector<2x32xbf16>
    %187 = arith.index_cast %c3_i32 : i32 to index
    %c0_63 = arith.constant 0 : index
    %c0_64 = arith.constant 0 : index
    %188 = vector.load %arg8[%187, %c0_63, %c0_64] : memref<8x2x32xbf16, #tpu.memory_space<vmem>>, vector<1x2x32xbf16>
    %189 = vector.shape_cast %188 : vector<1x2x32xbf16> to vector<2x32xbf16>
    %190 = vector.shape_cast %186 : vector<2x32xbf16> to vector<1x2x32xbf16>
    tpu.vector_store %arg8[%187, %c0_63, %c0_64], %190 {strides = array<i32>} : memref<8x2x32xbf16, #tpu.memory_space<vmem>>, vector<1x2x32xbf16>,
    %191 = vector.extract_strided_slice %184 {offsets = [0, 32], sizes = [2, 32], strides = [1, 1]} : vector<2x64xf32> to vector<2x32xf32>
    %192 = arith.truncf %191 : vector<2x32xf32> to vector<2x32xbf16>
    %193 = arith.index_cast %151 : i32 to index
    %c0_65 = arith.constant 0 : index
    %c0_66 = arith.constant 0 : index
    %194 = vector.load %arg9[%193, %c0_65, %c0_66] : memref<8x2x32xbf16, #tpu.memory_space<vmem>>, vector<1x2x32xbf16>
    %195 = vector.shape_cast %194 : vector<1x2x32xbf16> to vector<2x32xbf16>
    %196 = vector.shape_cast %192 : vector<2x32xbf16> to vector<1x2x32xbf16>
    tpu.vector_store %arg9[%193, %c0_65, %c0_66], %196 {strides = array<i32>} : memref<8x2x32xbf16, #tpu.memory_space<vmem>>, vector<1x2x32xbf16>,
    %c4_i32 = arith.constant 4 : i32
    %c7_i32_67 = arith.constant 7 : i32
    %197 = arith.subi %c7_i32_67, %c4_i32 : i32
    %198 = arith.index_cast %c4_i32 : i32 to index
    %c0_68 = arith.constant 0 : index
    %c0_69 = arith.constant 0 : index
    %199 = vector.load %arg1[%198, %c0_68, %c0_69] : memref<8x2x16xbf16, #tpu.memory_space<vmem>>, vector<1x2x16xbf16>
    %200 = vector.shape_cast %199 : vector<1x2x16xbf16> to vector<2x16xbf16>
    %cst_70 = arith.constant dense<0.000000e+00> : vector<2x192xf32>
    %201 = tpu.matmul %200, %3, %cst_70 {dimension_numbers = #tpu.dot_dimension_numbers<[1], [0], [0], [1], [0, 0, 1, 1], [], []>} : vector<2x16xbf16>, vector<16x192xbf16>, vector<2x192xf32> -> vector<2x192xf32>
    %202 = arith.index_cast %197 : i32 to index
    %c0_71 = arith.constant 0 : index
    %c0_72 = arith.constant 0 : index
    %203 = vector.load %arg2[%202, %c0_71, %c0_72] : memref<8x2x16xbf16, #tpu.memory_space<vmem>>, vector<1x2x16xbf16>
    %204 = vector.shape_cast %203 : vector<1x2x16xbf16> to vector<2x16xbf16>
    %cst_73 = arith.constant dense<0.000000e+00> : vector<2x192xf32>
    %205 = tpu.matmul %204, %4, %cst_73 {dimension_numbers = #tpu.dot_dimension_numbers<[1], [0], [0], [1], [0, 0, 1, 1], [], []>} : vector<2x16xbf16>, vector<16x192xbf16>, vector<2x192xf32> -> vector<2x192xf32>
    %206 = arith.addf %201, %205 : vector<2x192xf32>
    %207 = arith.addf %206, %8 : vector<2x192xf32>
    %208 = arith.truncf %184 : vector<2x64xf32> to vector<2x64xbf16>
    %cst_74 = arith.constant dense<0.000000e+00> : vector<2x192xf32>
    %209 = tpu.matmul %208, %5, %cst_74 {dimension_numbers = #tpu.dot_dimension_numbers<[1], [0], [0], [1], [0, 0, 1, 1], [], []>} : vector<2x64xbf16>, vector<64x192xbf16>, vector<2x192xf32> -> vector<2x192xf32>
    %210 = arith.addf %209, %11 : vector<2x192xf32>
    %211 = vector.extract_strided_slice %207 {offsets = [0, 0], sizes = [2, 128], strides = [1, 1]} : vector<2x192xf32> to vector<2x128xf32>
    %212 = vector.extract_strided_slice %210 {offsets = [0, 0], sizes = [2, 128], strides = [1, 1]} : vector<2x192xf32> to vector<2x128xf32>
    %213 = arith.addf %211, %212 : vector<2x128xf32>
    %214 = arith.negf %213 : vector<2x128xf32>
    %215 = math.exp %214 : vector<2x128xf32>
    %cst_75 = arith.constant 1.000000e+00 : f32
    %216 = vector.broadcast %cst_75 : f32 to vector<2x128xf32>
    %217 = arith.addf %216, %215 : vector<2x128xf32>
    %218 = arith.divf %216, %217 : vector<2x128xf32>
    %219 = vector.extract_strided_slice %218 {offsets = [0, 0], sizes = [2, 64], strides = [1, 1]} : vector<2x128xf32> to vector<2x64xf32>
    %220 = vector.extract_strided_slice %218 {offsets = [0, 64], sizes = [2, 64], strides = [1, 1]} : vector<2x128xf32> to vector<2x64xf32>
    %221 = vector.extract_strided_slice %207 {offsets = [0, 128], sizes = [2, 64], strides = [1, 1]} : vector<2x192xf32> to vector<2x64xf32>
    %222 = vector.extract_strided_slice %210 {offsets = [0, 128], sizes = [2, 64], strides = [1, 1]} : vector<2x192xf32> to vector<2x64xf32>
    %223 = arith.mulf %219, %222 : vector<2x64xf32>
    %224 = arith.addf %221, %223 : vector<2x64xf32>
    %225 = math.tanh %224 : vector<2x64xf32>
    %cst_76 = arith.constant 1.000000e+00 : f32
    %226 = vector.broadcast %cst_76 : f32 to vector<2x64xf32>
    %227 = arith.subf %226, %220 : vector<2x64xf32>
    %228 = arith.mulf %227, %225 : vector<2x64xf32>
    %229 = arith.mulf %220, %184 : vector<2x64xf32>
    %230 = arith.addf %228, %229 : vector<2x64xf32>
    %231 = vector.extract_strided_slice %230 {offsets = [0, 0], sizes = [2, 32], strides = [1, 1]} : vector<2x64xf32> to vector<2x32xf32>
    %232 = arith.truncf %231 : vector<2x32xf32> to vector<2x32xbf16>
    %233 = arith.index_cast %c4_i32 : i32 to index
    %c0_77 = arith.constant 0 : index
    %c0_78 = arith.constant 0 : index
    %234 = vector.load %arg8[%233, %c0_77, %c0_78] : memref<8x2x32xbf16, #tpu.memory_space<vmem>>, vector<1x2x32xbf16>
    %235 = vector.shape_cast %234 : vector<1x2x32xbf16> to vector<2x32xbf16>
    %236 = vector.shape_cast %232 : vector<2x32xbf16> to vector<1x2x32xbf16>
    tpu.vector_store %arg8[%233, %c0_77, %c0_78], %236 {strides = array<i32>} : memref<8x2x32xbf16, #tpu.memory_space<vmem>>, vector<1x2x32xbf16>,
    %237 = vector.extract_strided_slice %230 {offsets = [0, 32], sizes = [2, 32], strides = [1, 1]} : vector<2x64xf32> to vector<2x32xf32>
    %238 = arith.truncf %237 : vector<2x32xf32> to vector<2x32xbf16>
    %239 = arith.index_cast %197 : i32 to index
    %c0_79 = arith.constant 0 : index
    %c0_80 = arith.constant 0 : index
    %240 = vector.load %arg9[%239, %c0_79, %c0_80] : memref<8x2x32xbf16, #tpu.memory_space<vmem>>, vector<1x2x32xbf16>
    %241 = vector.shape_cast %240 : vector<1x2x32xbf16> to vector<2x32xbf16>
    %242 = vector.shape_cast %238 : vector<2x32xbf16> to vector<1x2x32xbf16>
    tpu.vector_store %arg9[%239, %c0_79, %c0_80], %242 {strides = array<i32>} : memref<8x2x32xbf16, #tpu.memory_space<vmem>>, vector<1x2x32xbf16>,
    %c5_i32 = arith.constant 5 : i32
    %c7_i32_81 = arith.constant 7 : i32
    %243 = arith.subi %c7_i32_81, %c5_i32 : i32
    %244 = arith.index_cast %c5_i32 : i32 to index
    %c0_82 = arith.constant 0 : index
    %c0_83 = arith.constant 0 : index
    %245 = vector.load %arg1[%244, %c0_82, %c0_83] : memref<8x2x16xbf16, #tpu.memory_space<vmem>>, vector<1x2x16xbf16>
    %246 = vector.shape_cast %245 : vector<1x2x16xbf16> to vector<2x16xbf16>
    %cst_84 = arith.constant dense<0.000000e+00> : vector<2x192xf32>
    %247 = tpu.matmul %246, %3, %cst_84 {dimension_numbers = #tpu.dot_dimension_numbers<[1], [0], [0], [1], [0, 0, 1, 1], [], []>} : vector<2x16xbf16>, vector<16x192xbf16>, vector<2x192xf32> -> vector<2x192xf32>
    %248 = arith.index_cast %243 : i32 to index
    %c0_85 = arith.constant 0 : index
    %c0_86 = arith.constant 0 : index
    %249 = vector.load %arg2[%248, %c0_85, %c0_86] : memref<8x2x16xbf16, #tpu.memory_space<vmem>>, vector<1x2x16xbf16>
    %250 = vector.shape_cast %249 : vector<1x2x16xbf16> to vector<2x16xbf16>
    %cst_87 = arith.constant dense<0.000000e+00> : vector<2x192xf32>
    %251 = tpu.matmul %250, %4, %cst_87 {dimension_numbers = #tpu.dot_dimension_numbers<[1], [0], [0], [1], [0, 0, 1, 1], [], []>} : vector<2x16xbf16>, vector<16x192xbf16>, vector<2x192xf32> -> vector<2x192xf32>
    %252 = arith.addf %247, %251 : vector<2x192xf32>
    %253 = arith.addf %252, %8 : vector<2x192xf32>
    %254 = arith.truncf %230 : vector<2x64xf32> to vector<2x64xbf16>
    %cst_88 = arith.constant dense<0.000000e+00> : vector<2x192xf32>
    %255 = tpu.matmul %254, %5, %cst_88 {dimension_numbers = #tpu.dot_dimension_numbers<[1], [0], [0], [1], [0, 0, 1, 1], [], []>} : vector<2x64xbf16>, vector<64x192xbf16>, vector<2x192xf32> -> vector<2x192xf32>
    %256 = arith.addf %255, %11 : vector<2x192xf32>
    %257 = vector.extract_strided_slice %253 {offsets = [0, 0], sizes = [2, 128], strides = [1, 1]} : vector<2x192xf32> to vector<2x128xf32>
    %258 = vector.extract_strided_slice %256 {offsets = [0, 0], sizes = [2, 128], strides = [1, 1]} : vector<2x192xf32> to vector<2x128xf32>
    %259 = arith.addf %257, %258 : vector<2x128xf32>
    %260 = arith.negf %259 : vector<2x128xf32>
    %261 = math.exp %260 : vector<2x128xf32>
    %cst_89 = arith.constant 1.000000e+00 : f32
    %262 = vector.broadcast %cst_89 : f32 to vector<2x128xf32>
    %263 = arith.addf %262, %261 : vector<2x128xf32>
    %264 = arith.divf %262, %263 : vector<2x128xf32>
    %265 = vector.extract_strided_slice %264 {offsets = [0, 0], sizes = [2, 64], strides = [1, 1]} : vector<2x128xf32> to vector<2x64xf32>
    %266 = vector.extract_strided_slice %264 {offsets = [0, 64], sizes = [2, 64], strides = [1, 1]} : vector<2x128xf32> to vector<2x64xf32>
    %267 = vector.extract_strided_slice %253 {offsets = [0, 128], sizes = [2, 64], strides = [1, 1]} : vector<2x192xf32> to vector<2x64xf32>
    %268 = vector.extract_strided_slice %256 {offsets = [0, 128], sizes = [2, 64], strides = [1, 1]} : vector<2x192xf32> to vector<2x64xf32>
    %269 = arith.mulf %265, %268 : vector<2x64xf32>
    %270 = arith.addf %267, %269 : vector<2x64xf32>
    %271 = math.tanh %270 : vector<2x64xf32>
    %cst_90 = arith.constant 1.000000e+00 : f32
    %272 = vector.broadcast %cst_90 : f32 to vector<2x64xf32>
    %273 = arith.subf %272, %266 : vector<2x64xf32>
    %274 = arith.mulf %273, %271 : vector<2x64xf32>
    %275 = arith.mulf %266, %230 : vector<2x64xf32>
    %276 = arith.addf %274, %275 : vector<2x64xf32>
    %277 = vector.extract_strided_slice %276 {offsets = [0, 0], sizes = [2, 32], strides = [1, 1]} : vector<2x64xf32> to vector<2x32xf32>
    %278 = arith.truncf %277 : vector<2x32xf32> to vector<2x32xbf16>
    %279 = arith.index_cast %c5_i32 : i32 to index
    %c0_91 = arith.constant 0 : index
    %c0_92 = arith.constant 0 : index
    %280 = vector.load %arg8[%279, %c0_91, %c0_92] : memref<8x2x32xbf16, #tpu.memory_space<vmem>>, vector<1x2x32xbf16>
    %281 = vector.shape_cast %280 : vector<1x2x32xbf16> to vector<2x32xbf16>
    %282 = vector.shape_cast %278 : vector<2x32xbf16> to vector<1x2x32xbf16>
    tpu.vector_store %arg8[%279, %c0_91, %c0_92], %282 {strides = array<i32>} : memref<8x2x32xbf16, #tpu.memory_space<vmem>>, vector<1x2x32xbf16>,
    %283 = vector.extract_strided_slice %276 {offsets = [0, 32], sizes = [2, 32], strides = [1, 1]} : vector<2x64xf32> to vector<2x32xf32>
    %284 = arith.truncf %283 : vector<2x32xf32> to vector<2x32xbf16>
    %285 = arith.index_cast %243 : i32 to index
    %c0_93 = arith.constant 0 : index
    %c0_94 = arith.constant 0 : index
    %286 = vector.load %arg9[%285, %c0_93, %c0_94] : memref<8x2x32xbf16, #tpu.memory_space<vmem>>, vector<1x2x32xbf16>
    %287 = vector.shape_cast %286 : vector<1x2x32xbf16> to vector<2x32xbf16>
    %288 = vector.shape_cast %284 : vector<2x32xbf16> to vector<1x2x32xbf16>
    tpu.vector_store %arg9[%285, %c0_93, %c0_94], %288 {strides = array<i32>} : memref<8x2x32xbf16, #tpu.memory_space<vmem>>, vector<1x2x32xbf16>,
    %c6_i32 = arith.constant 6 : i32
    %c7_i32_95 = arith.constant 7 : i32
    %289 = arith.subi %c7_i32_95, %c6_i32 : i32
    %290 = arith.index_cast %c6_i32 : i32 to index
    %c0_96 = arith.constant 0 : index
    %c0_97 = arith.constant 0 : index
    %291 = vector.load %arg1[%290, %c0_96, %c0_97] : memref<8x2x16xbf16, #tpu.memory_space<vmem>>, vector<1x2x16xbf16>
    %292 = vector.shape_cast %291 : vector<1x2x16xbf16> to vector<2x16xbf16>
    %cst_98 = arith.constant dense<0.000000e+00> : vector<2x192xf32>
    %293 = tpu.matmul %292, %3, %cst_98 {dimension_numbers = #tpu.dot_dimension_numbers<[1], [0], [0], [1], [0, 0, 1, 1], [], []>} : vector<2x16xbf16>, vector<16x192xbf16>, vector<2x192xf32> -> vector<2x192xf32>
    %294 = arith.index_cast %289 : i32 to index
    %c0_99 = arith.constant 0 : index
    %c0_100 = arith.constant 0 : index
    %295 = vector.load %arg2[%294, %c0_99, %c0_100] : memref<8x2x16xbf16, #tpu.memory_space<vmem>>, vector<1x2x16xbf16>
    %296 = vector.shape_cast %295 : vector<1x2x16xbf16> to vector<2x16xbf16>
    %cst_101 = arith.constant dense<0.000000e+00> : vector<2x192xf32>
    %297 = tpu.matmul %296, %4, %cst_101 {dimension_numbers = #tpu.dot_dimension_numbers<[1], [0], [0], [1], [0, 0, 1, 1], [], []>} : vector<2x16xbf16>, vector<16x192xbf16>, vector<2x192xf32> -> vector<2x192xf32>
    %298 = arith.addf %293, %297 : vector<2x192xf32>
    %299 = arith.addf %298, %8 : vector<2x192xf32>
    %300 = arith.truncf %276 : vector<2x64xf32> to vector<2x64xbf16>
    %cst_102 = arith.constant dense<0.000000e+00> : vector<2x192xf32>
    %301 = tpu.matmul %300, %5, %cst_102 {dimension_numbers = #tpu.dot_dimension_numbers<[1], [0], [0], [1], [0, 0, 1, 1], [], []>} : vector<2x64xbf16>, vector<64x192xbf16>, vector<2x192xf32> -> vector<2x192xf32>
    %302 = arith.addf %301, %11 : vector<2x192xf32>
    %303 = vector.extract_strided_slice %299 {offsets = [0, 0], sizes = [2, 128], strides = [1, 1]} : vector<2x192xf32> to vector<2x128xf32>
    %304 = vector.extract_strided_slice %302 {offsets = [0, 0], sizes = [2, 128], strides = [1, 1]} : vector<2x192xf32> to vector<2x128xf32>
    %305 = arith.addf %303, %304 : vector<2x128xf32>
    %306 = arith.negf %305 : vector<2x128xf32>
    %307 = math.exp %306 : vector<2x128xf32>
    %cst_103 = arith.constant 1.000000e+00 : f32
    %308 = vector.broadcast %cst_103 : f32 to vector<2x128xf32>
    %309 = arith.addf %308, %307 : vector<2x128xf32>
    %310 = arith.divf %308, %309 : vector<2x128xf32>
    %311 = vector.extract_strided_slice %310 {offsets = [0, 0], sizes = [2, 64], strides = [1, 1]} : vector<2x128xf32> to vector<2x64xf32>
    %312 = vector.extract_strided_slice %310 {offsets = [0, 64], sizes = [2, 64], strides = [1, 1]} : vector<2x128xf32> to vector<2x64xf32>
    %313 = vector.extract_strided_slice %299 {offsets = [0, 128], sizes = [2, 64], strides = [1, 1]} : vector<2x192xf32> to vector<2x64xf32>
    %314 = vector.extract_strided_slice %302 {offsets = [0, 128], sizes = [2, 64], strides = [1, 1]} : vector<2x192xf32> to vector<2x64xf32>
    %315 = arith.mulf %311, %314 : vector<2x64xf32>
    %316 = arith.addf %313, %315 : vector<2x64xf32>
    %317 = math.tanh %316 : vector<2x64xf32>
    %cst_104 = arith.constant 1.000000e+00 : f32
    %318 = vector.broadcast %cst_104 : f32 to vector<2x64xf32>
    %319 = arith.subf %318, %312 : vector<2x64xf32>
    %320 = arith.mulf %319, %317 : vector<2x64xf32>
    %321 = arith.mulf %312, %276 : vector<2x64xf32>
    %322 = arith.addf %320, %321 : vector<2x64xf32>
    %323 = vector.extract_strided_slice %322 {offsets = [0, 0], sizes = [2, 32], strides = [1, 1]} : vector<2x64xf32> to vector<2x32xf32>
    %324 = arith.truncf %323 : vector<2x32xf32> to vector<2x32xbf16>
    %325 = arith.index_cast %c6_i32 : i32 to index
    %c0_105 = arith.constant 0 : index
    %c0_106 = arith.constant 0 : index
    %326 = vector.load %arg8[%325, %c0_105, %c0_106] : memref<8x2x32xbf16, #tpu.memory_space<vmem>>, vector<1x2x32xbf16>
    %327 = vector.shape_cast %326 : vector<1x2x32xbf16> to vector<2x32xbf16>
    %328 = vector.shape_cast %324 : vector<2x32xbf16> to vector<1x2x32xbf16>
    tpu.vector_store %arg8[%325, %c0_105, %c0_106], %328 {strides = array<i32>} : memref<8x2x32xbf16, #tpu.memory_space<vmem>>, vector<1x2x32xbf16>,
    %329 = vector.extract_strided_slice %322 {offsets = [0, 32], sizes = [2, 32], strides = [1, 1]} : vector<2x64xf32> to vector<2x32xf32>
    %330 = arith.truncf %329 : vector<2x32xf32> to vector<2x32xbf16>
    %331 = arith.index_cast %289 : i32 to index
    %c0_107 = arith.constant 0 : index
    %c0_108 = arith.constant 0 : index
    %332 = vector.load %arg9[%331, %c0_107, %c0_108] : memref<8x2x32xbf16, #tpu.memory_space<vmem>>, vector<1x2x32xbf16>
    %333 = vector.shape_cast %332 : vector<1x2x32xbf16> to vector<2x32xbf16>
    %334 = vector.shape_cast %330 : vector<2x32xbf16> to vector<1x2x32xbf16>
    tpu.vector_store %arg9[%331, %c0_107, %c0_108], %334 {strides = array<i32>} : memref<8x2x32xbf16, #tpu.memory_space<vmem>>, vector<1x2x32xbf16>,
    %c7_i32_109 = arith.constant 7 : i32
    %c7_i32_110 = arith.constant 7 : i32
    %335 = arith.subi %c7_i32_110, %c7_i32_109 : i32
    %336 = arith.index_cast %c7_i32_109 : i32 to index
    %c0_111 = arith.constant 0 : index
    %c0_112 = arith.constant 0 : index
    %337 = vector.load %arg1[%336, %c0_111, %c0_112] : memref<8x2x16xbf16, #tpu.memory_space<vmem>>, vector<1x2x16xbf16>
    %338 = vector.shape_cast %337 : vector<1x2x16xbf16> to vector<2x16xbf16>
    %cst_113 = arith.constant dense<0.000000e+00> : vector<2x192xf32>
    %339 = tpu.matmul %338, %3, %cst_113 {dimension_numbers = #tpu.dot_dimension_numbers<[1], [0], [0], [1], [0, 0, 1, 1], [], []>} : vector<2x16xbf16>, vector<16x192xbf16>, vector<2x192xf32> -> vector<2x192xf32>
    %340 = arith.index_cast %335 : i32 to index
    %c0_114 = arith.constant 0 : index
    %c0_115 = arith.constant 0 : index
    %341 = vector.load %arg2[%340, %c0_114, %c0_115] : memref<8x2x16xbf16, #tpu.memory_space<vmem>>, vector<1x2x16xbf16>
    %342 = vector.shape_cast %341 : vector<1x2x16xbf16> to vector<2x16xbf16>
    %cst_116 = arith.constant dense<0.000000e+00> : vector<2x192xf32>
    %343 = tpu.matmul %342, %4, %cst_116 {dimension_numbers = #tpu.dot_dimension_numbers<[1], [0], [0], [1], [0, 0, 1, 1], [], []>} : vector<2x16xbf16>, vector<16x192xbf16>, vector<2x192xf32> -> vector<2x192xf32>
    %344 = arith.addf %339, %343 : vector<2x192xf32>
    %345 = arith.addf %344, %8 : vector<2x192xf32>
    %346 = arith.truncf %322 : vector<2x64xf32> to vector<2x64xbf16>
    %cst_117 = arith.constant dense<0.000000e+00> : vector<2x192xf32>
    %347 = tpu.matmul %346, %5, %cst_117 {dimension_numbers = #tpu.dot_dimension_numbers<[1], [0], [0], [1], [0, 0, 1, 1], [], []>} : vector<2x64xbf16>, vector<64x192xbf16>, vector<2x192xf32> -> vector<2x192xf32>
    %348 = arith.addf %347, %11 : vector<2x192xf32>
    %349 = vector.extract_strided_slice %345 {offsets = [0, 0], sizes = [2, 128], strides = [1, 1]} : vector<2x192xf32> to vector<2x128xf32>
    %350 = vector.extract_strided_slice %348 {offsets = [0, 0], sizes = [2, 128], strides = [1, 1]} : vector<2x192xf32> to vector<2x128xf32>
    %351 = arith.addf %349, %350 : vector<2x128xf32>
    %352 = arith.negf %351 : vector<2x128xf32>
    %353 = math.exp %352 : vector<2x128xf32>
    %cst_118 = arith.constant 1.000000e+00 : f32
    %354 = vector.broadcast %cst_118 : f32 to vector<2x128xf32>
    %355 = arith.addf %354, %353 : vector<2x128xf32>
    %356 = arith.divf %354, %355 : vector<2x128xf32>
    %357 = vector.extract_strided_slice %356 {offsets = [0, 0], sizes = [2, 64], strides = [1, 1]} : vector<2x128xf32> to vector<2x64xf32>
    %358 = vector.extract_strided_slice %356 {offsets = [0, 64], sizes = [2, 64], strides = [1, 1]} : vector<2x128xf32> to vector<2x64xf32>
    %359 = vector.extract_strided_slice %345 {offsets = [0, 128], sizes = [2, 64], strides = [1, 1]} : vector<2x192xf32> to vector<2x64xf32>
    %360 = vector.extract_strided_slice %348 {offsets = [0, 128], sizes = [2, 64], strides = [1, 1]} : vector<2x192xf32> to vector<2x64xf32>
    %361 = arith.mulf %357, %360 : vector<2x64xf32>
    %362 = arith.addf %359, %361 : vector<2x64xf32>
    %363 = math.tanh %362 : vector<2x64xf32>
    %cst_119 = arith.constant 1.000000e+00 : f32
    %364 = vector.broadcast %cst_119 : f32 to vector<2x64xf32>
    %365 = arith.subf %364, %358 : vector<2x64xf32>
    %366 = arith.mulf %365, %363 : vector<2x64xf32>
    %367 = arith.mulf %358, %322 : vector<2x64xf32>
    %368 = arith.addf %366, %367 : vector<2x64xf32>
    %369 = vector.extract_strided_slice %368 {offsets = [0, 0], sizes = [2, 32], strides = [1, 1]} : vector<2x64xf32> to vector<2x32xf32>
    %370 = arith.truncf %369 : vector<2x32xf32> to vector<2x32xbf16>
    %371 = arith.index_cast %c7_i32_109 : i32 to index
    %c0_120 = arith.constant 0 : index
    %c0_121 = arith.constant 0 : index
    %372 = vector.load %arg8[%371, %c0_120, %c0_121] : memref<8x2x32xbf16, #tpu.memory_space<vmem>>, vector<1x2x32xbf16>
    %373 = vector.shape_cast %372 : vector<1x2x32xbf16> to vector<2x32xbf16>
    %374 = vector.shape_cast %370 : vector<2x32xbf16> to vector<1x2x32xbf16>
    tpu.vector_store %arg8[%371, %c0_120, %c0_121], %374 {strides = array<i32>} : memref<8x2x32xbf16, #tpu.memory_space<vmem>>, vector<1x2x32xbf16>,
    %375 = vector.extract_strided_slice %368 {offsets = [0, 32], sizes = [2, 32], strides = [1, 1]} : vector<2x64xf32> to vector<2x32xf32>
    %376 = arith.truncf %375 : vector<2x32xf32> to vector<2x32xbf16>
    %377 = arith.index_cast %335 : i32 to index
    %c0_122 = arith.constant 0 : index
    %c0_123 = arith.constant 0 : index
    %378 = vector.load %arg9[%377, %c0_122, %c0_123] : memref<8x2x32xbf16, #tpu.memory_space<vmem>>, vector<1x2x32xbf16>
    %379 = vector.shape_cast %378 : vector<1x2x32xbf16> to vector<2x32xbf16>
    %380 = vector.shape_cast %376 : vector<2x32xbf16> to vector<1x2x32xbf16>
    tpu.vector_store %arg9[%377, %c0_122, %c0_123], %380 {strides = array<i32>} : memref<8x2x32xbf16, #tpu.memory_space<vmem>>, vector<1x2x32xbf16>,
    %c8_i32 = arith.constant 8 : i32
    %c0_124 = arith.constant 0 : index
    %c0_125 = arith.constant 0 : index
    %381 = vector.load %arg10[%c0_124, %c0_125] : memref<2x64xf32, #tpu.memory_space<vmem>>, vector<2x64xf32>
    tpu.vector_store %arg10[%c0_124, %c0_125], %368 {strides = array<i32>} : memref<2x64xf32, #tpu.memory_space<vmem>>, vector<2x64xf32>,
    return
  }
  func.func @transform_0(%arg0: i32) -> (i32, i32, i32) {
    %c0_i32 = arith.constant 0 : i32
    %c0_i32_0 = arith.constant 0 : i32
    %c0_i32_1 = arith.constant 0 : i32
    return %arg0, %c0_i32, %c0_i32_0 : i32, i32, i32
  }
  func.func @transform_1(%arg0: i32) -> (i32, i32, i32) {
    %c0_i32 = arith.constant 0 : i32
    %0 = arith.subi %c0_i32, %arg0 : i32
    %c0_i32_0 = arith.constant 0 : i32
    %c0_i32_1 = arith.constant 0 : i32
    %c0_i32_2 = arith.constant 0 : i32
    return %0, %c0_i32_0, %c0_i32_1 : i32, i32, i32
  }
  func.func @transform_2(%arg0: i32) -> (i32, i32) {
    %c0_i32 = arith.constant 0 : i32
    %c0_i32_0 = arith.constant 0 : i32
    %c0_i32_1 = arith.constant 0 : i32
    return %c0_i32, %c0_i32_0 : i32, i32
  }
  func.func @transform_3(%arg0: i32) -> (i32, i32) {
    %c0_i32 = arith.constant 0 : i32
    %c0_i32_0 = arith.constant 0 : i32
    %c0_i32_1 = arith.constant 0 : i32
    return %c0_i32, %c0_i32_0 : i32, i32
  }
  func.func @transform_4(%arg0: i32) -> (i32, i32) {
    %c0_i32 = arith.constant 0 : i32
    %c0_i32_0 = arith.constant 0 : i32
    %c0_i32_1 = arith.constant 0 : i32
    return %c0_i32, %c0_i32_0 : i32, i32
  }
  func.func @transform_5(%arg0: i32) -> (i32, i32) {
    %c0_i32 = arith.constant 0 : i32
    %c0_i32_0 = arith.constant 0 : i32
    %c0_i32_1 = arith.constant 0 : i32
    return %c0_i32, %c0_i32_0 : i32, i32
  }
  func.func @transform_6(%arg0: i32) -> (i32, i32) {
    %c0_i32 = arith.constant 0 : i32
    %c0_i32_0 = arith.constant 0 : i32
    %c0_i32_1 = arith.constant 0 : i32
    return %c0_i32, %c0_i32_0 : i32, i32
  }
  func.func @transform_7(%arg0: i32) -> (i32, i32, i32) {
    %c0_i32 = arith.constant 0 : i32
    %c0_i32_0 = arith.constant 0 : i32
    %c0_i32_1 = arith.constant 0 : i32
    return %arg0, %c0_i32, %c0_i32_0 : i32, i32, i32
  }
  func.func @transform_8(%arg0: i32) -> (i32, i32, i32) {
    %c0_i32 = arith.constant 0 : i32
    %0 = arith.subi %c0_i32, %arg0 : i32
    %c0_i32_0 = arith.constant 0 : i32
    %c0_i32_1 = arith.constant 0 : i32
    %c0_i32_2 = arith.constant 0 : i32
    return %0, %c0_i32_0, %c0_i32_1 : i32, i32, i32
  }
}

module attributes {stable_mosaic.version = 11 : i64} {
  func.func @matmul_bias_kernel(%arg0: i32, %arg1: memref<16x64xbf16, #tpu.memory_space<vmem>>, %arg2: memref<64x128xbf16, #tpu.memory_space<vmem>>, %arg3: memref<1x128xf32, #tpu.memory_space<vmem>>, %arg4: memref<16x128xf32, #tpu.memory_space<vmem>>) attributes {dimension_semantics = [#tpu.dimension_semantics<parallel>], iteration_bounds = array<i64: 1>, scalar_prefetch = 0 : i64, scratch_operands = 0 : i64, tpu.core_type = #tpu.core_type<tc>, window_params = [{transform_indices = @transform_0, window_bounds = array<i64: 16, 64>}, {pipeline_mode = #tpu.pipeline_mode<synchronous>, transform_indices = @transform_1, window_bounds = array<i64: 64, 128>}, {pipeline_mode = #tpu.pipeline_mode<synchronous>, transform_indices = @transform_2, window_bounds = array<i64: 1, 128>}, {transform_indices = @transform_3, window_bounds = array<i64: 16, 128>}]} {
    %c0 = arith.constant 0 : index
    %c0_0 = arith.constant 0 : index
    %0 = vector.load %arg1[%c0, %c0_0] : memref<16x64xbf16, #tpu.memory_space<vmem>>, vector<16x64xbf16>
    %c0_1 = arith.constant 0 : index
    %c0_2 = arith.constant 0 : index
    %1 = vector.load %arg2[%c0_1, %c0_2] : memref<64x128xbf16, #tpu.memory_space<vmem>>, vector<64x128xbf16>
    %cst = arith.constant dense<0.000000e+00> : vector<16x128xf32>
    %2 = tpu.matmul %0, %1, %cst {dimension_numbers = #tpu.dot_dimension_numbers<[1], [0], [0], [1], [0, 0, 1, 1], [], []>} : vector<16x64xbf16>, vector<64x128xbf16>, vector<16x128xf32> -> vector<16x128xf32>
    %c0_3 = arith.constant 0 : index
    %c0_4 = arith.constant 0 : index
    %3 = vector.load %arg3[%c0_3, %c0_4] : memref<1x128xf32, #tpu.memory_space<vmem>>, vector<1x128xf32>
    %4 = vector.broadcast %3 : vector<1x128xf32> to vector<16x128xf32>
    %5 = arith.addf %2, %4 : vector<16x128xf32>
    %c0_5 = arith.constant 0 : index
    %c0_6 = arith.constant 0 : index
    %6 = vector.load %arg4[%c0_5, %c0_6] : memref<16x128xf32, #tpu.memory_space<vmem>>, vector<16x128xf32>
    tpu.vector_store %arg4[%c0_5, %c0_6], %5 {strides = array<i32>} : memref<16x128xf32, #tpu.memory_space<vmem>>, vector<16x128xf32>,
    return
  }
  func.func @transform_0(%arg0: i32) -> (i32, i32) {
    %c0_i32 = arith.constant 0 : i32
    %c0_i32_0 = arith.constant 0 : i32
    return %arg0, %c0_i32 : i32, i32
  }
  func.func @transform_1(%arg0: i32) -> (i32, i32) {
    %c0_i32 = arith.constant 0 : i32
    %c0_i32_0 = arith.constant 0 : i32
    %c0_i32_1 = arith.constant 0 : i32
    return %c0_i32, %c0_i32_0 : i32, i32
  }
  func.func @transform_2(%arg0: i32) -> (i32, i32) {
    %c0_i32 = arith.constant 0 : i32
    %c0_i32_0 = arith.constant 0 : i32
    %c0_i32_1 = arith.constant 0 : i32
    return %c0_i32, %c0_i32_0 : i32, i32
  }
  func.func @transform_3(%arg0: i32) -> (i32, i32) {
    %c0_i32 = arith.constant 0 : i32
    %c0_i32_0 = arith.constant 0 : i32
    return %arg0, %c0_i32 : i32, i32
  }
}

</mosaic_0001>

<llo_original>
// kernel: birnn_gru_forward.5
$region0: #{birnn_gru_forward.5}
  #allocation0 [shape = 'u32[]', space=smem, size = 0x4, offset = 0x4, fixed_abs, tag = 'smem constant byte address 0x4 - core index']
  #allocation1 [shape = 'u32[144,128]{1,0:T(1,128)}', space=vmem, size = 0x12000, scoped, tag = 'internal scratch']
  %s0 = inlined_call_operand.vmem [shape: bf16[16,64], index: 0, kind: input, shape index: {}]
  %s1 = inlined_call_operand.vmem [shape: bf16[64,128], index: 1, kind: input, shape index: {}]
  %s2 = inlined_call_operand.vmem [shape: f32[1,128], index: 2, kind: input, shape index: {}]
  %s3 = inlined_call_operand.hbm [shape: f32[16,128], index: 3, kind: output, shape index: {}]
  %s4 = sld [smem:[#allocation0]]
  $region22: #{birnn_gru_forward.5} parent=0
    _
  %s6 = ssub.s32 1, %s4
  %s7 = scalar_select 0, %s6, %s4
  $region1: #{birnn_gru_forward.5} parent=0
    #allocation2 [shape = 'u8[8192]{0}', space=vmem, size = 0x2000, scoped, tag = 'output window, operand 0, single buffered']
    #allocation3 [shape = 's32[1]{0}', space=sflag, size = 0x4, scoped, tag = 'scoped memory for birnn_gru_forward.5']
    %8 = vsyncpa [#allocation3], 0
    // Predicated region
    $region2: #{birnn_gru_forward.5} parent=1 // pred_check
      _
    $region3: #{birnn_gru_forward.5} parent=1 // pred_check_branch
      %10 = sbr.rel (0) target = $region5
    $region4: #{birnn_gru_forward.5} parent=1 // pred_region
      _
    $region5: #{birnn_gru_forward.5} parent=1 // pred_fallthru
      _
    // Predicated region
    $region6: #{birnn_gru_forward.5} parent=1 // pred_check
      _
    $region7: #{birnn_gru_forward.5} parent=1 // pred_check_branch
      %12 = sbr.rel (0) target = $region9
    $region8: #{birnn_gru_forward.5} parent=1 // pred_region
      _
    $region9: #{birnn_gru_forward.5} parent=1 // pred_fallthru
      _
    // Predicated region
    $region10: #{birnn_gru_forward.5} parent=1 // pred_check
      _
    $region11: #{birnn_gru_forward.5} parent=1 // pred_check_branch
      %14 = sbr.rel (0) target = $region13
    $region12: #{birnn_gru_forward.5} parent=1 // pred_region
      _
    $region13: #{birnn_gru_forward.5} parent=1 // pred_fallthru
      _
    %v16 = vld [vmem:[%s0] sm:$0xf]
    %v17 = vld [vmem:[%s0 + $0x4] sm:$0xf]
    %v18 = vld [vmem:[%s1] sm:$0xf]
    %v19 = vld [vmem:[%s1 + $0x4] sm:$0xf]
    %v20 = vld [vmem:[%s1 + $0x8] sm:$0xf]
    %v21 = vld [vmem:[%s1 + $0xc] sm:$0xf]
    %v22 = vld [vmem:[%s1 + $0x10] sm:$0xf]
    %v23 = vld [vmem:[%s1 + $0x14] sm:$0xf]
    %v24 = vld [vmem:[%s1 + $0x18] sm:$0xf]
    %v25 = vld [vmem:[%s1 + $0x1c] sm:$0xf]
    %v26 = vld [vmem:[%s2] sm:$0x1]
    %v28 = vlaneseq
    %v29 = vshrl.u32 %v28, 7
    %v30 = vsub.s32 0, %v29
    %v31 = vrot.slane %v26, %v30
    %v35 = vunpack.c.l.b16 %v16
    %v36 = vunpack.c.l.b16 %v17
    %v37 = vpack.c.b16 %v36, %v35
    %v46 = vunpack.c.l.b16 %v18
    %v47 = vunpack.c.l.b16 %v19
    %v48 = vunpack.c.l.b16 %v20
    %v49 = vunpack.c.l.b16 %v21
    %v50 = vunpack.c.l.b16 %v22
    %v51 = vunpack.c.l.b16 %v23
    %v52 = vunpack.c.l.b16 %v24
    %v53 = vunpack.c.l.b16 %v25
    %v54 = vpack.c.b16 %v47, %v46
    %v55 = vpack.c.b16 %v49, %v48
    %v56 = vpack.c.b16 %v51, %v50
    %v57 = vpack.c.b16 %v53, %v52
    %vm62 = vcmask 523264
    %v64 = vsel %vm62, %v37, 0
    %66 = vmatprep.subr.bf16.mxu0 0
    %67 = vmatpush1.bf16.msra.mxu0 %v54
    %68 = vmatprep.subr.bf16.mxu0 0
    %69 = vmatpush1.bf16.msra.mxu0 %v55
    %70 = vmatprep.subr.bf16.mxu0 0
    %71 = vmatpush1.bf16.msra.mxu0 %v56
    %72 = vmatprep.subr.bf16.mxu0 0
    %73 = vmatpush1.bf16.msra.mxu0 %v57
    %74 = vmatprep.subr.bf16.mxu0 0
    %75 = vmatpush1.bf16.msra.mxu0 0
    %76 = vmatprep.subr.bf16.mxu0 0
    %77 = vmatpush1.bf16.msra.mxu0 0
    %78 = vmatprep.subr.bf16.mxu0 0
    %79 = vmatpush1.bf16.msra.mxu0 0
    %80 = vmatprep.subr.bf16.mxu0 0
    %81 = vmatpush1.bf16.msra.mxu0 0
    %82 = vmatprep.subr.bf16.mxu0 0
    %83 = vmatpush1.bf16.msra.mxu0 0
    %84 = vmatprep.subr.bf16.mxu0 0
    %85 = vmatpush1.bf16.msra.mxu0 0
    %86 = vmatprep.subr.bf16.mxu0 0
    %87 = vmatpush1.bf16.msra.mxu0 0
    %88 = vmatprep.subr.bf16.mxu0 0
    %89 = vmatpush1.bf16.msra.mxu0 0
    %90 = vmatprep.subr.bf16.mxu0 0
    %91 = vmatpush1.bf16.msra.mxu0 0
    %92 = vmatprep.subr.bf16.mxu0 0
    %93 = vmatpush1.bf16.msra.mxu0 0
    %94 = vmatprep.subr.bf16.mxu0 0
    %95 = vmatpush1.bf16.msra.mxu0 0
    %96 = vmatprep.subr.bf16.mxu0 0
    %97 = vmatpush1.bf16.msra.mxu0 0
    %98 = vmatprep.mubr.bf16.mxu0 0
    %99 = vmatmul.mubr.bf16.gmra.mrb[0].mxu0 %v64
    %v100 = vpop.f32.mrb[0].mxu0
    %v101 = vadd.f32 %v31, %v100
    %v102 = vpop.f32.mrb[0].mxu0
    %v103 = vpop.f32.mrb[0].mxu0
    %v104 = vadd.f32 %v31, %v103
    %v105 = vpop.f32.mrb[0].mxu0
    %106 = vdwg.mxu0
    %107 = vst [vmem:[#allocation2] sm:$0xff] %v101
    %108 = vst [vmem:[#allocation2 + $0x8] sm:$0xff] %v104
    // Predicated region
    $region14: #{birnn_gru_forward.5} parent=1 // pred_check
      _
    $region15: #{birnn_gru_forward.5} parent=1 // pred_check_branch
      %110 = sbr.rel (0) target = $region17
    $region16: #{birnn_gru_forward.5} parent=1 // pred_region
      %s112 = ssub.s32 256, 256
      %113 = vsyncadd [#allocation3], %s112
      %s114 = sshll.u32 [#allocation2], 4
      %s115 = int_to_ptr.vmem [resolvable:$true] %s114
      %120 = dma.vmem_to_hbm [thread:$0]  %s115, 256, %s3, [#allocation3], 128, 128, 8
    $region17: #{birnn_gru_forward.5} parent=1 // pred_fallthru
      _
    // Predicated region
    $region18: #{birnn_gru_forward.5} parent=1 // pred_check
      _
    $region19: #{birnn_gru_forward.5} parent=1 // pred_check_branch
      %122 = sbr.rel (0) target = $region21
    $region20: #{birnn_gru_forward.5} parent=1 // pred_region
      %123 = dma.done [#allocation3], 256
    $region21: #{birnn_gru_forward.5} parent=1 // pred_fallthru
      _
    %124 = vsyncpa [#allocation3], 1

// kernel: birnn_gru_forward.3
$region0: #{birnn_gru_forward.3}
  #allocation0 [shape = 'u32[]', space=smem, size = 0x4, offset = 0x4, fixed_abs, tag = 'smem constant byte address 0x4 - core index']
  #allocation1 [shape = 'u32[144,128]{1,0:T(1,128)}', space=vmem, size = 0x12000, scoped, tag = 'internal scratch']
  #allocation2 [shape = 'f32[2,64]{1,0:T(2,128)}', space=vmem, size = 0x400, scoped, tag = 'scratch operand']
  %s0 = inlined_call_operand.vmem [shape: bf16[8,2,16], index: 0, kind: input, shape index: {}, may-alias: {0,1}]
  %s1 = inlined_call_operand.vmem [shape: bf16[8,2,16], index: 1, kind: input, shape index: {}, may-alias: {0,1}]
  %s2 = inlined_call_operand.hbm [shape: bf16[16,192], index: 2, kind: input, shape index: {}]
  %s3 = inlined_call_operand.hbm [shape: bf16[16,192], index: 3, kind: input, shape index: {}]
  %s4 = inlined_call_operand.hbm [shape: f32[1,192], index: 4, kind: input, shape index: {}]
  %s5 = inlined_call_operand.hbm [shape: bf16[64,192], index: 5, kind: input, shape index: {}]
  %s6 = inlined_call_operand.hbm [shape: f32[1,192], index: 6, kind: input, shape index: {}]
  %s7 = inlined_call_operand.vmem [shape: bf16[8,2,32], index: 7, kind: output, shape index: {0}]
  %s8 = inlined_call_operand.vmem [shape: bf16[8,2,32], index: 8, kind: output, shape index: {1}]
  %9 = xla_tuple %s7, %s8
  %s10 = sld [smem:[#allocation0]]
  $region70: #{birnn_gru_forward.3} parent=0
    _
  %s12 = ssub.s32 1, %s10
  %s13 = scalar_select 0, %s12, %s10
  $region1: #{birnn_gru_forward.3} parent=0
    #allocation3 [shape = 'u8[8192]{0}', space=vmem, size = 0x2000, scoped, tag = 'input window, operand 2, single buffered']
    #allocation4 [shape = 's32[1]{0}', space=sflag, size = 0x4, scoped, tag = 'scoped memory for birnn_gru_forward.3']
    #allocation5 [shape = 'u8[8192]{0}', space=vmem, size = 0x2000, scoped, tag = 'input window, operand 3, single buffered']
    #allocation6 [shape = 's32[1]{0}', space=sflag, size = 0x4, scoped, tag = 'scoped memory for birnn_gru_forward.3']
    #allocation7 [shape = 'u8[1024]{0}', space=vmem, size = 0x400, scoped, tag = 'input window, operand 4, single buffered']
    #allocation8 [shape = 'u8[32768]{0}', space=vmem, size = 0x8000, scoped, tag = 'input window, operand 5, single buffered']
    #allocation9 [shape = 's32[1]{0}', space=sflag, size = 0x4, scoped, tag = 'scoped memory for birnn_gru_forward.3']
    #allocation10 [shape = 'u8[1024]{0}', space=vmem, size = 0x400, scoped, tag = 'input window, operand 6, single buffered']
    %14 = vsyncpa [#allocation4], 0
    %15 = vsyncpa [#allocation6], 0
    %16 = vsyncpa [#allocation9], 0
    // Predicated region
    $region2: #{birnn_gru_forward.3} parent=1 // pred_check
      _
    $region3: #{birnn_gru_forward.3} parent=1 // pred_check_branch
      %18 = sbr.rel (0) target = $region5
    $region4: #{birnn_gru_forward.3} parent=1 // pred_region
      _
    $region5: #{birnn_gru_forward.3} parent=1 // pred_fallthru
      _
    // Predicated region
    $region6: #{birnn_gru_forward.3} parent=1 // pred_check
      _
    $region7: #{birnn_gru_forward.3} parent=1 // pred_check_branch
      %20 = sbr.rel (0) target = $region9
    $region8: #{birnn_gru_forward.3} parent=1 // pred_region
      %s21 = ssub.s32 0, 0
      %s22 = smul.u32 8, %s21
      %p23 = scmp.lt.s32.totalorder %s22, 7
      %s24 = scalar_select %p23, %s22, 7
      %s25 = scalar_lea.vmem %s1, %s24
      %s26 = ssub.s32 0, 0
      %s27 = smul.u32 8, %s26
    $region9: #{birnn_gru_forward.3} parent=1 // pred_fallthru
      _
    // Predicated region
    $region10: #{birnn_gru_forward.3} parent=1 // pred_check
      _
    $region11: #{birnn_gru_forward.3} parent=1 // pred_check_branch
      %29 = sbr.rel (0) target = $region13
    $region12: #{birnn_gru_forward.3} parent=1 // pred_region
      %s31 = ssub.s32 256, 256
      %32 = vsyncadd [#allocation4], %s31
      %s33 = sshll.u32 [#allocation3], 4
      %s34 = int_to_ptr.vmem [resolvable:$true] %s33
      %39 = dma.hbm_to_vmem [thread:$0]  %s2, 256, %s34, [#allocation4], 128, 128, 8
    $region13: #{birnn_gru_forward.3} parent=1 // pred_fallthru
      _
    // Predicated region
    $region14: #{birnn_gru_forward.3} parent=1 // pred_check
      _
    $region15: #{birnn_gru_forward.3} parent=1 // pred_check_branch
      %41 = sbr.rel (0) target = $region17
    $region16: #{birnn_gru_forward.3} parent=1 // pred_region
      %s43 = ssub.s32 256, 256
      %44 = vsyncadd [#allocation6], %s43
      %s45 = sshll.u32 [#allocation5], 4
      %s46 = int_to_ptr.vmem [resolvable:$true] %s45
      %51 = dma.hbm_to_vmem [thread:$0]  %s3, 256, %s46, [#allocation6], 128, 128, 8
    $region17: #{birnn_gru_forward.3} parent=1 // pred_fallthru
      _
    // Predicated region
    $region18: #{birnn_gru_forward.3} parent=1 // pred_check
      _
    $region19: #{birnn_gru_forward.3} parent=1 // pred_check_branch
      %53 = sbr.rel (0) target = $region21
    $region20: #{birnn_gru_forward.3} parent=1 // pred_region
      %s55 = ssub.s32 32, 32
      %56 = vsyncadd [#allocation6], %s55
      %s58 = sshll.u32 [#allocation7], 4
      %s59 = int_to_ptr.vmem [resolvable:$true] %s58
      %61 = dma.hbm_to_vmem [thread:$0]  %s4, 32, %s59, [#allocation6]
    $region21: #{birnn_gru_forward.3} parent=1 // pred_fallthru
      _
    // Predicated region
    $region22: #{birnn_gru_forward.3} parent=1 // pred_check
      _
    $region23: #{birnn_gru_forward.3} parent=1 // pred_check_branch
      %63 = sbr.rel (0) target = $region25
    $region24: #{birnn_gru_forward.3} parent=1 // pred_region
      %s65 = ssub.s32 1024, 1024
      %66 = vsyncadd [#allocation9], %s65
      %s67 = sshll.u32 [#allocation8], 4
      %s68 = int_to_ptr.vmem [resolvable:$true] %s67
      %73 = dma.hbm_to_vmem [thread:$0]  %s5, 1024, %s68, [#allocation9], 128, 128, 8
    $region25: #{birnn_gru_forward.3} parent=1 // pred_fallthru
      _
    // Predicated region
    $region26: #{birnn_gru_forward.3} parent=1 // pred_check
      _
    $region27: #{birnn_gru_forward.3} parent=1 // pred_check_branch
      %75 = sbr.rel (0) target = $region29
    $region28: #{birnn_gru_forward.3} parent=1 // pred_region
      %s77 = ssub.s32 32, 32
      %78 = vsyncadd [#allocation9], %s77
      %s80 = sshll.u32 [#allocation10], 4
      %s81 = int_to_ptr.vmem [resolvable:$true] %s80
      %83 = dma.hbm_to_vmem [thread:$0]  %s6, 32, %s81, [#allocation9]
    $region29: #{birnn_gru_forward.3} parent=1 // pred_fallthru
      _
    // Predicated region
    $region30: #{birnn_gru_forward.3} parent=1 // pred_check
      _
    $region31: #{birnn_gru_forward.3} parent=1 // pred_check_branch
      %85 = sbr.rel (0) target = $region33
    $region32: #{birnn_gru_forward.3} parent=1 // pred_region
      %86 = dma.done [#allocation4], 256
    $region33: #{birnn_gru_forward.3} parent=1 // pred_fallthru
      _
    // Predicated region
    $region34: #{birnn_gru_forward.3} parent=1 // pred_check
      _
    $region35: #{birnn_gru_forward.3} parent=1 // pred_check_branch
      %88 = sbr.rel (0) target = $region37
    $region36: #{birnn_gru_forward.3} parent=1 // pred_region
      %89 = dma.done [#allocation6], 256
    $region37: #{birnn_gru_forward.3} parent=1 // pred_fallthru
      _
    // Predicated region
    $region38: #{birnn_gru_forward.3} parent=1 // pred_check
      _
    $region39: #{birnn_gru_forward.3} parent=1 // pred_check_branch
      %91 = sbr.rel (0) target = $region41
    $region40: #{birnn_gru_forward.3} parent=1 // pred_region
      %92 = dma.done [#allocation6], 32
    $region41: #{birnn_gru_forward.3} parent=1 // pred_fallthru
      _
    // Predicated region
    $region42: #{birnn_gru_forward.3} parent=1 // pred_check
      _
    $region43: #{birnn_gru_forward.3} parent=1 // pred_check_branch
      %94 = sbr.rel (0) target = $region45
    $region44: #{birnn_gru_forward.3} parent=1 // pred_region
      %95 = dma.done [#allocation9], 1024
    $region45: #{birnn_gru_forward.3} parent=1 // pred_fallthru
      _
    // Predicated region
    $region46: #{birnn_gru_forward.3} parent=1 // pred_check
      _
    $region47: #{birnn_gru_forward.3} parent=1 // pred_check_branch
      %97 = sbr.rel (0) target = $region49
    $region48: #{birnn_gru_forward.3} parent=1 // pred_region
      %98 = dma.done [#allocation9], 32
    $region49: #{birnn_gru_forward.3} parent=1 // pred_fallthru
      _
    %s99 = ssub.s32 0, 0
    %s100 = smul.u32 8, %s99
    %p101 = scmp.lt.s32.totalorder %s100, 7
    %s102 = scalar_select %p101, %s100, 7
    %s103 = scalar_lea.vmem %s1, %s102
    %s104 = ssub.s32 0, 0
    %s105 = smul.u32 8, %s104
    %p106 = scmp.lt.s32.totalorder %s105, 7
    %s107 = scalar_select %p106, %s105, 7
    %s108 = scalar_lea.vmem %s8, %s107
    %s109 = ssub.s32 0, 0
    %s110 = smul.u32 8, %s109
    %p111 = scmp.lt.s32.totalorder %s110, 7
    %s112 = scalar_select %p111, %s110, 7
    %s113 = scalar_lea.vmem %s1, %s112
    %s114 = ssub.s32 0, 0
    %s115 = smul.u32 8, %s114
    %s116 = ssub.s32 0, 0
    %s117 = smul.u32 8, %s116
    %p118 = scmp.lt.s32.totalorder %s117, 7
    %s119 = scalar_select %p118, %s117, 7
    %s120 = scalar_lea.vmem %s8, %s119
    %s121 = ssub.s32 0, 0
    %s122 = smul.u32 8, %s121
    %p124 = scmp.eq.s32.totalorder 0, 0
    // Predicated region
    $region50: #{birnn_gru_forward.3} parent=1 // pred_check
      %p125 = pneg %p124
    $region51: #{birnn_gru_forward.3} parent=1 // pred_check_branch
      %127 = sbr.rel (%p125) target = $region53
    $region52: #{birnn_gru_forward.3} parent=1 // pred_region
      %vm128 = vcmask 517120
      %129 = vst.msk [vmem:[#allocation2] sm:$0x3] %vm128, 0.0
    $region53: #{birnn_gru_forward.3} parent=1 // pred_fallthru
      _
    %v130 = vld [vmem:[#allocation3] sm:$0xff]
    %v131 = vld [vmem:[#allocation3 + $0x8] sm:$0xff]
    %v132 = vld [vmem:[#allocation5] sm:$0xff]
    %v133 = vld [vmem:[#allocation5 + $0x8] sm:$0xff]
    %v134 = vld [vmem:[#allocation8] sm:$0xff]
    %v135 = vld [vmem:[#allocation8 + $0x8] sm:$0xff]
    %v136 = vld [vmem:[#allocation8 + $0x10] sm:$0xff]
    %v137 = vld [vmem:[#allocation8 + $0x18] sm:$0xff]
    %v138 = vld [vmem:[#allocation8 + $0x20] sm:$0xff]
    %v139 = vld [vmem:[#allocation8 + $0x28] sm:$0xff]
    %v140 = vld [vmem:[#allocation8 + $0x30] sm:$0xff]
    %v141 = vld [vmem:[#allocation8 + $0x38] sm:$0xff]
    %v142 = vld [vmem:[#allocation7] sm:$0x3]
    %v144 = vlaneseq
    %v145 = vshrl.u32 %v144, 7
    %v146 = vsub.s32 0, %v145
    %v147 = vrot.slane %v142, %v146
    %v148 = vlaneseq
    %v149 = vshrl.u32 %v148, 7
    %v150 = vsub.s32 1, %v149
    %v151 = vrot.slane %v142, %v150
    %v154 = vld [vmem:[#allocation10] sm:$0x3]
    %v156 = vlaneseq
    %v157 = vshrl.u32 %v156, 7
    %v158 = vsub.s32 0, %v157
    %v159 = vrot.slane %v154, %v158
    %v160 = vlaneseq
    %v161 = vshrl.u32 %v160, 7
    %v162 = vsub.s32 1, %v161
    %v163 = vrot.slane %v154, %v162
    %v166 = vld [vmem:[#allocation2] sm:$0x3]
    %v167 = vld [vmem:[%s0] sm:$0x1]
    %s168 = scalar_lea.vmem %s113, 7
    %v169 = vld [vmem:[%s168] sm:$0x1]
    %v172 = vunpack.c.l.b16 %v132
    %v173 = vunpack.c.h.b16 %v132
    %v174 = vunpack.c.l.b16 %v133
    %v175 = vunpack.c.h.b16 %v133
    %v176 = vpack.c.b16 %v174, %v172
    %v177 = vpack.c.b16 %v175, %v173
    %vm180 = vcmask 130048
    %v182 = vsel %vm180, %v169, 0
    %184 = vmatprep.subr.bf16.mxu0 %v177
    %185 = vmatpush1.bf16.msra.mxu0 %v176
    %186 = vmatprep.subr.bf16.mxu0 0
    %187 = vmatpush1.bf16.msra.mxu0 0
    %188 = vmatprep.subr.bf16.mxu0 0
    %189 = vmatpush1.bf16.msra.mxu0 0
    %190 = vmatprep.subr.bf16.mxu0 0
    %191 = vmatpush1.bf16.msra.mxu0 0
    %192 = vmatprep.subr.bf16.mxu0 0
    %193 = vmatpush1.bf16.msra.mxu0 0
    %194 = vmatprep.subr.bf16.mxu0 0
    %195 = vmatpush1.bf16.msra.mxu0 0
    %196 = vmatprep.subr.bf16.mxu0 0
    %197 = vmatpush1.bf16.msra.mxu0 0
    %198 = vmatprep.subr.bf16.mxu0 0
    %199 = vmatpush1.bf16.msra.mxu0 0
    %200 = vmatprep.subr.bf16.mxu0 0
    %201 = vmatpush1.bf16.msra.mxu0 0
    %202 = vmatprep.subr.bf16.mxu0 0
    %203 = vmatpush1.bf16.msra.mxu0 0
    %204 = vmatprep.subr.bf16.mxu0 0
    %205 = vmatpush1.bf16.msra.mxu0 0
    %206 = vmatprep.subr.bf16.mxu0 0
    %207 = vmatpush1.bf16.msra.mxu0 0
    %208 = vmatprep.subr.bf16.mxu0 0
    %209 = vmatpush1.bf16.msra.mxu0 0
    %210 = vmatprep.subr.bf16.mxu0 0
    %211 = vmatpush1.bf16.msra.mxu0 0
    %212 = vmatprep.subr.bf16.mxu0 0
    %213 = vmatpush1.bf16.msra.mxu0 0
    %214 = vmatprep.subr.bf16.mxu0 0
    %215 = vmatpush1.bf16.msra.mxu0 0
    %216 = vmatprep.mubr.bf16.mxu0 0
    %217 = vmatmul.mubr.bf16.gmra.mrb[0].mxu0 %v182
    %v218 = vpop.f32.mrb[0].mxu0
    %v219 = vadd.f32 0.0, %v218
    %v220 = vpop.f32.mrb[0].mxu0
    %v221 = vadd.f32 0.0, %v220
    %v222 = vpop.f32.mrb[0].mxu0
    %v223 = vpop.f32.mrb[0].mxu0
    %224 = vdwg.mxu0
    %v227 = vunpack.c.l.b16 %v130
    %v228 = vunpack.c.h.b16 %v130
    %v229 = vunpack.c.l.b16 %v131
    %v230 = vunpack.c.h.b16 %v131
    %v231 = vpack.c.b16 %v229, %v227
    %v232 = vpack.c.b16 %v230, %v228
    %v236 = vsel %vm180, %v167, 0
    %238 = vmatprep.subr.bf16.mxu0 %v232
    %239 = vmatpush1.bf16.msra.mxu0 %v231
    %240 = vmatprep.subr.bf16.mxu0 0
    %241 = vmatpush1.bf16.msra.mxu0 0
    %242 = vmatprep.subr.bf16.mxu0 0
    %243 = vmatpush1.bf16.msra.mxu0 0
    %244 = vmatprep.subr.bf16.mxu0 0
    %245 = vmatpush1.bf16.msra.mxu0 0
    %246 = vmatprep.subr.bf16.mxu0 0
    %247 = vmatpush1.bf16.msra.mxu0 0
    %248 = vmatprep.subr.bf16.mxu0 0
    %249 = vmatpush1.bf16.msra.mxu0 0
    %250 = vmatprep.subr.bf16.mxu0 0
    %251 = vmatpush1.bf16.msra.mxu0 0
    %252 = vmatprep.subr.bf16.mxu0 0
    %253 = vmatpush1.bf16.msra.mxu0 0
    %254 = vmatprep.subr.bf16.mxu0 0
    %255 = vmatpush1.bf16.msra.mxu0 0
    %256 = vmatprep.subr.bf16.mxu0 0
    %257 = vmatpush1.bf16.msra.mxu0 0
    %258 = vmatprep.subr.bf16.mxu0 0
    %259 = vmatpush1.bf16.msra.mxu0 0
    %260 = vmatprep.subr.bf16.mxu0 0
    %261 = vmatpush1.bf16.msra.mxu0 0
    %262 = vmatprep.subr.bf16.mxu0 0
    %263 = vmatpush1.bf16.msra.mxu0 0
    %264 = vmatprep.subr.bf16.mxu0 0
    %265 = vmatpush1.bf16.msra.mxu0 0
    %266 = vmatprep.subr.bf16.mxu0 0
    %267 = vmatpush1.bf16.msra.mxu0 0
    %268 = vmatprep.subr.bf16.mxu0 0
    %269 = vmatpush1.bf16.msra.mxu0 0
    %270 = vmatprep.mubr.bf16.mxu0 0
    %271 = vmatmul.mubr.bf16.gmra.mrb[0].mxu0 %v236
    %v272 = vpop.f32.mrb[0].mxu0
    %v273 = vadd.f32 %v219, %v272
    %v274 = vpop.f32.mrb[0].mxu0
    %v275 = vadd.f32 %v221, %v274
    %v276 = vpop.f32.mrb[0].mxu0
    %v277 = vpop.f32.mrb[0].mxu0
    %278 = vdwg.mxu0
    %v279 = vadd.f32 %v273, %v147
    %v280 = vadd.f32 %v275, %v151
    %v281 = vpack.c.bf16 %v166, %v166
    %v290 = vunpack.c.l.b16 %v134
    %v291 = vunpack.c.h.b16 %v134
    %v292 = vunpack.c.l.b16 %v135
    %v293 = vunpack.c.h.b16 %v135
    %v294 = vunpack.c.l.b16 %v136
    %v295 = vunpack.c.h.b16 %v136
    %v296 = vunpack.c.l.b16 %v137
    %v297 = vunpack.c.h.b16 %v137
    %v298 = vunpack.c.l.b16 %v138
    %v299 = vunpack.c.h.b16 %v138
    %v300 = vunpack.c.l.b16 %v139
    %v301 = vunpack.c.h.b16 %v139
    %v302 = vunpack.c.l.b16 %v140
    %v303 = vunpack.c.h.b16 %v140
    %v304 = vunpack.c.l.b16 %v141
    %v305 = vunpack.c.h.b16 %v141
    %v306 = vpack.c.b16 %v292, %v290
    %v307 = vpack.c.b16 %v293, %v291
    %v308 = vpack.c.b16 %v296, %v294
    %v309 = vpack.c.b16 %v297, %v295
    %v310 = vpack.c.b16 %v300, %v298
    %v311 = vpack.c.b16 %v301, %v299
    %v312 = vpack.c.b16 %v304, %v302
    %v313 = vpack.c.b16 %v305, %v303
    %vm322 = vcmask 523264
    %v324 = vsel %vm322, %v281, 0
    %326 = vmatprep.subr.bf16.mxu0 %v307
    %327 = vmatpush1.bf16.msra.mxu0 %v306
    %328 = vmatprep.subr.bf16.mxu0 %v309
    %329 = vmatpush1.bf16.msra.mxu0 %v308
    %330 = vmatprep.subr.bf16.mxu0 %v311
    %331 = vmatpush1.bf16.msra.mxu0 %v310
    %332 = vmatprep.subr.bf16.mxu0 %v313
    %333 = vmatpush1.bf16.msra.mxu0 %v312
    %334 = vmatprep.subr.bf16.mxu0 0
    %335 = vmatpush1.bf16.msra.mxu0 0
    %336 = vmatprep.subr.bf16.mxu0 0
    %337 = vmatpush1.bf16.msra.mxu0 0
    %338 = vmatprep.subr.bf16.mxu0 0
    %339 = vmatpush1.bf16.msra.mxu0 0
    %340 = vmatprep.subr.bf16.mxu0 0
    %341 = vmatpush1.bf16.msra.mxu0 0
    %342 = vmatprep.subr.bf16.mxu0 0
    %343 = vmatpush1.bf16.msra.mxu0 0
    %344 = vmatprep.subr.bf16.mxu0 0
    %345 = vmatpush1.bf16.msra.mxu0 0
    %346 = vmatprep.subr.bf16.mxu0 0
    %347 = vmatpush1.bf16.msra.mxu0 0
    %348 = vmatprep.subr.bf16.mxu0 0
    %349 = vmatpush1.bf16.msra.mxu0 0
    %350 = vmatprep.subr.bf16.mxu0 0
    %351 = vmatpush1.bf16.msra.mxu0 0
    %352 = vmatprep.subr.bf16.mxu0 0
    %353 = vmatpush1.bf16.msra.mxu0 0
    %354 = vmatprep.subr.bf16.mxu0 0
    %355 = vmatpush1.bf16.msra.mxu0 0
    %356 = vmatprep.subr.bf16.mxu0 0
    %357 = vmatpush1.bf16.msra.mxu0 0
    %358 = vmatprep.mubr.bf16.mxu0 0
    %359 = vmatmul.mubr.bf16.gmra.mrb[0].mxu0 %v324
    %v360 = vpop.f32.mrb[0].mxu0
    %v361 = vadd.f32 %v159, %v360
    %v362 = vpop.f32.mrb[0].mxu0
    %v363 = vadd.f32 %v163, %v362
    %v364 = vpop.f32.mrb[0].mxu0
    %v365 = vpop.f32.mrb[0].mxu0
    %366 = vdwg.mxu0
    %v367 = vadd.f32 %v279, %v361
    %v368 = vxor.u32 %v367, 2147483648
    %v369 = vmul.f32 %v368, 1.442695
    %v370 = vpow.pop %v369
    %v371 = vadd.f32 %v370, 1.0
    %v372 = vrcp.pop %v371
    %v373 = vmul.f32 1.0, %v372
    %v374 = vmul.f32 %v373, %v363
    %v375 = vadd.f32 %v280, %v374
    %v376 = vtanh.pop %v375
    %v377 = vsub.f32 1.0, %v373
    %379 = vrot.lane.b32.xlu0 %v376, 64
    %v380 = vpop.permute.xlu0 %379
    %v382 = vmul.f32 %v377, %v380
    %384 = vrot.lane.b32.xlu0 %v166, 64
    %v385 = vpop.permute.xlu0 %384
    %v387 = vmul.f32 %v373, %v385
    %v388 = vadd.f32 %v382, %v387
    %v389 = vpack.c.bf16 %v388, %v388
    %v392 = vunpack.c.l.s4 1966171168
    %v393 = vunpack.c.0.s8 %v392
    %v394 = vlaneseq
    %v395 = vshrl.u32 %v394, 7
    %v396 = vsub.s32 %v393, %v395
    %v397 = vrot.slane %v389, %v396
    %v399 = vunpack.c.l.s4 1966171168
    %v400 = vunpack.c.0.s8 %v399
    %v401 = vlaneseq
    %v402 = vshrl.u32 %v401, 7
    %v403 = vsub.s32 %v400, %v402
    %v404 = vrot.slane %v397, %v403
    %405 = vrot.lane.b32.xlu0 %v404, 64
    %v406 = vpop.permute.xlu0 %405
    %vm408 = vcmask 253952
    %409 = vst.msk [vmem:[%s7] sm:$0x1] %vm408, %v406
    %410 = vrot.lane.b32.xlu0 %v404, 32
    %v411 = vpop.permute.xlu0 %410
    %s413 = scalar_lea.vmem %s120, 7
    %414 = vst.msk [vmem:[%s413] sm:$0x1] %vm408, %v411
    %s415 = scalar_lea.vmem %s0, 1
    %v416 = vld [vmem:[%s415] sm:$0x1]
    %s417 = scalar_lea.vmem %s113, 6
    %v418 = vld [vmem:[%s417] sm:$0x1]
    %v420 = vsel %vm180, %v418, 0
    %422 = vmatprep.subr.bf16.mxu0 %v177
    %423 = vmatpush1.bf16.msra.mxu0 %v176
    %424 = vmatprep.subr.bf16.mxu0 0
    %425 = vmatpush1.bf16.msra.mxu0 0
    %426 = vmatprep.subr.bf16.mxu0 0
    %427 = vmatpush1.bf16.msra.mxu0 0
    %428 = vmatprep.subr.bf16.mxu0 0
    %429 = vmatpush1.bf16.msra.mxu0 0
    %430 = vmatprep.subr.bf16.mxu0 0
    %431 = vmatpush1.bf16.msra.mxu0 0
    %432 = vmatprep.subr.bf16.mxu0 0
    %433 = vmatpush1.bf16.msra.mxu0 0
    %434 = vmatprep.subr.bf16.mxu0 0
    %435 = vmatpush1.bf16.msra.mxu0 0
    %436 = vmatprep.subr.bf16.mxu0 0
    %437 = vmatpush1.bf16.msra.mxu0 0
    %438 = vmatprep.subr.bf16.mxu0 0
    %439 = vmatpush1.bf16.msra.mxu0 0
    %440 = vmatprep.subr.bf16.mxu0 0
    %441 = vmatpush1.bf16.msra.mxu0 0
    %442 = vmatprep.subr.bf16.mxu0 0
    %443 = vmatpush1.bf16.msra.mxu0 0
    %444 = vmatprep.subr.bf16.mxu0 0
    %445 = vmatpush1.bf16.msra.mxu0 0
    %446 = vmatprep.subr.bf16.mxu0 0
    %447 = vmatpush1.bf16.msra.mxu0 0
    %448 = vmatprep.subr.bf16.mxu0 0
    %449 = vmatpush1.bf16.msra.mxu0 0
    %450 = vmatprep.subr.bf16.mxu0 0
    %451 = vmatpush1.bf16.msra.mxu0 0
    %452 = vmatprep.subr.bf16.mxu0 0
    %453 = vmatpush1.bf16.msra.mxu0 0
    %454 = vmatprep.mubr.bf16.mxu0 0
    %455 = vmatmul.mubr.bf16.gmra.mrb[0].mxu0 %v420
    %v456 = vpop.f32.mrb[0].mxu0
    %v457 = vadd.f32 0.0, %v456
    %v458 = vpop.f32.mrb[0].mxu0
    %v459 = vadd.f32 0.0, %v458
    %v460 = vpop.f32.mrb[0].mxu0
    %v461 = vpop.f32.mrb[0].mxu0
    %462 = vdwg.mxu0
    %v464 = vsel %vm180, %v416, 0
    %466 = vmatprep.subr.bf16.mxu0 %v232
    %467 = vmatpush1.bf16.msra.mxu0 %v231
    %468 = vmatprep.subr.bf16.mxu0 0
    %469 = vmatpush1.bf16.msra.mxu0 0
    %470 = vmatprep.subr.bf16.mxu0 0
    %471 = vmatpush1.bf16.msra.mxu0 0
    %472 = vmatprep.subr.bf16.mxu0 0
    %473 = vmatpush1.bf16.msra.mxu0 0
    %474 = vmatprep.subr.bf16.mxu0 0
    %475 = vmatpush1.bf16.msra.mxu0 0
    %476 = vmatprep.subr.bf16.mxu0 0
    %477 = vmatpush1.bf16.msra.mxu0 0
    %478 = vmatprep.subr.bf16.mxu0 0
    %479 = vmatpush1.bf16.msra.mxu0 0
    %480 = vmatprep.subr.bf16.mxu0 0
    %481 = vmatpush1.bf16.msra.mxu0 0
    %482 = vmatprep.subr.bf16.mxu0 0
    %483 = vmatpush1.bf16.msra.mxu0 0
    %484 = vmatprep.subr.bf16.mxu0 0
    %485 = vmatpush1.bf16.msra.mxu0 0
    %486 = vmatprep.subr.bf16.mxu0 0
    %487 = vmatpush1.bf16.msra.mxu0 0
    %488 = vmatprep.subr.bf16.mxu0 0
    %489 = vmatpush1.bf16.msra.mxu0 0
    %490 = vmatprep.subr.bf16.mxu0 0
    %491 = vmatpush1.bf16.msra.mxu0 0
    %492 = vmatprep.subr.bf16.mxu0 0
    %493 = vmatpush1.bf16.msra.mxu0 0
    %494 = vmatprep.subr.bf16.mxu0 0
    %495 = vmatpush1.bf16.msra.mxu0 0
    %496 = vmatprep.subr.bf16.mxu0 0
    %497 = vmatpush1.bf16.msra.mxu0 0
    %498 = vmatprep.mubr.bf16.mxu0 0
    %499 = vmatmul.mubr.bf16.gmra.mrb[0].mxu0 %v464
    %v500 = vpop.f32.mrb[0].mxu0
    %v501 = vadd.f32 %v457, %v500
    %v502 = vpop.f32.mrb[0].mxu0
    %v503 = vadd.f32 %v459, %v502
    %v504 = vpop.f32.mrb[0].mxu0
    %v505 = vpop.f32.mrb[0].mxu0
    %506 = vdwg.mxu0
    %v507 = vadd.f32 %v501, %v147
    %v508 = vadd.f32 %v503, %v151
    %509 = vrot.lane.b32.xlu0 %v389, 64
    %v510 = vpop.permute.xlu0 %509
    %v512 = vsel %vm322, %v510, 0
    %514 = vmatprep.subr.bf16.mxu0 %v307
    %515 = vmatpush1.bf16.msra.mxu0 %v306
    %516 = vmatprep.subr.bf16.mxu0 %v309
    %517 = vmatpush1.bf16.msra.mxu0 %v308
    %518 = vmatprep.subr.bf16.mxu0 %v311
    %519 = vmatpush1.bf16.msra.mxu0 %v310
    %520 = vmatprep.subr.bf16.mxu0 %v313
    %521 = vmatpush1.bf16.msra.mxu0 %v312
    %522 = vmatprep.subr.bf16.mxu0 0
    %523 = vmatpush1.bf16.msra.mxu0 0
    %524 = vmatprep.subr.bf16.mxu0 0
    %525 = vmatpush1.bf16.msra.mxu0 0
    %526 = vmatprep.subr.bf16.mxu0 0
    %527 = vmatpush1.bf16.msra.mxu0 0
    %528 = vmatprep.subr.bf16.mxu0 0
    %529 = vmatpush1.bf16.msra.mxu0 0
    %530 = vmatprep.subr.bf16.mxu0 0
    %531 = vmatpush1.bf16.msra.mxu0 0
    %532 = vmatprep.subr.bf16.mxu0 0
    %533 = vmatpush1.bf16.msra.mxu0 0
    %534 = vmatprep.subr.bf16.mxu0 0
    %535 = vmatpush1.bf16.msra.mxu0 0
    %536 = vmatprep.subr.bf16.mxu0 0
    %537 = vmatpush1.bf16.msra.mxu0 0
    %538 = vmatprep.subr.bf16.mxu0 0
    %539 = vmatpush1.bf16.msra.mxu0 0
    %540 = vmatprep.subr.bf16.mxu0 0
    %541 = vmatpush1.bf16.msra.mxu0 0
    %542 = vmatprep.subr.bf16.mxu0 0
    %543 = vmatpush1.bf16.msra.mxu0 0
    %544 = vmatprep.subr.bf16.mxu0 0
    %545 = vmatpush1.bf16.msra.mxu0 0
    %546 = vmatprep.mubr.bf16.mxu0 0
    %547 = vmatmul.mubr.bf16.gmra.mrb[0].mxu0 %v512
    %v548 = vpop.f32.mrb[0].mxu0
    %v549 = vadd.f32 %v159, %v548
    %v550 = vpop.f32.mrb[0].mxu0
    %v551 = vadd.f32 %v163, %v550
    %v552 = vpop.f32.mrb[0].mxu0
    %v553 = vpop.f32.mrb[0].mxu0
    %554 = vdwg.mxu0
    %v555 = vadd.f32 %v507, %v549
    %v556 = vxor.u32 %v555, 2147483648
    %v557 = vmul.f32 %v556, 1.442695
    %v558 = vpow.pop %v557
    %v559 = vadd.f32 %v558, 1.0
    %v560 = vrcp.pop %v559
    %v561 = vmul.f32 1.0, %v560
    %v562 = vmul.f32 %v561, %v551
    %v563 = vadd.f32 %v508, %v562
    %v564 = vtanh.pop %v563
    %v565 = vsub.f32 1.0, %v561
    %567 = vrot.lane.b32.xlu0 %v564, 64
    %v568 = vpop.permute.xlu0 %567
    %v570 = vmul.f32 %v565, %v568
    %v571 = vmul.f32 %v561, %v388
    %v572 = vadd.f32 %v570, %v571
    %v573 = vpack.c.bf16 %v572, %v572
    %v576 = vunpack.c.l.s4 1966171168
    %v577 = vunpack.c.0.s8 %v576
    %v578 = vlaneseq
    %v579 = vshrl.u32 %v578, 7
    %v580 = vsub.s32 %v577, %v579
    %v581 = vrot.slane %v573, %v580
    %v583 = vunpack.c.l.s4 1966171168
    %v584 = vunpack.c.0.s8 %v583
    %v585 = vlaneseq
    %v586 = vshrl.u32 %v585, 7
    %v587 = vsub.s32 %v584, %v586
    %v588 = vrot.slane %v581, %v587
    %589 = vrot.lane.b32.xlu0 %v588, 64
    %v590 = vpop.permute.xlu0 %589
    %s592 = scalar_lea.vmem %s7, 1
    %593 = vst.msk [vmem:[%s592] sm:$0x1] %vm408, %v590
    %594 = vrot.lane.b32.xlu0 %v588, 32
    %v595 = vpop.permute.xlu0 %594
    %s597 = scalar_lea.vmem %s120, 6
    %598 = vst.msk [vmem:[%s597] sm:$0x1] %vm408, %v595
    %s599 = scalar_lea.vmem %s0, 2
    %v600 = vld [vmem:[%s599] sm:$0x1]
    %s601 = scalar_lea.vmem %s113, 5
    %v602 = vld [vmem:[%s601] sm:$0x1]
    %v604 = vsel %vm180, %v602, 0
    %606 = vmatprep.subr.bf16.mxu0 %v177
    %607 = vmatpush1.bf16.msra.mxu0 %v176
    %608 = vmatprep.subr.bf16.mxu0 0
    %609 = vmatpush1.bf16.msra.mxu0 0
    %610 = vmatprep.subr.bf16.mxu0 0
    %611 = vmatpush1.bf16.msra.mxu0 0
    %612 = vmatprep.subr.bf16.mxu0 0
    %613 = vmatpush1.bf16.msra.mxu0 0
    %614 = vmatprep.subr.bf16.mxu0 0
    %615 = vmatpush1.bf16.msra.mxu0 0
    %616 = vmatprep.subr.bf16.mxu0 0
    %617 = vmatpush1.bf16.msra.mxu0 0
    %618 = vmatprep.subr.bf16.mxu0 0
    %619 = vmatpush1.bf16.msra.mxu0 0
    %620 = vmatprep.subr.bf16.mxu0 0
    %621 = vmatpush1.bf16.msra.mxu0 0
    %622 = vmatprep.subr.bf16.mxu0 0
    %623 = vmatpush1.bf16.msra.mxu0 0
    %624 = vmatprep.subr.bf16.mxu0 0
    %625 = vmatpush1.bf16.msra.mxu0 0
    %626 = vmatprep.subr.bf16.mxu0 0
    %627 = vmatpush1.bf16.msra.mxu0 0
    %628 = vmatprep.subr.bf16.mxu0 0
    %629 = vmatpush1.bf16.msra.mxu0 0
    %630 = vmatprep.subr.bf16.mxu0 0
    %631 = vmatpush1.bf16.msra.mxu0 0
    %632 = vmatprep.subr.bf16.mxu0 0
    %633 = vmatpush1.bf16.msra.mxu0 0
    %634 = vmatprep.subr.bf16.mxu0 0
    %635 = vmatpush1.bf16.msra.mxu0 0
    %636 = vmatprep.subr.bf16.mxu0 0
    %637 = vmatpush1.bf16.msra.mxu0 0
    %638 = vmatprep.mubr.bf16.mxu0 0
    %639 = vmatmul.mubr.bf16.gmra.mrb[0].mxu0 %v604
    %v640 = vpop.f32.mrb[0].mxu0
    %v641 = vadd.f32 0.0, %v640
    %v642 = vpop.f32.mrb[0].mxu0
    %v643 = vadd.f32 0.0, %v642
    %v644 = vpop.f32.mrb[0].mxu0
    %v645 = vpop.f32.mrb[0].mxu0
    %646 = vdwg.mxu0
    %v648 = vsel %vm180, %v600, 0
    %650 = vmatprep.subr.bf16.mxu0 %v232
    %651 = vmatpush1.bf16.msra.mxu0 %v231
    %652 = vmatprep.subr.bf16.mxu0 0
    %653 = vmatpush1.bf16.msra.mxu0 0
    %654 = vmatprep.subr.bf16.mxu0 0
    %655 = vmatpush1.bf16.msra.mxu0 0
    %656 = vmatprep.subr.bf16.mxu0 0
    %657 = vmatpush1.bf16.msra.mxu0 0
    %658 = vmatprep.subr.bf16.mxu0 0
    %659 = vmatpush1.bf16.msra.mxu0 0
    %660 = vmatprep.subr.bf16.mxu0 0
    %661 = vmatpush1.bf16.msra.mxu0 0
    %662 = vmatprep.subr.bf16.mxu0 0
    %663 = vmatpush1.bf16.msra.mxu0 0
    %664 = vmatprep.subr.bf16.mxu0 0
    %665 = vmatpush1.bf16.msra.mxu0 0
    %666 = vmatprep.subr.bf16.mxu0 0
    %667 = vmatpush1.bf16.msra.mxu0 0
    %668 = vmatprep.subr.bf16.mxu0 0
    %669 = vmatpush1.bf16.msra.mxu0 0
    %670 = vmatprep.subr.bf16.mxu0 0
    %671 = vmatpush1.bf16.msra.mxu0 0
    %672 = vmatprep.subr.bf16.mxu0 0
    %673 = vmatpush1.bf16.msra.mxu0 0
    %674 = vmatprep.subr.bf16.mxu0 0
    %675 = vmatpush1.bf16.msra.mxu0 0
    %676 = vmatprep.subr.bf16.mxu0 0
    %677 = vmatpush1.bf16.msra.mxu0 0
    %678 = vmatprep.subr.bf16.mxu0 0
    %679 = vmatpush1.bf16.msra.mxu0 0
    %680 = vmatprep.subr.bf16.mxu0 0
    %681 = vmatpush1.bf16.msra.mxu0 0
    %682 = vmatprep.mubr.bf16.mxu0 0
    %683 = vmatmul.mubr.bf16.gmra.mrb[0].mxu0 %v648
    %v684 = vpop.f32.mrb[0].mxu0
    %v685 = vadd.f32 %v641, %v684
    %v686 = vpop.f32.mrb[0].mxu0
    %v687 = vadd.f32 %v643, %v686
    %v688 = vpop.f32.mrb[0].mxu0
    %v689 = vpop.f32.mrb[0].mxu0
    %690 = vdwg.mxu0
    %v691 = vadd.f32 %v685, %v147
    %v692 = vadd.f32 %v687, %v151
    %693 = vrot.lane.b32.xlu0 %v573, 64
    %v694 = vpop.permute.xlu0 %693
    %v696 = vsel %vm322, %v694, 0
    %698 = vmatprep.subr.bf16.mxu0 %v307
    %699 = vmatpush1.bf16.msra.mxu0 %v306
    %700 = vmatprep.subr.bf16.mxu0 %v309
    %701 = vmatpush1.bf16.msra.mxu0 %v308
    %702 = vmatprep.subr.bf16.mxu0 %v311
    %703 = vmatpush1.bf16.msra.mxu0 %v310
    %704 = vmatprep.subr.bf16.mxu0 %v313
    %705 = vmatpush1.bf16.msra.mxu0 %v312
    %706 = vmatprep.subr.bf16.mxu0 0
    %707 = vmatpush1.bf16.msra.mxu0 0
    %708 = vmatprep.subr.bf16.mxu0 0
    %709 = vmatpush1.bf16.msra.mxu0 0
    %710 = vmatprep.subr.bf16.mxu0 0
    %711 = vmatpush1.bf16.msra.mxu0 0
    %712 = vmatprep.subr.bf16.mxu0 0
    %713 = vmatpush1.bf16.msra.mxu0 0
    %714 = vmatprep.subr.bf16.mxu0 0
    %715 = vmatpush1.bf16.msra.mxu0 0
    %716 = vmatprep.subr.bf16.mxu0 0
    %717 = vmatpush1.bf16.msra.mxu0 0
    %718 = vmatprep.subr.bf16.mxu0 0
    %719 = vmatpush1.bf16.msra.mxu0 0
    %720 = vmatprep.subr.bf16.mxu0 0
    %721 = vmatpush1.bf16.msra.mxu0 0
    %722 = vmatprep.subr.bf16.mxu0 0
    %723 = vmatpush1.bf16.msra.mxu0 0
    %724 = vmatprep.subr.bf16.mxu0 0
    %725 = vmatpush1.bf16.msra.mxu0 0
    %726 = vmatprep.subr.bf16.mxu0 0
    %727 = vmatpush1.bf16.msra.mxu0 0
    %728 = vmatprep.subr.bf16.mxu0 0
    %729 = vmatpush1.bf16.msra.mxu0 0
    %730 = vmatprep.mubr.bf16.mxu0 0
    %731 = vmatmul.mubr.bf16.gmra.mrb[0].mxu0 %v696
    %v732 = vpop.f32.mrb[0].mxu0
    %v733 = vadd.f32 %v159, %v732
    %v734 = vpop.f32.mrb[0].mxu0
    %v735 = vadd.f32 %v163, %v734
    %v736 = vpop.f32.mrb[0].mxu0
    %v737 = vpop.f32.mrb[0].mxu0
    %738 = vdwg.mxu0
    %v739 = vadd.f32 %v691, %v733
    %v740 = vxor.u32 %v739, 2147483648
    %v741 = vmul.f32 %v740, 1.442695
    %v742 = vpow.pop %v741
    %v743 = vadd.f32 %v742, 1.0
    %v744 = vrcp.pop %v743
    %v745 = vmul.f32 1.0, %v744
    %v746 = vmul.f32 %v745, %v735
    %v747 = vadd.f32 %v692, %v746
    %v748 = vtanh.pop %v747
    %v749 = vsub.f32 1.0, %v745
    %751 = vrot.lane.b32.xlu0 %v748, 64
    %v752 = vpop.permute.xlu0 %751
    %v754 = vmul.f32 %v749, %v752
    %v755 = vmul.f32 %v745, %v572
    %v756 = vadd.f32 %v754, %v755
    %v757 = vpack.c.bf16 %v756, %v756
    %v760 = vunpack.c.l.s4 1966171168
    %v761 = vunpack.c.0.s8 %v760
    %v762 = vlaneseq
    %v763 = vshrl.u32 %v762, 7
    %v764 = vsub.s32 %v761, %v763
    %v765 = vrot.slane %v757, %v764
    %v767 = vunpack.c.l.s4 1966171168
    %v768 = vunpack.c.0.s8 %v767
    %v769 = vlaneseq
    %v770 = vshrl.u32 %v769, 7
    %v771 = vsub.s32 %v768, %v770
    %v772 = vrot.slane %v765, %v771
    %773 = vrot.lane.b32.xlu0 %v772, 64
    %v774 = vpop.permute.xlu0 %773
    %s776 = scalar_lea.vmem %s7, 2
    %777 = vst.msk [vmem:[%s776] sm:$0x1] %vm408, %v774
    %778 = vrot.lane.b32.xlu0 %v772, 32
    %v779 = vpop.permute.xlu0 %778
    %s781 = scalar_lea.vmem %s120, 5
    %782 = vst.msk [vmem:[%s781] sm:$0x1] %vm408, %v779
    %s783 = scalar_lea.vmem %s0, 3
    %v784 = vld [vmem:[%s783] sm:$0x1]
    %s785 = scalar_lea.vmem %s113, 4
    %v786 = vld [vmem:[%s785] sm:$0x1]
    %v788 = vsel %vm180, %v786, 0
    %790 = vmatprep.subr.bf16.mxu0 %v177
    %791 = vmatpush1.bf16.msra.mxu0 %v176
    %792 = vmatprep.subr.bf16.mxu0 0
    %793 = vmatpush1.bf16.msra.mxu0 0
    %794 = vmatprep.subr.bf16.mxu0 0
    %795 = vmatpush1.bf16.msra.mxu0 0
    %796 = vmatprep.subr.bf16.mxu0 0
    %797 = vmatpush1.bf16.msra.mxu0 0
    %798 = vmatprep.subr.bf16.mxu0 0
    %799 = vmatpush1.bf16.msra.mxu0 0
    %800 = vmatprep.subr.bf16.mxu0 0
    %801 = vmatpush1.bf16.msra.mxu0 0
    %802 = vmatprep.subr.bf16.mxu0 0
    %803 = vmatpush1.bf16.msra.mxu0 0
    %804 = vmatprep.subr.bf16.mxu0 0
    %805 = vmatpush1.bf16.msra.mxu0 0
    %806 = vmatprep.subr.bf16.mxu0 0
    %807 = vmatpush1.bf16.msra.mxu0 0
    %808 = vmatprep.subr.bf16.mxu0 0
    %809 = vmatpush1.bf16.msra.mxu0 0
    %810 = vmatprep.subr.bf16.mxu0 0
    %811 = vmatpush1.bf16.msra.mxu0 0
    %812 = vmatprep.subr.bf16.mxu0 0
    %813 = vmatpush1.bf16.msra.mxu0 0
    %814 = vmatprep.subr.bf16.mxu0 0
    %815 = vmatpush1.bf16.msra.mxu0 0
    %816 = vmatprep.subr.bf16.mxu0 0
    %817 = vmatpush1.bf16.msra.mxu0 0
    %818 = vmatprep.subr.bf16.mxu0 0
    %819 = vmatpush1.bf16.msra.mxu0 0
    %820 = vmatprep.subr.bf16.mxu0 0
    %821 = vmatpush1.bf16.msra.mxu0 0
    %822 = vmatprep.mubr.bf16.mxu0 0
    %823 = vmatmul.mubr.bf16.gmra.mrb[0].mxu0 %v788
    %v824 = vpop.f32.mrb[0].mxu0
    %v825 = vadd.f32 0.0, %v824
    %v826 = vpop.f32.mrb[0].mxu0
    %v827 = vadd.f32 0.0, %v826
    %v828 = vpop.f32.mrb[0].mxu0
    %v829 = vpop.f32.mrb[0].mxu0
    %830 = vdwg.mxu0
    %v832 = vsel %vm180, %v784, 0
    %834 = vmatprep.subr.bf16.mxu0 %v232
    %835 = vmatpush1.bf16.msra.mxu0 %v231
    %836 = vmatprep.subr.bf16.mxu0 0
    %837 = vmatpush1.bf16.msra.mxu0 0
    %838 = vmatprep.subr.bf16.mxu0 0
    %839 = vmatpush1.bf16.msra.mxu0 0
    %840 = vmatprep.subr.bf16.mxu0 0
    %841 = vmatpush1.bf16.msra.mxu0 0
    %842 = vmatprep.subr.bf16.mxu0 0
    %843 = vmatpush1.bf16.msra.mxu0 0
    %844 = vmatprep.subr.bf16.mxu0 0
    %845 = vmatpush1.bf16.msra.mxu0 0
    %846 = vmatprep.subr.bf16.mxu0 0
    %847 = vmatpush1.bf16.msra.mxu0 0
    %848 = vmatprep.subr.bf16.mxu0 0
    %849 = vmatpush1.bf16.msra.mxu0 0
    %850 = vmatprep.subr.bf16.mxu0 0
    %851 = vmatpush1.bf16.msra.mxu0 0
    %852 = vmatprep.subr.bf16.mxu0 0
    %853 = vmatpush1.bf16.msra.mxu0 0
    %854 = vmatprep.subr.bf16.mxu0 0
    %855 = vmatpush1.bf16.msra.mxu0 0
    %856 = vmatprep.subr.bf16.mxu0 0
    %857 = vmatpush1.bf16.msra.mxu0 0
    %858 = vmatprep.subr.bf16.mxu0 0
    %859 = vmatpush1.bf16.msra.mxu0 0
    %860 = vmatprep.subr.bf16.mxu0 0
    %861 = vmatpush1.bf16.msra.mxu0 0
    %862 = vmatprep.subr.bf16.mxu0 0
    %863 = vmatpush1.bf16.msra.mxu0 0
    %864 = vmatprep.subr.bf16.mxu0 0
    %865 = vmatpush1.bf16.msra.mxu0 0
    %866 = vmatprep.mubr.bf16.mxu0 0
    %867 = vmatmul.mubr.bf16.gmra.mrb[0].mxu0 %v832
    %v868 = vpop.f32.mrb[0].mxu0
    %v869 = vadd.f32 %v825, %v868
    %v870 = vpop.f32.mrb[0].mxu0
    %v871 = vadd.f32 %v827, %v870
    %v872 = vpop.f32.mrb[0].mxu0
    %v873 = vpop.f32.mrb[0].mxu0
    %874 = vdwg.mxu0
    %v875 = vadd.f32 %v869, %v147
    %v876 = vadd.f32 %v871, %v151
    %877 = vrot.lane.b32.xlu0 %v757, 64
    %v878 = vpop.permute.xlu0 %877
    %v880 = vsel %vm322, %v878, 0
    %882 = vmatprep.subr.bf16.mxu0 %v307
    %883 = vmatpush1.bf16.msra.mxu0 %v306
    %884 = vmatprep.subr.bf16.mxu0 %v309
    %885 = vmatpush1.bf16.msra.mxu0 %v308
    %886 = vmatprep.subr.bf16.mxu0 %v311
    %887 = vmatpush1.bf16.msra.mxu0 %v310
    %888 = vmatprep.subr.bf16.mxu0 %v313
    %889 = vmatpush1.bf16.msra.mxu0 %v312
    %890 = vmatprep.subr.bf16.mxu0 0
    %891 = vmatpush1.bf16.msra.mxu0 0
    %892 = vmatprep.subr.bf16.mxu0 0
    %893 = vmatpush1.bf16.msra.mxu0 0
    %894 = vmatprep.subr.bf16.mxu0 0
    %895 = vmatpush1.bf16.msra.mxu0 0
    %896 = vmatprep.subr.bf16.mxu0 0
    %897 = vmatpush1.bf16.msra.mxu0 0
    %898 = vmatprep.subr.bf16.mxu0 0
    %899 = vmatpush1.bf16.msra.mxu0 0
    %900 = vmatprep.subr.bf16.mxu0 0
    %901 = vmatpush1.bf16.msra.mxu0 0
    %902 = vmatprep.subr.bf16.mxu0 0
    %903 = vmatpush1.bf16.msra.mxu0 0
    %904 = vmatprep.subr.bf16.mxu0 0
    %905 = vmatpush1.bf16.msra.mxu0 0
    %906 = vmatprep.subr.bf16.mxu0 0
    %907 = vmatpush1.bf16.msra.mxu0 0
    %908 = vmatprep.subr.bf16.mxu0 0
    %909 = vmatpush1.bf16.msra.mxu0 0
    %910 = vmatprep.subr.bf16.mxu0 0
    %911 = vmatpush1.bf16.msra.mxu0 0
    %912 = vmatprep.subr.bf16.mxu0 0
    %913 = vmatpush1.bf16.msra.mxu0 0
    %914 = vmatprep.mubr.bf16.mxu0 0
    %915 = vmatmul.mubr.bf16.gmra.mrb[0].mxu0 %v880
    %v916 = vpop.f32.mrb[0].mxu0
    %v917 = vadd.f32 %v159, %v916
    %v918 = vpop.f32.mrb[0].mxu0
    %v919 = vadd.f32 %v163, %v918
    %v920 = vpop.f32.mrb[0].mxu0
    %v921 = vpop.f32.mrb[0].mxu0
    %922 = vdwg.mxu0
    %v923 = vadd.f32 %v875, %v917
    %v924 = vxor.u32 %v923, 2147483648
    %v925 = vmul.f32 %v924, 1.442695
    %v926 = vpow.pop %v925
    %v927 = vadd.f32 %v926, 1.0
    %v928 = vrcp.pop %v927
    %v929 = vmul.f32 1.0, %v928
    %v930 = vmul.f32 %v929, %v919
    %v931 = vadd.f32 %v876, %v930
    %v932 = vtanh.pop %v931
    %v933 = vsub.f32 1.0, %v929
    %935 = vrot.lane.b32.xlu0 %v932, 64
    %v936 = vpop.permute.xlu0 %935
    %v938 = vmul.f32 %v933, %v936
    %v939 = vmul.f32 %v929, %v756
    %v940 = vadd.f32 %v938, %v939
    %v941 = vpack.c.bf16 %v940, %v940
    %v944 = vunpack.c.l.s4 1966171168
    %v945 = vunpack.c.0.s8 %v944
    %v946 = vlaneseq
    %v947 = vshrl.u32 %v946, 7
    %v948 = vsub.s32 %v945, %v947
    %v949 = vrot.slane %v941, %v948
    %v951 = vunpack.c.l.s4 1966171168
    %v952 = vunpack.c.0.s8 %v951
    %v953 = vlaneseq
    %v954 = vshrl.u32 %v953, 7
    %v955 = vsub.s32 %v952, %v954
    %v956 = vrot.slane %v949, %v955
    %957 = vrot.lane.b32.xlu0 %v956, 64
    %v958 = vpop.permute.xlu0 %957
    %s960 = scalar_lea.vmem %s7, 3
    %961 = vst.msk [vmem:[%s960] sm:$0x1] %vm408, %v958
    %962 = vrot.lane.b32.xlu0 %v956, 32
    %v963 = vpop.permute.xlu0 %962
    %s965 = scalar_lea.vmem %s120, 4
    %966 = vst.msk [vmem:[%s965] sm:$0x1] %vm408, %v963
    %s967 = scalar_lea.vmem %s0, 4
    %v968 = vld [vmem:[%s967] sm:$0x1]
    %s969 = scalar_lea.vmem %s113, 3
    %v970 = vld [vmem:[%s969] sm:$0x1]
    %v972 = vsel %vm180, %v970, 0
    %974 = vmatprep.subr.bf16.mxu0 %v177
    %975 = vmatpush1.bf16.msra.mxu0 %v176
    %976 = vmatprep.subr.bf16.mxu0 0
    %977 = vmatpush1.bf16.msra.mxu0 0
    %978 = vmatprep.subr.bf16.mxu0 0
    %979 = vmatpush1.bf16.msra.mxu0 0
    %980 = vmatprep.subr.bf16.mxu0 0
    %981 = vmatpush1.bf16.msra.mxu0 0
    %982 = vmatprep.subr.bf16.mxu0 0
    %983 = vmatpush1.bf16.msra.mxu0 0
    %984 = vmatprep.subr.bf16.mxu0 0
    %985 = vmatpush1.bf16.msra.mxu0 0
    %986 = vmatprep.subr.bf16.mxu0 0
    %987 = vmatpush1.bf16.msra.mxu0 0
    %988 = vmatprep.subr.bf16.mxu0 0
    %989 = vmatpush1.bf16.msra.mxu0 0
    %990 = vmatprep.subr.bf16.mxu0 0
    %991 = vmatpush1.bf16.msra.mxu0 0
    %992 = vmatprep.subr.bf16.mxu0 0
    %993 = vmatpush1.bf16.msra.mxu0 0
    %994 = vmatprep.subr.bf16.mxu0 0
    %995 = vmatpush1.bf16.msra.mxu0 0
    %996 = vmatprep.subr.bf16.mxu0 0
    %997 = vmatpush1.bf16.msra.mxu0 0
    %998 = vmatprep.subr.bf16.mxu0 0
    %999 = vmatpush1.bf16.msra.mxu0 0
    %1000 = vmatprep.subr.bf16.mxu0 0
    %1001 = vmatpush1.bf16.msra.mxu0 0
    %1002 = vmatprep.subr.bf16.mxu0 0
    %1003 = vmatpush1.bf16.msra.mxu0 0
    %1004 = vmatprep.subr.bf16.mxu0 0
    %1005 = vmatpush1.bf16.msra.mxu0 0
    %1006 = vmatprep.mubr.bf16.mxu0 0
    %1007 = vmatmul.mubr.bf16.gmra.mrb[0].mxu0 %v972
    %v1008 = vpop.f32.mrb[0].mxu0
    %v1009 = vadd.f32 0.0, %v1008
    %v1010 = vpop.f32.mrb[0].mxu0
    %v1011 = vadd.f32 0.0, %v1010
    %v1012 = vpop.f32.mrb[0].mxu0
    %v1013 = vpop.f32.mrb[0].mxu0
    %1014 = vdwg.mxu0
    %v1016 = vsel %vm180, %v968, 0
    %1018 = vmatprep.subr.bf16.mxu0 %v232
    %1019 = vmatpush1.bf16.msra.mxu0 %v231
    %1020 = vmatprep.subr.bf16.mxu0 0
    %1021 = vmatpush1.bf16.msra.mxu0 0
    %1022 = vmatprep.subr.bf16.mxu0 0
    %1023 = vmatpush1.bf16.msra.mxu0 0
    %1024 = vmatprep.subr.bf16.mxu0 0
    %1025 = vmatpush1.bf16.msra.mxu0 0
    %1026 = vmatprep.subr.bf16.mxu0 0
    %1027 = vmatpush1.bf16.msra.mxu0 0
    %1028 = vmatprep.subr.bf16.mxu0 0
    %1029 = vmatpush1.bf16.msra.mxu0 0
    %1030 = vmatprep.subr.bf16.mxu0 0
    %1031 = vmatpush1.bf16.msra.mxu0 0
    %1032 = vmatprep.subr.bf16.mxu0 0
    %1033 = vmatpush1.bf16.msra.mxu0 0
    %1034 = vmatprep.subr.bf16.mxu0 0
    %1035 = vmatpush1.bf16.msra.mxu0 0
    %1036 = vmatprep.subr.bf16.mxu0 0
    %1037 = vmatpush1.bf16.msra.mxu0 0
    %1038 = vmatprep.subr.bf16.mxu0 0
    %1039 = vmatpush1.bf16.msra.mxu0 0
    %1040 = vmatprep.subr.bf16.mxu0 0
    %1041 = vmatpush1.bf16.msra.mxu0 0
    %1042 = vmatprep.subr.bf16.mxu0 0
    %1043 = vmatpush1.bf16.msra.mxu0 0
    %1044 = vmatprep.subr.bf16.mxu0 0
    %1045 = vmatpush1.bf16.msra.mxu0 0
    %1046 = vmatprep.subr.bf16.mxu0 0
    %1047 = vmatpush1.bf16.msra.mxu0 0
    %1048 = vmatprep.subr.bf16.mxu0 0
    %1049 = vmatpush1.bf16.msra.mxu0 0
    %1050 = vmatprep.mubr.bf16.mxu0 0
    %1051 = vmatmul.mubr.bf16.gmra.mrb[0].mxu0 %v1016
    %v1052 = vpop.f32.mrb[0].mxu0
    %v1053 = vadd.f32 %v1009, %v1052
    %v1054 = vpop.f32.mrb[0].mxu0
    %v1055 = vadd.f32 %v1011, %v1054
    %v1056 = vpop.f32.mrb[0].mxu0
    %v1057 = vpop.f32.mrb[0].mxu0
    %1058 = vdwg.mxu0
    %v1059 = vadd.f32 %v1053, %v147
    %v1060 = vadd.f32 %v1055, %v151
    %1061 = vrot.lane.b32.xlu0 %v941, 64
    %v1062 = vpop.permute.xlu0 %1061
    %v1064 = vsel %vm322, %v1062, 0
    %1066 = vmatprep.subr.bf16.mxu0 %v307
    %1067 = vmatpush1.bf16.msra.mxu0 %v306
    %1068 = vmatprep.subr.bf16.mxu0 %v309
    %1069 = vmatpush1.bf16.msra.mxu0 %v308
    %1070 = vmatprep.subr.bf16.mxu0 %v311
    %1071 = vmatpush1.bf16.msra.mxu0 %v310
    %1072 = vmatprep.subr.bf16.mxu0 %v313
    %1073 = vmatpush1.bf16.msra.mxu0 %v312
    %1074 = vmatprep.subr.bf16.mxu0 0
    %1075 = vmatpush1.bf16.msra.mxu0 0
    %1076 = vmatprep.subr.bf16.mxu0 0
    %1077 = vmatpush1.bf16.msra.mxu0 0
    %1078 = vmatprep.subr.bf16.mxu0 0
    %1079 = vmatpush1.bf16.msra.mxu0 0
    %1080 = vmatprep.subr.bf16.mxu0 0
    %1081 = vmatpush1.bf16.msra.mxu0 0
    %1082 = vmatprep.subr.bf16.mxu0 0
    %1083 = vmatpush1.bf16.msra.mxu0 0
    %1084 = vmatprep.subr.bf16.mxu0 0
    %1085 = vmatpush1.bf16.msra.mxu0 0
    %1086 = vmatprep.subr.bf16.mxu0 0
    %1087 = vmatpush1.bf16.msra.mxu0 0
    %1088 = vmatprep.subr.bf16.mxu0 0
    %1089 = vmatpush1.bf16.msra.mxu0 0
    %1090 = vmatprep.subr.bf16.mxu0 0
    %1091 = vmatpush1.bf16.msra.mxu0 0
    %1092 = vmatprep.subr.bf16.mxu0 0
    %1093 = vmatpush1.bf16.msra.mxu0 0
    %1094 = vmatprep.subr.bf16.mxu0 0
    %1095 = vmatpush1.bf16.msra.mxu0 0
    %1096 = vmatprep.subr.bf16.mxu0 0
    %1097 = vmatpush1.bf16.msra.mxu0 0
    %1098 = vmatprep.mubr.bf16.mxu0 0
    %1099 = vmatmul.mubr.bf16.gmra.mrb[0].mxu0 %v1064
    %v1100 = vpop.f32.mrb[0].mxu0
    %v1101 = vadd.f32 %v159, %v1100
    %v1102 = vpop.f32.mrb[0].mxu0
    %v1103 = vadd.f32 %v163, %v1102
    %v1104 = vpop.f32.mrb[0].mxu0
    %v1105 = vpop.f32.mrb[0].mxu0
    %1106 = vdwg.mxu0
    %v1107 = vadd.f32 %v1059, %v1101
    %v1108 = vxor.u32 %v1107, 2147483648
    %v1109 = vmul.f32 %v1108, 1.442695
    %v1110 = vpow.pop %v1109
    %v1111 = vadd.f32 %v1110, 1.0
    %v1112 = vrcp.pop %v1111
    %v1113 = vmul.f32 1.0, %v1112
    %v1114 = vmul.f32 %v1113, %v1103
    %v1115 = vadd.f32 %v1060, %v1114
    %v1116 = vtanh.pop %v1115
    %v1117 = vsub.f32 1.0, %v1113
    %1119 = vrot.lane.b32.xlu0 %v1116, 64
    %v1120 = vpop.permute.xlu0 %1119
    %v1122 = vmul.f32 %v1117, %v1120
    %v1123 = vmul.f32 %v1113, %v940
    %v1124 = vadd.f32 %v1122, %v1123
    %v1125 = vpack.c.bf16 %v1124, %v1124
    %v1128 = vunpack.c.l.s4 1966171168
    %v1129 = vunpack.c.0.s8 %v1128
    %v1130 = vlaneseq
    %v1131 = vshrl.u32 %v1130, 7
    %v1132 = vsub.s32 %v1129, %v1131
    %v1133 = vrot.slane %v1125, %v1132
    %v1135 = vunpack.c.l.s4 1966171168
    %v1136 = vunpack.c.0.s8 %v1135
    %v1137 = vlaneseq
    %v1138 = vshrl.u32 %v1137, 7
    %v1139 = vsub.s32 %v1136, %v1138
    %v1140 = vrot.slane %v1133, %v1139
    %1141 = vrot.lane.b32.xlu0 %v1140, 64
    %v1142 = vpop.permute.xlu0 %1141
    %s1144 = scalar_lea.vmem %s7, 4
    %1145 = vst.msk [vmem:[%s1144] sm:$0x1] %vm408, %v1142
    %1146 = vrot.lane.b32.xlu0 %v1140, 32
    %v1147 = vpop.permute.xlu0 %1146
    %s1149 = scalar_lea.vmem %s120, 3
    %1150 = vst.msk [vmem:[%s1149] sm:$0x1] %vm408, %v1147
    %s1151 = scalar_lea.vmem %s0, 5
    %v1152 = vld [vmem:[%s1151] sm:$0x1]
    %s1153 = scalar_lea.vmem %s113, 2
    %v1154 = vld [vmem:[%s1153] sm:$0x1]
    %v1156 = vsel %vm180, %v1154, 0
    %1158 = vmatprep.subr.bf16.mxu0 %v177
    %1159 = vmatpush1.bf16.msra.mxu0 %v176
    %1160 = vmatprep.subr.bf16.mxu0 0
    %1161 = vmatpush1.bf16.msra.mxu0 0
    %1162 = vmatprep.subr.bf16.mxu0 0
    %1163 = vmatpush1.bf16.msra.mxu0 0
    %1164 = vmatprep.subr.bf16.mxu0 0
    %1165 = vmatpush1.bf16.msra.mxu0 0
    %1166 = vmatprep.subr.bf16.mxu0 0
    %1167 = vmatpush1.bf16.msra.mxu0 0
    %1168 = vmatprep.subr.bf16.mxu0 0
    %1169 = vmatpush1.bf16.msra.mxu0 0
    %1170 = vmatprep.subr.bf16.mxu0 0
    %1171 = vmatpush1.bf16.msra.mxu0 0
    %1172 = vmatprep.subr.bf16.mxu0 0
    %1173 = vmatpush1.bf16.msra.mxu0 0
    %1174 = vmatprep.subr.bf16.mxu0 0
    %1175 = vmatpush1.bf16.msra.mxu0 0
    %1176 = vmatprep.subr.bf16.mxu0 0
    %1177 = vmatpush1.bf16.msra.mxu0 0
    %1178 = vmatprep.subr.bf16.mxu0 0
    %1179 = vmatpush1.bf16.msra.mxu0 0
    %1180 = vmatprep.subr.bf16.mxu0 0
    %1181 = vmatpush1.bf16.msra.mxu0 0
    %1182 = vmatprep.subr.bf16.mxu0 0
    %1183 = vmatpush1.bf16.msra.mxu0 0
    %1184 = vmatprep.subr.bf16.mxu0 0
    %1185 = vmatpush1.bf16.msra.mxu0 0
    %1186 = vmatprep.subr.bf16.mxu0 0
    %1187 = vmatpush1.bf16.msra.mxu0 0
    %1188 = vmatprep.subr.bf16.mxu0 0
    %1189 = vmatpush1.bf16.msra.mxu0 0
    %1190 = vmatprep.mubr.bf16.mxu0 0
    %1191 = vmatmul.mubr.bf16.gmra.mrb[0].mxu0 %v1156
    %v1192 = vpop.f32.mrb[0].mxu0
    %v1193 = vadd.f32 0.0, %v1192
    %v1194 = vpop.f32.mrb[0].mxu0
    %v1195 = vadd.f32 0.0, %v1194
    %v1196 = vpop.f32.mrb[0].mxu0
    %v1197 = vpop.f32.mrb[0].mxu0
    %1198 = vdwg.mxu0
    %v1200 = vsel %vm180, %v1152, 0
    %1202 = vmatprep.subr.bf16.mxu0 %v232
    %1203 = vmatpush1.bf16.msra.mxu0 %v231
    %1204 = vmatprep.subr.bf16.mxu0 0
    %1205 = vmatpush1.bf16.msra.mxu0 0
    %1206 = vmatprep.subr.bf16.mxu0 0
    %1207 = vmatpush1.bf16.msra.mxu0 0
    %1208 = vmatprep.subr.bf16.mxu0 0
    %1209 = vmatpush1.bf16.msra.mxu0 0
    %1210 = vmatprep.subr.bf16.mxu0 0
    %1211 = vmatpush1.bf16.msra.mxu0 0
    %1212 = vmatprep.subr.bf16.mxu0 0
    %1213 = vmatpush1.bf16.msra.mxu0 0
    %1214 = vmatprep.subr.bf16.mxu0 0
    %1215 = vmatpush1.bf16.msra.mxu0 0
    %1216 = vmatprep.subr.bf16.mxu0 0
    %1217 = vmatpush1.bf16.msra.mxu0 0
    %1218 = vmatprep.subr.bf16.mxu0 0
    %1219 = vmatpush1.bf16.msra.mxu0 0
    %1220 = vmatprep.subr.bf16.mxu0 0
    %1221 = vmatpush1.bf16.msra.mxu0 0
    %1222 = vmatprep.subr.bf16.mxu0 0
    %1223 = vmatpush1.bf16.msra.mxu0 0
    %1224 = vmatprep.subr.bf16.mxu0 0
    %1225 = vmatpush1.bf16.msra.mxu0 0
    %1226 = vmatprep.subr.bf16.mxu0 0
    %1227 = vmatpush1.bf16.msra.mxu0 0
    %1228 = vmatprep.subr.bf16.mxu0 0
    %1229 = vmatpush1.bf16.msra.mxu0 0
    %1230 = vmatprep.subr.bf16.mxu0 0
    %1231 = vmatpush1.bf16.msra.mxu0 0
    %1232 = vmatprep.subr.bf16.mxu0 0
    %1233 = vmatpush1.bf16.msra.mxu0 0
    %1234 = vmatprep.mubr.bf16.mxu0 0
    %1235 = vmatmul.mubr.bf16.gmra.mrb[0].mxu0 %v1200
    %v1236 = vpop.f32.mrb[0].mxu0
    %v1237 = vadd.f32 %v1193, %v1236
    %v1238 = vpop.f32.mrb[0].mxu0
    %v1239 = vadd.f32 %v1195, %v1238
    %v1240 = vpop.f32.mrb[0].mxu0
    %v1241 = vpop.f32.mrb[0].mxu0
    %1242 = vdwg.mxu0
    %v1243 = vadd.f32 %v1237, %v147
    %v1244 = vadd.f32 %v1239, %v151
    %1245 = vrot.lane.b32.xlu0 %v1125, 64
    %v1246 = vpop.permute.xlu0 %1245
    %v1248 = vsel %vm322, %v1246, 0
    %1250 = vmatprep.subr.bf16.mxu0 %v307
    %1251 = vmatpush1.bf16.msra.mxu0 %v306
    %1252 = vmatprep.subr.bf16.mxu0 %v309
    %1253 = vmatpush1.bf16.msra.mxu0 %v308
    %1254 = vmatprep.subr.bf16.mxu0 %v311
    %1255 = vmatpush1.bf16.msra.mxu0 %v310
    %1256 = vmatprep.subr.bf16.mxu0 %v313
    %1257 = vmatpush1.bf16.msra.mxu0 %v312
    %1258 = vmatprep.subr.bf16.mxu0 0
    %1259 = vmatpush1.bf16.msra.mxu0 0
    %1260 = vmatprep.subr.bf16.mxu0 0
    %1261 = vmatpush1.bf16.msra.mxu0 0
    %1262 = vmatprep.subr.bf16.mxu0 0
    %1263 = vmatpush1.bf16.msra.mxu0 0
    %1264 = vmatprep.subr.bf16.mxu0 0
    %1265 = vmatpush1.bf16.msra.mxu0 0
    %1266 = vmatprep.subr.bf16.mxu0 0
    %1267 = vmatpush1.bf16.msra.mxu0 0
    %1268 = vmatprep.subr.bf16.mxu0 0
    %1269 = vmatpush1.bf16.msra.mxu0 0
    %1270 = vmatprep.subr.bf16.mxu0 0
    %1271 = vmatpush1.bf16.msra.mxu0 0
    %1272 = vmatprep.subr.bf16.mxu0 0
    %1273 = vmatpush1.bf16.msra.mxu0 0
    %1274 = vmatprep.subr.bf16.mxu0 0
    %1275 = vmatpush1.bf16.msra.mxu0 0
    %1276 = vmatprep.subr.bf16.mxu0 0
    %1277 = vmatpush1.bf16.msra.mxu0 0
    %1278 = vmatprep.subr.bf16.mxu0 0
    %1279 = vmatpush1.bf16.msra.mxu0 0
    %1280 = vmatprep.subr.bf16.mxu0 0
    %1281 = vmatpush1.bf16.msra.mxu0 0
    %1282 = vmatprep.mubr.bf16.mxu0 0
    %1283 = vmatmul.mubr.bf16.gmra.mrb[0].mxu0 %v1248
    %v1284 = vpop.f32.mrb[0].mxu0
    %v1285 = vadd.f32 %v159, %v1284
    %v1286 = vpop.f32.mrb[0].mxu0
    %v1287 = vadd.f32 %v163, %v1286
    %v1288 = vpop.f32.mrb[0].mxu0
    %v1289 = vpop.f32.mrb[0].mxu0
    %1290 = vdwg.mxu0
    %v1291 = vadd.f32 %v1243, %v1285
    %v1292 = vxor.u32 %v1291, 2147483648
    %v1293 = vmul.f32 %v1292, 1.442695
    %v1294 = vpow.pop %v1293
    %v1295 = vadd.f32 %v1294, 1.0
    %v1296 = vrcp.pop %v1295
    %v1297 = vmul.f32 1.0, %v1296
    %v1298 = vmul.f32 %v1297, %v1287
    %v1299 = vadd.f32 %v1244, %v1298
    %v1300 = vtanh.pop %v1299
    %v1301 = vsub.f32 1.0, %v1297
    %1303 = vrot.lane.b32.xlu0 %v1300, 64
    %v1304 = vpop.permute.xlu0 %1303
    %v1306 = vmul.f32 %v1301, %v1304
    %v1307 = vmul.f32 %v1297, %v1124
    %v1308 = vadd.f32 %v1306, %v1307
    %v1309 = vpack.c.bf16 %v1308, %v1308
    %v1312 = vunpack.c.l.s4 1966171168
    %v1313 = vunpack.c.0.s8 %v1312
    %v1314 = vlaneseq
    %v1315 = vshrl.u32 %v1314, 7
    %v1316 = vsub.s32 %v1313, %v1315
    %v1317 = vrot.slane %v1309, %v1316
    %v1319 = vunpack.c.l.s4 1966171168
    %v1320 = vunpack.c.0.s8 %v1319
    %v1321 = vlaneseq
    %v1322 = vshrl.u32 %v1321, 7
    %v1323 = vsub.s32 %v1320, %v1322
    %v1324 = vrot.slane %v1317, %v1323
    %1325 = vrot.lane.b32.xlu0 %v1324, 64
    %v1326 = vpop.permute.xlu0 %1325
    %s1328 = scalar_lea.vmem %s7, 5
    %1329 = vst.msk [vmem:[%s1328] sm:$0x1] %vm408, %v1326
    %1330 = vrot.lane.b32.xlu0 %v1324, 32
    %v1331 = vpop.permute.xlu0 %1330
    %s1333 = scalar_lea.vmem %s120, 2
    %1334 = vst.msk [vmem:[%s1333] sm:$0x1] %vm408, %v1331
    %s1335 = scalar_lea.vmem %s0, 6
    %v1336 = vld [vmem:[%s1335] sm:$0x1]
    %s1337 = scalar_lea.vmem %s113, 1
    %v1338 = vld [vmem:[%s1337] sm:$0x1]
    %v1340 = vsel %vm180, %v1338, 0
    %1342 = vmatprep.subr.bf16.mxu0 %v177
    %1343 = vmatpush1.bf16.msra.mxu0 %v176
    %1344 = vmatprep.subr.bf16.mxu0 0
    %1345 = vmatpush1.bf16.msra.mxu0 0
    %1346 = vmatprep.subr.bf16.mxu0 0
    %1347 = vmatpush1.bf16.msra.mxu0 0
    %1348 = vmatprep.subr.bf16.mxu0 0
    %1349 = vmatpush1.bf16.msra.mxu0 0
    %1350 = vmatprep.subr.bf16.mxu0 0
    %1351 = vmatpush1.bf16.msra.mxu0 0
    %1352 = vmatprep.subr.bf16.mxu0 0
    %1353 = vmatpush1.bf16.msra.mxu0 0
    %1354 = vmatprep.subr.bf16.mxu0 0
    %1355 = vmatpush1.bf16.msra.mxu0 0
    %1356 = vmatprep.subr.bf16.mxu0 0
    %1357 = vmatpush1.bf16.msra.mxu0 0
    %1358 = vmatprep.subr.bf16.mxu0 0
    %1359 = vmatpush1.bf16.msra.mxu0 0
    %1360 = vmatprep.subr.bf16.mxu0 0
    %1361 = vmatpush1.bf16.msra.mxu0 0
    %1362 = vmatprep.subr.bf16.mxu0 0
    %1363 = vmatpush1.bf16.msra.mxu0 0
    %1364 = vmatprep.subr.bf16.mxu0 0
    %1365 = vmatpush1.bf16.msra.mxu0 0
    %1366 = vmatprep.subr.bf16.mxu0 0
    %1367 = vmatpush1.bf16.msra.mxu0 0
    %1368 = vmatprep.subr.bf16.mxu0 0
    %1369 = vmatpush1.bf16.msra.mxu0 0
    %1370 = vmatprep.subr.bf16.mxu0 0
    %1371 = vmatpush1.bf16.msra.mxu0 0
    %1372 = vmatprep.subr.bf16.mxu0 0
    %1373 = vmatpush1.bf16.msra.mxu0 0
    %1374 = vmatprep.mubr.bf16.mxu0 0
    %1375 = vmatmul.mubr.bf16.gmra.mrb[0].mxu0 %v1340
    %v1376 = vpop.f32.mrb[0].mxu0
    %v1377 = vadd.f32 0.0, %v1376
    %v1378 = vpop.f32.mrb[0].mxu0
    %v1379 = vadd.f32 0.0, %v1378
    %v1380 = vpop.f32.mrb[0].mxu0
    %v1381 = vpop.f32.mrb[0].mxu0
    %1382 = vdwg.mxu0
    %v1384 = vsel %vm180, %v1336, 0
    %1386 = vmatprep.subr.bf16.mxu0 %v232
    %1387 = vmatpush1.bf16.msra.mxu0 %v231
    %1388 = vmatprep.subr.bf16.mxu0 0
    %1389 = vmatpush1.bf16.msra.mxu0 0
    %1390 = vmatprep.subr.bf16.mxu0 0
    %1391 = vmatpush1.bf16.msra.mxu0 0
    %1392 = vmatprep.subr.bf16.mxu0 0
    %1393 = vmatpush1.bf16.msra.mxu0 0
    %1394 = vmatprep.subr.bf16.mxu0 0
    %1395 = vmatpush1.bf16.msra.mxu0 0
    %1396 = vmatprep.subr.bf16.mxu0 0
    %1397 = vmatpush1.bf16.msra.mxu0 0
    %1398 = vmatprep.subr.bf16.mxu0 0
    %1399 = vmatpush1.bf16.msra.mxu0 0
    %1400 = vmatprep.subr.bf16.mxu0 0
    %1401 = vmatpush1.bf16.msra.mxu0 0
    %1402 = vmatprep.subr.bf16.mxu0 0
    %1403 = vmatpush1.bf16.msra.mxu0 0
    %1404 = vmatprep.subr.bf16.mxu0 0
    %1405 = vmatpush1.bf16.msra.mxu0 0
    %1406 = vmatprep.subr.bf16.mxu0 0
    %1407 = vmatpush1.bf16.msra.mxu0 0
    %1408 = vmatprep.subr.bf16.mxu0 0
    %1409 = vmatpush1.bf16.msra.mxu0 0
    %1410 = vmatprep.subr.bf16.mxu0 0
    %1411 = vmatpush1.bf16.msra.mxu0 0
    %1412 = vmatprep.subr.bf16.mxu0 0
    %1413 = vmatpush1.bf16.msra.mxu0 0
    %1414 = vmatprep.subr.bf16.mxu0 0
    %1415 = vmatpush1.bf16.msra.mxu0 0
    %1416 = vmatprep.subr.bf16.mxu0 0
    %1417 = vmatpush1.bf16.msra.mxu0 0
    %1418 = vmatprep.mubr.bf16.mxu0 0
    %1419 = vmatmul.mubr.bf16.gmra.mrb[0].mxu0 %v1384
    %v1420 = vpop.f32.mrb[0].mxu0
    %v1421 = vadd.f32 %v1377, %v1420
    %v1422 = vpop.f32.mrb[0].mxu0
    %v1423 = vadd.f32 %v1379, %v1422
    %v1424 = vpop.f32.mrb[0].mxu0
    %v1425 = vpop.f32.mrb[0].mxu0
    %1426 = vdwg.mxu0
    %v1427 = vadd.f32 %v1421, %v147
    %v1428 = vadd.f32 %v1423, %v151
    %1429 = vrot.lane.b32.xlu0 %v1309, 64
    %v1430 = vpop.permute.xlu0 %1429
    %v1432 = vsel %vm322, %v1430, 0
    %1434 = vmatprep.subr.bf16.mxu0 %v307
    %1435 = vmatpush1.bf16.msra.mxu0 %v306
    %1436 = vmatprep.subr.bf16.mxu0 %v309
    %1437 = vmatpush1.bf16.msra.mxu0 %v308
    %1438 = vmatprep.subr.bf16.mxu0 %v311
    %1439 = vmatpush1.bf16.msra.mxu0 %v310
    %1440 = vmatprep.subr.bf16.mxu0 %v313
    %1441 = vmatpush1.bf16.msra.mxu0 %v312
    %1442 = vmatprep.subr.bf16.mxu0 0
    %1443 = vmatpush1.bf16.msra.mxu0 0
    %1444 = vmatprep.subr.bf16.mxu0 0
    %1445 = vmatpush1.bf16.msra.mxu0 0
    %1446 = vmatprep.subr.bf16.mxu0 0
    %1447 = vmatpush1.bf16.msra.mxu0 0
    %1448 = vmatprep.subr.bf16.mxu0 0
    %1449 = vmatpush1.bf16.msra.mxu0 0
    %1450 = vmatprep.subr.bf16.mxu0 0
    %1451 = vmatpush1.bf16.msra.mxu0 0
    %1452 = vmatprep.subr.bf16.mxu0 0
    %1453 = vmatpush1.bf16.msra.mxu0 0
    %1454 = vmatprep.subr.bf16.mxu0 0
    %1455 = vmatpush1.bf16.msra.mxu0 0
    %1456 = vmatprep.subr.bf16.mxu0 0
    %1457 = vmatpush1.bf16.msra.mxu0 0
    %1458 = vmatprep.subr.bf16.mxu0 0
    %1459 = vmatpush1.bf16.msra.mxu0 0
    %1460 = vmatprep.subr.bf16.mxu0 0
    %1461 = vmatpush1.bf16.msra.mxu0 0
    %1462 = vmatprep.subr.bf16.mxu0 0
    %1463 = vmatpush1.bf16.msra.mxu0 0
    %1464 = vmatprep.subr.bf16.mxu0 0
    %1465 = vmatpush1.bf16.msra.mxu0 0
    %1466 = vmatprep.mubr.bf16.mxu0 0
    %1467 = vmatmul.mubr.bf16.gmra.mrb[0].mxu0 %v1432
    %v1468 = vpop.f32.mrb[0].mxu0
    %v1469 = vadd.f32 %v159, %v1468
    %v1470 = vpop.f32.mrb[0].mxu0
    %v1471 = vadd.f32 %v163, %v1470
    %v1472 = vpop.f32.mrb[0].mxu0
    %v1473 = vpop.f32.mrb[0].mxu0
    %1474 = vdwg.mxu0
    %v1475 = vadd.f32 %v1427, %v1469
    %v1476 = vxor.u32 %v1475, 2147483648
    %v1477 = vmul.f32 %v1476, 1.442695
    %v1478 = vpow.pop %v1477
    %v1479 = vadd.f32 %v1478, 1.0
    %v1480 = vrcp.pop %v1479
    %v1481 = vmul.f32 1.0, %v1480
    %v1482 = vmul.f32 %v1481, %v1471
    %v1483 = vadd.f32 %v1428, %v1482
    %v1484 = vtanh.pop %v1483
    %v1485 = vsub.f32 1.0, %v1481
    %1487 = vrot.lane.b32.xlu0 %v1484, 64
    %v1488 = vpop.permute.xlu0 %1487
    %v1490 = vmul.f32 %v1485, %v1488
    %v1491 = vmul.f32 %v1481, %v1308
    %v1492 = vadd.f32 %v1490, %v1491
    %v1493 = vpack.c.bf16 %v1492, %v1492
    %v1496 = vunpack.c.l.s4 1966171168
    %v1497 = vunpack.c.0.s8 %v1496
    %v1498 = vlaneseq
    %v1499 = vshrl.u32 %v1498, 7
    %v1500 = vsub.s32 %v1497, %v1499
    %v1501 = vrot.slane %v1493, %v1500
    %v1503 = vunpack.c.l.s4 1966171168
    %v1504 = vunpack.c.0.s8 %v1503
    %v1505 = vlaneseq
    %v1506 = vshrl.u32 %v1505, 7
    %v1507 = vsub.s32 %v1504, %v1506
    %v1508 = vrot.slane %v1501, %v1507
    %1509 = vrot.lane.b32.xlu0 %v1508, 64
    %v1510 = vpop.permute.xlu0 %1509
    %s1512 = scalar_lea.vmem %s7, 6
    %1513 = vst.msk [vmem:[%s1512] sm:$0x1] %vm408, %v1510
    %1514 = vrot.lane.b32.xlu0 %v1508, 32
    %v1515 = vpop.permute.xlu0 %1514
    %s1517 = scalar_lea.vmem %s120, 1
    %1518 = vst.msk [vmem:[%s1517] sm:$0x1] %vm408, %v1515
    %s1519 = scalar_lea.vmem %s0, 7
    %v1520 = vld [vmem:[%s1519] sm:$0x1]
    %v1521 = vld [vmem:[%s113] sm:$0x1]
    %v1523 = vsel %vm180, %v1521, 0
    %1525 = vmatprep.subr.bf16.mxu0 %v177
    %1526 = vmatpush1.bf16.msra.mxu0 %v176
    %1527 = vmatprep.subr.bf16.mxu0 0
    %1528 = vmatpush1.bf16.msra.mxu0 0
    %1529 = vmatprep.subr.bf16.mxu0 0
    %1530 = vmatpush1.bf16.msra.mxu0 0
    %1531 = vmatprep.subr.bf16.mxu0 0
    %1532 = vmatpush1.bf16.msra.mxu0 0
    %1533 = vmatprep.subr.bf16.mxu0 0
    %1534 = vmatpush1.bf16.msra.mxu0 0
    %1535 = vmatprep.subr.bf16.mxu0 0
    %1536 = vmatpush1.bf16.msra.mxu0 0
    %1537 = vmatprep.subr.bf16.mxu0 0
    %1538 = vmatpush1.bf16.msra.mxu0 0
    %1539 = vmatprep.subr.bf16.mxu0 0
    %1540 = vmatpush1.bf16.msra.mxu0 0
    %1541 = vmatprep.subr.bf16.mxu0 0
    %1542 = vmatpush1.bf16.msra.mxu0 0
    %1543 = vmatprep.subr.bf16.mxu0 0
    %1544 = vmatpush1.bf16.msra.mxu0 0
    %1545 = vmatprep.subr.bf16.mxu0 0
    %1546 = vmatpush1.bf16.msra.mxu0 0
    %1547 = vmatprep.subr.bf16.mxu0 0
    %1548 = vmatpush1.bf16.msra.mxu0 0
    %1549 = vmatprep.subr.bf16.mxu0 0
    %1550 = vmatpush1.bf16.msra.mxu0 0
    %1551 = vmatprep.subr.bf16.mxu0 0
    %1552 = vmatpush1.bf16.msra.mxu0 0
    %1553 = vmatprep.subr.bf16.mxu0 0
    %1554 = vmatpush1.bf16.msra.mxu0 0
    %1555 = vmatprep.subr.bf16.mxu0 0
    %1556 = vmatpush1.bf16.msra.mxu0 0
    %1557 = vmatprep.mubr.bf16.mxu0 0
    %1558 = vmatmul.mubr.bf16.gmra.mrb[0].mxu0 %v1523
    %v1559 = vpop.f32.mrb[0].mxu0
    %v1560 = vadd.f32 0.0, %v1559
    %v1561 = vpop.f32.mrb[0].mxu0
    %v1562 = vadd.f32 0.0, %v1561
    %v1563 = vpop.f32.mrb[0].mxu0
    %v1564 = vpop.f32.mrb[0].mxu0
    %1565 = vdwg.mxu0
    %v1567 = vsel %vm180, %v1520, 0
    %1569 = vmatprep.subr.bf16.mxu0 %v232
    %1570 = vmatpush1.bf16.msra.mxu0 %v231
    %1571 = vmatprep.subr.bf16.mxu0 0
    %1572 = vmatpush1.bf16.msra.mxu0 0
    %1573 = vmatprep.subr.bf16.mxu0 0
    %1574 = vmatpush1.bf16.msra.mxu0 0
    %1575 = vmatprep.subr.bf16.mxu0 0
    %1576 = vmatpush1.bf16.msra.mxu0 0
    %1577 = vmatprep.subr.bf16.mxu0 0
    %1578 = vmatpush1.bf16.msra.mxu0 0
    %1579 = vmatprep.subr.bf16.mxu0 0
    %1580 = vmatpush1.bf16.msra.mxu0 0
    %1581 = vmatprep.subr.bf16.mxu0 0
    %1582 = vmatpush1.bf16.msra.mxu0 0
    %1583 = vmatprep.subr.bf16.mxu0 0
    %1584 = vmatpush1.bf16.msra.mxu0 0
    %1585 = vmatprep.subr.bf16.mxu0 0
    %1586 = vmatpush1.bf16.msra.mxu0 0
    %1587 = vmatprep.subr.bf16.mxu0 0
    %1588 = vmatpush1.bf16.msra.mxu0 0
    %1589 = vmatprep.subr.bf16.mxu0 0
    %1590 = vmatpush1.bf16.msra.mxu0 0
    %1591 = vmatprep.subr.bf16.mxu0 0
    %1592 = vmatpush1.bf16.msra.mxu0 0
    %1593 = vmatprep.subr.bf16.mxu0 0
    %1594 = vmatpush1.bf16.msra.mxu0 0
    %1595 = vmatprep.subr.bf16.mxu0 0
    %1596 = vmatpush1.bf16.msra.mxu0 0
    %1597 = vmatprep.subr.bf16.mxu0 0
    %1598 = vmatpush1.bf16.msra.mxu0 0
    %1599 = vmatprep.subr.bf16.mxu0 0
    %1600 = vmatpush1.bf16.msra.mxu0 0
    %1601 = vmatprep.mubr.bf16.mxu0 0
    %1602 = vmatmul.mubr.bf16.gmra.mrb[0].mxu0 %v1567
    %v1603 = vpop.f32.mrb[0].mxu0
    %v1604 = vadd.f32 %v1560, %v1603
    %v1605 = vpop.f32.mrb[0].mxu0
    %v1606 = vadd.f32 %v1562, %v1605
    %v1607 = vpop.f32.mrb[0].mxu0
    %v1608 = vpop.f32.mrb[0].mxu0
    %1609 = vdwg.mxu0
    %v1610 = vadd.f32 %v1604, %v147
    %v1611 = vadd.f32 %v1606, %v151
    %1612 = vrot.lane.b32.xlu0 %v1493, 64
    %v1613 = vpop.permute.xlu0 %1612
    %v1615 = vsel %vm322, %v1613, 0
    %1617 = vmatprep.subr.bf16.mxu0 %v307
    %1618 = vmatpush1.bf16.msra.mxu0 %v306
    %1619 = vmatprep.subr.bf16.mxu0 %v309
    %1620 = vmatpush1.bf16.msra.mxu0 %v308
    %1621 = vmatprep.subr.bf16.mxu0 %v311
    %1622 = vmatpush1.bf16.msra.mxu0 %v310
    %1623 = vmatprep.subr.bf16.mxu0 %v313
    %1624 = vmatpush1.bf16.msra.mxu0 %v312
    %1625 = vmatprep.subr.bf16.mxu0 0
    %1626 = vmatpush1.bf16.msra.mxu0 0
    %1627 = vmatprep.subr.bf16.mxu0 0
    %1628 = vmatpush1.bf16.msra.mxu0 0
    %1629 = vmatprep.subr.bf16.mxu0 0
    %1630 = vmatpush1.bf16.msra.mxu0 0
    %1631 = vmatprep.subr.bf16.mxu0 0
    %1632 = vmatpush1.bf16.msra.mxu0 0
    %1633 = vmatprep.subr.bf16.mxu0 0
    %1634 = vmatpush1.bf16.msra.mxu0 0
    %1635 = vmatprep.subr.bf16.mxu0 0
    %1636 = vmatpush1.bf16.msra.mxu0 0
    %1637 = vmatprep.subr.bf16.mxu0 0
    %1638 = vmatpush1.bf16.msra.mxu0 0
    %1639 = vmatprep.subr.bf16.mxu0 0
    %1640 = vmatpush1.bf16.msra.mxu0 0
    %1641 = vmatprep.subr.bf16.mxu0 0
    %1642 = vmatpush1.bf16.msra.mxu0 0
    %1643 = vmatprep.subr.bf16.mxu0 0
    %1644 = vmatpush1.bf16.msra.mxu0 0
    %1645 = vmatprep.subr.bf16.mxu0 0
    %1646 = vmatpush1.bf16.msra.mxu0 0
    %1647 = vmatprep.subr.bf16.mxu0 0
    %1648 = vmatpush1.bf16.msra.mxu0 0
    %1649 = vmatprep.mubr.bf16.mxu0 0
    %1650 = vmatmul.mubr.bf16.gmra.mrb[0].mxu0 %v1615
    %v1651 = vpop.f32.mrb[0].mxu0
    %v1652 = vadd.f32 %v159, %v1651
    %v1653 = vpop.f32.mrb[0].mxu0
    %v1654 = vadd.f32 %v163, %v1653
    %v1655 = vpop.f32.mrb[0].mxu0
    %v1656 = vpop.f32.mrb[0].mxu0
    %1657 = vdwg.mxu0
    %v1658 = vadd.f32 %v1610, %v1652
    %v1659 = vxor.u32 %v1658, 2147483648
    %v1660 = vmul.f32 %v1659, 1.442695
    %v1661 = vpow.pop %v1660
    %v1662 = vadd.f32 %v1661, 1.0
    %v1663 = vrcp.pop %v1662
    %v1664 = vmul.f32 1.0, %v1663
    %v1665 = vmul.f32 %v1664, %v1654
    %v1666 = vadd.f32 %v1611, %v1665
    %v1667 = vtanh.pop %v1666
    %v1668 = vsub.f32 1.0, %v1664
    %1670 = vrot.lane.b32.xlu0 %v1667, 64
    %v1671 = vpop.permute.xlu0 %1670
    %v1673 = vmul.f32 %v1668, %v1671
    %v1674 = vmul.f32 %v1664, %v1492
    %v1675 = vadd.f32 %v1673, %v1674
    %v1676 = vpack.c.bf16 %v1675, %v1675
    %v1679 = vunpack.c.l.s4 1966171168
    %v1680 = vunpack.c.0.s8 %v1679
    %v1681 = vlaneseq
    %v1682 = vshrl.u32 %v1681, 7
    %v1683 = vsub.s32 %v1680, %v1682
    %v1684 = vrot.slane %v1676, %v1683
    %v1686 = vunpack.c.l.s4 1966171168
    %v1687 = vunpack.c.0.s8 %v1686
    %v1688 = vlaneseq
    %v1689 = vshrl.u32 %v1688, 7
    %v1690 = vsub.s32 %v1687, %v1689
    %v1691 = vrot.slane %v1684, %v1690
    %1692 = vrot.lane.b32.xlu0 %v1691, 64
    %v1693 = vpop.permute.xlu0 %1692
    %s1695 = scalar_lea.vmem %s7, 7
    %1696 = vst.msk [vmem:[%s1695] sm:$0x1] %vm408, %v1693
    %1697 = vrot.lane.b32.xlu0 %v1691, 32
    %v1698 = vpop.permute.xlu0 %1697
    %1700 = vst.msk [vmem:[%s120] sm:$0x1] %vm408, %v1698
    %1702 = vrot.lane.b32.xlu0 %v1675, 64
    %v1703 = vpop.permute.xlu0 %1702
    %vm1705 = vcmask 517120
    %1706 = vst.msk [vmem:[#allocation2] sm:$0x3] %vm1705, %v1703
    %s1707 = ssub.s32 0, 0
    %s1708 = smul.u32 8, %s1707
    %p1709 = scmp.lt.s32.totalorder %s1708, 7
    %s1710 = scalar_select %p1709, %s1708, 7
    %s1711 = scalar_lea.vmem %s8, %s1710
    // Predicated region
    $region54: #{birnn_gru_forward.3} parent=1 // pred_check
      _
    $region55: #{birnn_gru_forward.3} parent=1 // pred_check_branch
      %1713 = sbr.rel (0) target = $region57
    $region56: #{birnn_gru_forward.3} parent=1 // pred_region
      _
    $region57: #{birnn_gru_forward.3} parent=1 // pred_fallthru
      _
    // Predicated region
    $region58: #{birnn_gru_forward.3} parent=1 // pred_check
      _
    $region59: #{birnn_gru_forward.3} parent=1 // pred_check_branch
      %1715 = sbr.rel (0) target = $region61
    $region60: #{birnn_gru_forward.3} parent=1 // pred_region
      %s1716 = ssub.s32 0, 0
      %s1717 = smul.u32 8, %s1716
    $region61: #{birnn_gru_forward.3} parent=1 // pred_fallthru
      _
    // Predicated region
    $region62: #{birnn_gru_forward.3} parent=1 // pred_check
      _
    $region63: #{birnn_gru_forward.3} parent=1 // pred_check_branch
      %1719 = sbr.rel (0) target = $region65
    $region64: #{birnn_gru_forward.3} parent=1 // pred_region
      _
    $region65: #{birnn_gru_forward.3} parent=1 // pred_fallthru
      _
    // Predicated region
    $region66: #{birnn_gru_forward.3} parent=1 // pred_check
      _
    $region67: #{birnn_gru_forward.3} parent=1 // pred_check_branch
      %1721 = sbr.rel (0) target = $region69
    $region68: #{birnn_gru_forward.3} parent=1 // pred_region
      %s1722 = ssub.s32 0, 0
      %s1723 = smul.u32 8, %s1722
      %p1724 = scmp.lt.s32.totalorder %s1723, 7
      %s1725 = scalar_select %p1724, %s1723, 7
      %s1726 = scalar_lea.vmem %s8, %s1725
    $region69: #{birnn_gru_forward.3} parent=1 // pred_fallthru
      _
    %1727 = vsyncpa [#allocation4], 1
    %1728 = vsyncpa [#allocation6], 1
    %1729 = vsyncpa [#allocation9], 1

// kernel: birnn_gru_forward.4
$region0: #{birnn_gru_forward.4}
  #allocation0 [shape = 'u32[]', space=smem, size = 0x4, offset = 0x4, fixed_abs, tag = 'smem constant byte address 0x4 - core index']
  #allocation1 [shape = 'u32[144,128]{1,0:T(1,128)}', space=vmem, size = 0x12000, scoped, tag = 'internal scratch']
  #allocation2 [shape = 'f32[2,64]{1,0:T(2,128)}', space=vmem, size = 0x400, scoped, tag = 'scratch operand']
  %s0 = inlined_call_operand.vmem [shape: bf16[8,2,64], index: 0, kind: input, shape index: {}, may-alias: {0,1}]
  %s1 = inlined_call_operand.vmem [shape: bf16[8,2,64], index: 1, kind: input, shape index: {}, may-alias: {0,1}]
  %s2 = inlined_call_operand.vmem [shape: bf16[64,192], index: 2, kind: input, shape index: {}]
  %s3 = inlined_call_operand.vmem [shape: bf16[64,192], index: 3, kind: input, shape index: {}]
  %s4 = inlined_call_operand.vmem [shape: f32[1,192], index: 4, kind: input, shape index: {}]
  %s5 = inlined_call_operand.vmem [shape: bf16[64,192], index: 5, kind: input, shape index: {}]
  %s6 = inlined_call_operand.vmem [shape: f32[1,192], index: 6, kind: input, shape index: {}]
  %s7 = inlined_call_operand.vmem [shape: bf16[8,2,32], index: 7, kind: output, shape index: {0}]
  %s8 = inlined_call_operand.vmem [shape: bf16[8,2,32], index: 8, kind: output, shape index: {1}]
  %9 = xla_tuple %s7, %s8
  %s10 = sld [smem:[#allocation0]]
  $region50: #{birnn_gru_forward.4} parent=0
    _
  %s12 = ssub.s32 1, %s10
  %s13 = scalar_select 0, %s12, %s10
  // Predicated region
  $region2: #{birnn_gru_forward.4} parent=0 // pred_check
    _
  $region3: #{birnn_gru_forward.4} parent=0 // pred_check_branch
    %15 = sbr.rel (0) target = $region5
  $region4: #{birnn_gru_forward.4} parent=0 // pred_region
    _
  $region5: #{birnn_gru_forward.4} parent=0 // pred_fallthru
    _
  // Predicated region
  $region6: #{birnn_gru_forward.4} parent=0 // pred_check
    _
  $region7: #{birnn_gru_forward.4} parent=0 // pred_check_branch
    %17 = sbr.rel (0) target = $region9
  $region8: #{birnn_gru_forward.4} parent=0 // pred_region
    %s18 = ssub.s32 0, 0
    %s19 = smul.u32 8, %s18
    %p20 = scmp.lt.s32.totalorder %s19, 7
    %s21 = scalar_select %p20, %s19, 7
    %s22 = scalar_lea.vmem %s1, %s21
    %s23 = ssub.s32 0, 0
    %s24 = smul.u32 8, %s23
  $region9: #{birnn_gru_forward.4} parent=0 // pred_fallthru
    _
  // Predicated region
  $region10: #{birnn_gru_forward.4} parent=0 // pred_check
    _
  $region11: #{birnn_gru_forward.4} parent=0 // pred_check_branch
    %26 = sbr.rel (0) target = $region13
  $region12: #{birnn_gru_forward.4} parent=0 // pred_region
    _
  $region13: #{birnn_gru_forward.4} parent=0 // pred_fallthru
    _
  // Predicated region
  $region14: #{birnn_gru_forward.4} parent=0 // pred_check
    _
  $region15: #{birnn_gru_forward.4} parent=0 // pred_check_branch
    %28 = sbr.rel (0) target = $region17
  $region16: #{birnn_gru_forward.4} parent=0 // pred_region
    _
  $region17: #{birnn_gru_forward.4} parent=0 // pred_fallthru
    _
  // Predicated region
  $region18: #{birnn_gru_forward.4} parent=0 // pred_check
    _
  $region19: #{birnn_gru_forward.4} parent=0 // pred_check_branch
    %30 = sbr.rel (0) target = $region21
  $region20: #{birnn_gru_forward.4} parent=0 // pred_region
    _
  $region21: #{birnn_gru_forward.4} parent=0 // pred_fallthru
    _
  // Predicated region
  $region22: #{birnn_gru_forward.4} parent=0 // pred_check
    _
  $region23: #{birnn_gru_forward.4} parent=0 // pred_check_branch
    %32 = sbr.rel (0) target = $region25
  $region24: #{birnn_gru_forward.4} parent=0 // pred_region
    _
  $region25: #{birnn_gru_forward.4} parent=0 // pred_fallthru
    _
  // Predicated region
  $region26: #{birnn_gru_forward.4} parent=0 // pred_check
    _
  $region27: #{birnn_gru_forward.4} parent=0 // pred_check_branch
    %34 = sbr.rel (0) target = $region29
  $region28: #{birnn_gru_forward.4} parent=0 // pred_region
    _
  $region29: #{birnn_gru_forward.4} parent=0 // pred_fallthru
    _
  %s35 = ssub.s32 0, 0
  %s36 = smul.u32 8, %s35
  %p37 = scmp.lt.s32.totalorder %s36, 7
  %s38 = scalar_select %p37, %s36, 7
  %s39 = scalar_lea.vmem %s1, %s38
  %s40 = ssub.s32 0, 0
  %s41 = smul.u32 8, %s40
  %p42 = scmp.lt.s32.totalorder %s41, 7
  %s43 = scalar_select %p42, %s41, 7
  %s44 = scalar_lea.vmem %s8, %s43
  %s45 = ssub.s32 0, 0
  %s46 = smul.u32 8, %s45
  %p47 = scmp.lt.s32.totalorder %s46, 7
  %s48 = scalar_select %p47, %s46, 7
  %s49 = scalar_lea.vmem %s1, %s48
  %s50 = ssub.s32 0, 0
  %s51 = smul.u32 8, %s50
  %s52 = ssub.s32 0, 0
  %s53 = smul.u32 8, %s52
  %p54 = scmp.lt.s32.totalorder %s53, 7
  %s55 = scalar_select %p54, %s53, 7
  %s56 = scalar_lea.vmem %s8, %s55
  %s57 = ssub.s32 0, 0
  %s58 = smul.u32 8, %s57
  %p60 = scmp.eq.s32.totalorder 0, 0
  // Predicated region
  $region30: #{birnn_gru_forward.4} parent=0 // pred_check
    %p61 = pneg %p60
  $region31: #{birnn_gru_forward.4} parent=0 // pred_check_branch
    %63 = sbr.rel (%p61) target = $region33
  $region32: #{birnn_gru_forward.4} parent=0 // pred_region
    %vm64 = vcmask 517120
    %65 = vst.msk [vmem:[#allocation2] sm:$0x3] %vm64, 0.0
  $region33: #{birnn_gru_forward.4} parent=0 // pred_fallthru
    _
  %v66 = vld [vmem:[%s2] sm:$0xff]
  %v67 = vld [vmem:[%s2 + $0x8] sm:$0xff]
  %v68 = vld [vmem:[%s2 + $0x10] sm:$0xff]
  %v69 = vld [vmem:[%s2 + $0x18] sm:$0xff]
  %v70 = vld [vmem:[%s2 + $0x20] sm:$0xff]
  %v71 = vld [vmem:[%s2 + $0x28] sm:$0xff]
  %v72 = vld [vmem:[%s2 + $0x30] sm:$0xff]
  %v73 = vld [vmem:[%s2 + $0x38] sm:$0xff]
  %v74 = vld [vmem:[%s3] sm:$0xff]
  %v75 = vld [vmem:[%s3 + $0x8] sm:$0xff]
  %v76 = vld [vmem:[%s3 + $0x10] sm:$0xff]
  %v77 = vld [vmem:[%s3 + $0x18] sm:$0xff]
  %v78 = vld [vmem:[%s3 + $0x20] sm:$0xff]
  %v79 = vld [vmem:[%s3 + $0x28] sm:$0xff]
  %v80 = vld [vmem:[%s3 + $0x30] sm:$0xff]
  %v81 = vld [vmem:[%s3 + $0x38] sm:$0xff]
  %v82 = vld [vmem:[%s5] sm:$0xff]
  %v83 = vld [vmem:[%s5 + $0x8] sm:$0xff]
  %v84 = vld [vmem:[%s5 + $0x10] sm:$0xff]
  %v85 = vld [vmem:[%s5 + $0x18] sm:$0xff]
  %v86 = vld [vmem:[%s5 + $0x20] sm:$0xff]
  %v87 = vld [vmem:[%s5 + $0x28] sm:$0xff]
  %v88 = vld [vmem:[%s5 + $0x30] sm:$0xff]
  %v89 = vld [vmem:[%s5 + $0x38] sm:$0xff]
  %v90 = vld [vmem:[%s4] sm:$0x3]
  %v92 = vlaneseq
  %v93 = vshrl.u32 %v92, 7
  %v94 = vsub.s32 0, %v93
  %v95 = vrot.slane %v90, %v94
  %v96 = vlaneseq
  %v97 = vshrl.u32 %v96, 7
  %v98 = vsub.s32 1, %v97
  %v99 = vrot.slane %v90, %v98
  %v102 = vld [vmem:[%s6] sm:$0x3]
  %v104 = vlaneseq
  %v105 = vshrl.u32 %v104, 7
  %v106 = vsub.s32 0, %v105
  %v107 = vrot.slane %v102, %v106
  %v108 = vlaneseq
  %v109 = vshrl.u32 %v108, 7
  %v110 = vsub.s32 1, %v109
  %v111 = vrot.slane %v102, %v110
  %v114 = vld [vmem:[#allocation2] sm:$0x3]
  %v115 = vld [vmem:[%s0] sm:$0x1]
  %s116 = scalar_lea.vmem %s49, 7
  %v117 = vld [vmem:[%s116] sm:$0x1]
  %v126 = vunpack.c.l.b16 %v74
  %v127 = vunpack.c.h.b16 %v74
  %v128 = vunpack.c.l.b16 %v75
  %v129 = vunpack.c.h.b16 %v75
  %v130 = vunpack.c.l.b16 %v76
  %v131 = vunpack.c.h.b16 %v76
  %v132 = vunpack.c.l.b16 %v77
  %v133 = vunpack.c.h.b16 %v77
  %v134 = vunpack.c.l.b16 %v78
  %v135 = vunpack.c.h.b16 %v78
  %v136 = vunpack.c.l.b16 %v79
  %v137 = vunpack.c.h.b16 %v79
  %v138 = vunpack.c.l.b16 %v80
  %v139 = vunpack.c.h.b16 %v80
  %v140 = vunpack.c.l.b16 %v81
  %v141 = vunpack.c.h.b16 %v81
  %v142 = vpack.c.b16 %v128, %v126
  %v143 = vpack.c.b16 %v129, %v127
  %v144 = vpack.c.b16 %v132, %v130
  %v145 = vpack.c.b16 %v133, %v131
  %v146 = vpack.c.b16 %v136, %v134
  %v147 = vpack.c.b16 %v137, %v135
  %v148 = vpack.c.b16 %v140, %v138
  %v149 = vpack.c.b16 %v141, %v139
  %vm158 = vcmask 523264
  %v160 = vsel %vm158, %v117, 0
  %162 = vmatprep.subr.bf16.mxu0 %v143
  %163 = vmatpush1.bf16.msra.mxu0 %v142
  %164 = vmatprep.subr.bf16.mxu0 %v145
  %165 = vmatpush1.bf16.msra.mxu0 %v144
  %166 = vmatprep.subr.bf16.mxu0 %v147
  %167 = vmatpush1.bf16.msra.mxu0 %v146
  %168 = vmatprep.subr.bf16.mxu0 %v149
  %169 = vmatpush1.bf16.msra.mxu0 %v148
  %170 = vmatprep.subr.bf16.mxu0 0
  %171 = vmatpush1.bf16.msra.mxu0 0
  %172 = vmatprep.subr.bf16.mxu0 0
  %173 = vmatpush1.bf16.msra.mxu0 0
  %174 = vmatprep.subr.bf16.mxu0 0
  %175 = vmatpush1.bf16.msra.mxu0 0
  %176 = vmatprep.subr.bf16.mxu0 0
  %177 = vmatpush1.bf16.msra.mxu0 0
  %178 = vmatprep.subr.bf16.mxu0 0
  %179 = vmatpush1.bf16.msra.mxu0 0
  %180 = vmatprep.subr.bf16.mxu0 0
  %181 = vmatpush1.bf16.msra.mxu0 0
  %182 = vmatprep.subr.bf16.mxu0 0
  %183 = vmatpush1.bf16.msra.mxu0 0
  %184 = vmatprep.subr.bf16.mxu0 0
  %185 = vmatpush1.bf16.msra.mxu0 0
  %186 = vmatprep.subr.bf16.mxu0 0
  %187 = vmatpush1.bf16.msra.mxu0 0
  %188 = vmatprep.subr.bf16.mxu0 0
  %189 = vmatpush1.bf16.msra.mxu0 0
  %190 = vmatprep.subr.bf16.mxu0 0
  %191 = vmatpush1.bf16.msra.mxu0 0
  %192 = vmatprep.subr.bf16.mxu0 0
  %193 = vmatpush1.bf16.msra.mxu0 0
  %194 = vmatprep.mubr.bf16.mxu0 0
  %195 = vmatmul.mubr.bf16.gmra.mrb[0].mxu0 %v160
  %v196 = vpop.f32.mrb[0].mxu0
  %v197 = vadd.f32 0.0, %v196
  %v198 = vpop.f32.mrb[0].mxu0
  %v199 = vadd.f32 0.0, %v198
  %v200 = vpop.f32.mrb[0].mxu0
  %v201 = vpop.f32.mrb[0].mxu0
  %202 = vdwg.mxu0
  %v211 = vunpack.c.l.b16 %v66
  %v212 = vunpack.c.h.b16 %v66
  %v213 = vunpack.c.l.b16 %v67
  %v214 = vunpack.c.h.b16 %v67
  %v215 = vunpack.c.l.b16 %v68
  %v216 = vunpack.c.h.b16 %v68
  %v217 = vunpack.c.l.b16 %v69
  %v218 = vunpack.c.h.b16 %v69
  %v219 = vunpack.c.l.b16 %v70
  %v220 = vunpack.c.h.b16 %v70
  %v221 = vunpack.c.l.b16 %v71
  %v222 = vunpack.c.h.b16 %v71
  %v223 = vunpack.c.l.b16 %v72
  %v224 = vunpack.c.h.b16 %v72
  %v225 = vunpack.c.l.b16 %v73
  %v226 = vunpack.c.h.b16 %v73
  %v227 = vpack.c.b16 %v213, %v211
  %v228 = vpack.c.b16 %v214, %v212
  %v229 = vpack.c.b16 %v217, %v215
  %v230 = vpack.c.b16 %v218, %v216
  %v231 = vpack.c.b16 %v221, %v219
  %v232 = vpack.c.b16 %v222, %v220
  %v233 = vpack.c.b16 %v225, %v223
  %v234 = vpack.c.b16 %v226, %v224
  %v244 = vsel %vm158, %v115, 0
  %246 = vmatprep.subr.bf16.mxu0 %v228
  %247 = vmatpush1.bf16.msra.mxu0 %v227
  %248 = vmatprep.subr.bf16.mxu0 %v230
  %249 = vmatpush1.bf16.msra.mxu0 %v229
  %250 = vmatprep.subr.bf16.mxu0 %v232
  %251 = vmatpush1.bf16.msra.mxu0 %v231
  %252 = vmatprep.subr.bf16.mxu0 %v234
  %253 = vmatpush1.bf16.msra.mxu0 %v233
  %254 = vmatprep.subr.bf16.mxu0 0
  %255 = vmatpush1.bf16.msra.mxu0 0
  %256 = vmatprep.subr.bf16.mxu0 0
  %257 = vmatpush1.bf16.msra.mxu0 0
  %258 = vmatprep.subr.bf16.mxu0 0
  %259 = vmatpush1.bf16.msra.mxu0 0
  %260 = vmatprep.subr.bf16.mxu0 0
  %261 = vmatpush1.bf16.msra.mxu0 0
  %262 = vmatprep.subr.bf16.mxu0 0
  %263 = vmatpush1.bf16.msra.mxu0 0
  %264 = vmatprep.subr.bf16.mxu0 0
  %265 = vmatpush1.bf16.msra.mxu0 0
  %266 = vmatprep.subr.bf16.mxu0 0
  %267 = vmatpush1.bf16.msra.mxu0 0
  %268 = vmatprep.subr.bf16.mxu0 0
  %269 = vmatpush1.bf16.msra.mxu0 0
  %270 = vmatprep.subr.bf16.mxu0 0
  %271 = vmatpush1.bf16.msra.mxu0 0
  %272 = vmatprep.subr.bf16.mxu0 0
  %273 = vmatpush1.bf16.msra.mxu0 0
  %274 = vmatprep.subr.bf16.mxu0 0
  %275 = vmatpush1.bf16.msra.mxu0 0
  %276 = vmatprep.subr.bf16.mxu0 0
  %277 = vmatpush1.bf16.msra.mxu0 0
  %278 = vmatprep.mubr.bf16.mxu0 0
  %279 = vmatmul.mubr.bf16.gmra.mrb[0].mxu0 %v244
  %v280 = vpop.f32.mrb[0].mxu0
  %v281 = vadd.f32 %v197, %v280
  %v282 = vpop.f32.mrb[0].mxu0
  %v283 = vadd.f32 %v199, %v282
  %v284 = vpop.f32.mrb[0].mxu0
  %v285 = vpop.f32.mrb[0].mxu0
  %286 = vdwg.mxu0
  %v287 = vadd.f32 %v281, %v95
  %v288 = vadd.f32 %v283, %v99
  %v289 = vpack.c.bf16 %v114, %v114
  %v298 = vunpack.c.l.b16 %v82
  %v299 = vunpack.c.h.b16 %v82
  %v300 = vunpack.c.l.b16 %v83
  %v301 = vunpack.c.h.b16 %v83
  %v302 = vunpack.c.l.b16 %v84
  %v303 = vunpack.c.h.b16 %v84
  %v304 = vunpack.c.l.b16 %v85
  %v305 = vunpack.c.h.b16 %v85
  %v306 = vunpack.c.l.b16 %v86
  %v307 = vunpack.c.h.b16 %v86
  %v308 = vunpack.c.l.b16 %v87
  %v309 = vunpack.c.h.b16 %v87
  %v310 = vunpack.c.l.b16 %v88
  %v311 = vunpack.c.h.b16 %v88
  %v312 = vunpack.c.l.b16 %v89
  %v313 = vunpack.c.h.b16 %v89
  %v314 = vpack.c.b16 %v300, %v298
  %v315 = vpack.c.b16 %v301, %v299
  %v316 = vpack.c.b16 %v304, %v302
  %v317 = vpack.c.b16 %v305, %v303
  %v318 = vpack.c.b16 %v308, %v306
  %v319 = vpack.c.b16 %v309, %v307
  %v320 = vpack.c.b16 %v312, %v310
  %v321 = vpack.c.b16 %v313, %v311
  %v331 = vsel %vm158, %v289, 0
  %333 = vmatprep.subr.bf16.mxu0 %v315
  %334 = vmatpush1.bf16.msra.mxu0 %v314
  %335 = vmatprep.subr.bf16.mxu0 %v317
  %336 = vmatpush1.bf16.msra.mxu0 %v316
  %337 = vmatprep.subr.bf16.mxu0 %v319
  %338 = vmatpush1.bf16.msra.mxu0 %v318
  %339 = vmatprep.subr.bf16.mxu0 %v321
  %340 = vmatpush1.bf16.msra.mxu0 %v320
  %341 = vmatprep.subr.bf16.mxu0 0
  %342 = vmatpush1.bf16.msra.mxu0 0
  %343 = vmatprep.subr.bf16.mxu0 0
  %344 = vmatpush1.bf16.msra.mxu0 0
  %345 = vmatprep.subr.bf16.mxu0 0
  %346 = vmatpush1.bf16.msra.mxu0 0
  %347 = vmatprep.subr.bf16.mxu0 0
  %348 = vmatpush1.bf16.msra.mxu0 0
  %349 = vmatprep.subr.bf16.mxu0 0
  %350 = vmatpush1.bf16.msra.mxu0 0
  %351 = vmatprep.subr.bf16.mxu0 0
  %352 = vmatpush1.bf16.msra.mxu0 0
  %353 = vmatprep.subr.bf16.mxu0 0
  %354 = vmatpush1.bf16.msra.mxu0 0
  %355 = vmatprep.subr.bf16.mxu0 0
  %356 = vmatpush1.bf16.msra.mxu0 0
  %357 = vmatprep.subr.bf16.mxu0 0
  %358 = vmatpush1.bf16.msra.mxu0 0
  %359 = vmatprep.subr.bf16.mxu0 0
  %360 = vmatpush1.bf16.msra.mxu0 0
  %361 = vmatprep.subr.bf16.mxu0 0
  %362 = vmatpush1.bf16.msra.mxu0 0
  %363 = vmatprep.subr.bf16.mxu0 0
  %364 = vmatpush1.bf16.msra.mxu0 0
  %365 = vmatprep.mubr.bf16.mxu0 0
  %366 = vmatmul.mubr.bf16.gmra.mrb[0].mxu0 %v331
  %v367 = vpop.f32.mrb[0].mxu0
  %v368 = vadd.f32 %v107, %v367
  %v369 = vpop.f32.mrb[0].mxu0
  %v370 = vadd.f32 %v111, %v369
  %v371 = vpop.f32.mrb[0].mxu0
  %v372 = vpop.f32.mrb[0].mxu0
  %373 = vdwg.mxu0
  %v374 = vadd.f32 %v287, %v368
  %v375 = vxor.u32 %v374, 2147483648
  %v376 = vmul.f32 %v375, 1.442695
  %v377 = vpow.pop %v376
  %v378 = vadd.f32 %v377, 1.0
  %v379 = vrcp.pop %v378
  %v380 = vmul.f32 1.0, %v379
  %v381 = vmul.f32 %v380, %v370
  %v382 = vadd.f32 %v288, %v381
  %v383 = vtanh.pop %v382
  %v384 = vsub.f32 1.0, %v380
  %386 = vrot.lane.b32.xlu0 %v383, 64
  %v387 = vpop.permute.xlu0 %386
  %v389 = vmul.f32 %v384, %v387
  %391 = vrot.lane.b32.xlu0 %v114, 64
  %v392 = vpop.permute.xlu0 %391
  %v394 = vmul.f32 %v380, %v392
  %v395 = vadd.f32 %v389, %v394
  %v396 = vpack.c.bf16 %v395, %v395
  %v399 = vunpack.c.l.s4 1966171168
  %v400 = vunpack.c.0.s8 %v399
  %v401 = vlaneseq
  %v402 = vshrl.u32 %v401, 7
  %v403 = vsub.s32 %v400, %v402
  %v404 = vrot.slane %v396, %v403
  %v406 = vunpack.c.l.s4 1966171168
  %v407 = vunpack.c.0.s8 %v406
  %v408 = vlaneseq
  %v409 = vshrl.u32 %v408, 7
  %v410 = vsub.s32 %v407, %v409
  %v411 = vrot.slane %v404, %v410
  %412 = vrot.lane.b32.xlu0 %v411, 64
  %v413 = vpop.permute.xlu0 %412
  %vm415 = vcmask 253952
  %416 = vst.msk [vmem:[%s7] sm:$0x1] %vm415, %v413
  %417 = vrot.lane.b32.xlu0 %v411, 32
  %v418 = vpop.permute.xlu0 %417
  %s420 = scalar_lea.vmem %s56, 7
  %421 = vst.msk [vmem:[%s420] sm:$0x1] %vm415, %v418
  %s422 = scalar_lea.vmem %s0, 1
  %v423 = vld [vmem:[%s422] sm:$0x1]
  %s424 = scalar_lea.vmem %s49, 6
  %v425 = vld [vmem:[%s424] sm:$0x1]
  %v427 = vsel %vm158, %v425, 0
  %429 = vmatprep.subr.bf16.mxu0 %v143
  %430 = vmatpush1.bf16.msra.mxu0 %v142
  %431 = vmatprep.subr.bf16.mxu0 %v145
  %432 = vmatpush1.bf16.msra.mxu0 %v144
  %433 = vmatprep.subr.bf16.mxu0 %v147
  %434 = vmatpush1.bf16.msra.mxu0 %v146
  %435 = vmatprep.subr.bf16.mxu0 %v149
  %436 = vmatpush1.bf16.msra.mxu0 %v148
  %437 = vmatprep.subr.bf16.mxu0 0
  %438 = vmatpush1.bf16.msra.mxu0 0
  %439 = vmatprep.subr.bf16.mxu0 0
  %440 = vmatpush1.bf16.msra.mxu0 0
  %441 = vmatprep.subr.bf16.mxu0 0
  %442 = vmatpush1.bf16.msra.mxu0 0
  %443 = vmatprep.subr.bf16.mxu0 0
  %444 = vmatpush1.bf16.msra.mxu0 0
  %445 = vmatprep.subr.bf16.mxu0 0
  %446 = vmatpush1.bf16.msra.mxu0 0
  %447 = vmatprep.subr.bf16.mxu0 0
  %448 = vmatpush1.bf16.msra.mxu0 0
  %449 = vmatprep.subr.bf16.mxu0 0
  %450 = vmatpush1.bf16.msra.mxu0 0
  %451 = vmatprep.subr.bf16.mxu0 0
  %452 = vmatpush1.bf16.msra.mxu0 0
  %453 = vmatprep.subr.bf16.mxu0 0
  %454 = vmatpush1.bf16.msra.mxu0 0
  %455 = vmatprep.subr.bf16.mxu0 0
  %456 = vmatpush1.bf16.msra.mxu0 0
  %457 = vmatprep.subr.bf16.mxu0 0
  %458 = vmatpush1.bf16.msra.mxu0 0
  %459 = vmatprep.subr.bf16.mxu0 0
  %460 = vmatpush1.bf16.msra.mxu0 0
  %461 = vmatprep.mubr.bf16.mxu0 0
  %462 = vmatmul.mubr.bf16.gmra.mrb[0].mxu0 %v427
  %v463 = vpop.f32.mrb[0].mxu0
  %v464 = vadd.f32 0.0, %v463
  %v465 = vpop.f32.mrb[0].mxu0
  %v466 = vadd.f32 0.0, %v465
  %v467 = vpop.f32.mrb[0].mxu0
  %v468 = vpop.f32.mrb[0].mxu0
  %469 = vdwg.mxu0
  %v471 = vsel %vm158, %v423, 0
  %473 = vmatprep.subr.bf16.mxu0 %v228
  %474 = vmatpush1.bf16.msra.mxu0 %v227
  %475 = vmatprep.subr.bf16.mxu0 %v230
  %476 = vmatpush1.bf16.msra.mxu0 %v229
  %477 = vmatprep.subr.bf16.mxu0 %v232
  %478 = vmatpush1.bf16.msra.mxu0 %v231
  %479 = vmatprep.subr.bf16.mxu0 %v234
  %480 = vmatpush1.bf16.msra.mxu0 %v233
  %481 = vmatprep.subr.bf16.mxu0 0
  %482 = vmatpush1.bf16.msra.mxu0 0
  %483 = vmatprep.subr.bf16.mxu0 0
  %484 = vmatpush1.bf16.msra.mxu0 0
  %485 = vmatprep.subr.bf16.mxu0 0
  %486 = vmatpush1.bf16.msra.mxu0 0
  %487 = vmatprep.subr.bf16.mxu0 0
  %488 = vmatpush1.bf16.msra.mxu0 0
  %489 = vmatprep.subr.bf16.mxu0 0
  %490 = vmatpush1.bf16.msra.mxu0 0
  %491 = vmatprep.subr.bf16.mxu0 0
  %492 = vmatpush1.bf16.msra.mxu0 0
  %493 = vmatprep.subr.bf16.mxu0 0
  %494 = vmatpush1.bf16.msra.mxu0 0
  %495 = vmatprep.subr.bf16.mxu0 0
  %496 = vmatpush1.bf16.msra.mxu0 0
  %497 = vmatprep.subr.bf16.mxu0 0
  %498 = vmatpush1.bf16.msra.mxu0 0
  %499 = vmatprep.subr.bf16.mxu0 0
  %500 = vmatpush1.bf16.msra.mxu0 0
  %501 = vmatprep.subr.bf16.mxu0 0
  %502 = vmatpush1.bf16.msra.mxu0 0
  %503 = vmatprep.subr.bf16.mxu0 0
  %504 = vmatpush1.bf16.msra.mxu0 0
  %505 = vmatprep.mubr.bf16.mxu0 0
  %506 = vmatmul.mubr.bf16.gmra.mrb[0].mxu0 %v471
  %v507 = vpop.f32.mrb[0].mxu0
  %v508 = vadd.f32 %v464, %v507
  %v509 = vpop.f32.mrb[0].mxu0
  %v510 = vadd.f32 %v466, %v509
  %v511 = vpop.f32.mrb[0].mxu0
  %v512 = vpop.f32.mrb[0].mxu0
  %513 = vdwg.mxu0
  %v514 = vadd.f32 %v508, %v95
  %v515 = vadd.f32 %v510, %v99
  %516 = vrot.lane.b32.xlu0 %v396, 64
  %v517 = vpop.permute.xlu0 %516
  %v519 = vsel %vm158, %v517, 0
  %521 = vmatprep.subr.bf16.mxu0 %v315
  %522 = vmatpush1.bf16.msra.mxu0 %v314
  %523 = vmatprep.subr.bf16.mxu0 %v317
  %524 = vmatpush1.bf16.msra.mxu0 %v316
  %525 = vmatprep.subr.bf16.mxu0 %v319
  %526 = vmatpush1.bf16.msra.mxu0 %v318
  %527 = vmatprep.subr.bf16.mxu0 %v321
  %528 = vmatpush1.bf16.msra.mxu0 %v320
  %529 = vmatprep.subr.bf16.mxu0 0
  %530 = vmatpush1.bf16.msra.mxu0 0
  %531 = vmatprep.subr.bf16.mxu0 0
  %532 = vmatpush1.bf16.msra.mxu0 0
  %533 = vmatprep.subr.bf16.mxu0 0
  %534 = vmatpush1.bf16.msra.mxu0 0
  %535 = vmatprep.subr.bf16.mxu0 0
  %536 = vmatpush1.bf16.msra.mxu0 0
  %537 = vmatprep.subr.bf16.mxu0 0
  %538 = vmatpush1.bf16.msra.mxu0 0
  %539 = vmatprep.subr.bf16.mxu0 0
  %540 = vmatpush1.bf16.msra.mxu0 0
  %541 = vmatprep.subr.bf16.mxu0 0
  %542 = vmatpush1.bf16.msra.mxu0 0
  %543 = vmatprep.subr.bf16.mxu0 0
  %544 = vmatpush1.bf16.msra.mxu0 0
  %545 = vmatprep.subr.bf16.mxu0 0
  %546 = vmatpush1.bf16.msra.mxu0 0
  %547 = vmatprep.subr.bf16.mxu0 0
  %548 = vmatpush1.bf16.msra.mxu0 0
  %549 = vmatprep.subr.bf16.mxu0 0
  %550 = vmatpush1.bf16.msra.mxu0 0
  %551 = vmatprep.subr.bf16.mxu0 0
  %552 = vmatpush1.bf16.msra.mxu0 0
  %553 = vmatprep.mubr.bf16.mxu0 0
  %554 = vmatmul.mubr.bf16.gmra.mrb[0].mxu0 %v519
  %v555 = vpop.f32.mrb[0].mxu0
  %v556 = vadd.f32 %v107, %v555
  %v557 = vpop.f32.mrb[0].mxu0
  %v558 = vadd.f32 %v111, %v557
  %v559 = vpop.f32.mrb[0].mxu0
  %v560 = vpop.f32.mrb[0].mxu0
  %561 = vdwg.mxu0
  %v562 = vadd.f32 %v514, %v556
  %v563 = vxor.u32 %v562, 2147483648
  %v564 = vmul.f32 %v563, 1.442695
  %v565 = vpow.pop %v564
  %v566 = vadd.f32 %v565, 1.0
  %v567 = vrcp.pop %v566
  %v568 = vmul.f32 1.0, %v567
  %v569 = vmul.f32 %v568, %v558
  %v570 = vadd.f32 %v515, %v569
  %v571 = vtanh.pop %v570
  %v572 = vsub.f32 1.0, %v568
  %574 = vrot.lane.b32.xlu0 %v571, 64
  %v575 = vpop.permute.xlu0 %574
  %v577 = vmul.f32 %v572, %v575
  %v578 = vmul.f32 %v568, %v395
  %v579 = vadd.f32 %v577, %v578
  %v580 = vpack.c.bf16 %v579, %v579
  %v583 = vunpack.c.l.s4 1966171168
  %v584 = vunpack.c.0.s8 %v583
  %v585 = vlaneseq
  %v586 = vshrl.u32 %v585, 7
  %v587 = vsub.s32 %v584, %v586
  %v588 = vrot.slane %v580, %v587
  %v590 = vunpack.c.l.s4 1966171168
  %v591 = vunpack.c.0.s8 %v590
  %v592 = vlaneseq
  %v593 = vshrl.u32 %v592, 7
  %v594 = vsub.s32 %v591, %v593
  %v595 = vrot.slane %v588, %v594
  %596 = vrot.lane.b32.xlu0 %v595, 64
  %v597 = vpop.permute.xlu0 %596
  %s599 = scalar_lea.vmem %s7, 1
  %600 = vst.msk [vmem:[%s599] sm:$0x1] %vm415, %v597
  %601 = vrot.lane.b32.xlu0 %v595, 32
  %v602 = vpop.permute.xlu0 %601
  %s604 = scalar_lea.vmem %s56, 6
  %605 = vst.msk [vmem:[%s604] sm:$0x1] %vm415, %v602
  %s606 = scalar_lea.vmem %s0, 2
  %v607 = vld [vmem:[%s606] sm:$0x1]
  %s608 = scalar_lea.vmem %s49, 5
  %v609 = vld [vmem:[%s608] sm:$0x1]
  %v611 = vsel %vm158, %v609, 0
  %613 = vmatprep.subr.bf16.mxu0 %v143
  %614 = vmatpush1.bf16.msra.mxu0 %v142
  %615 = vmatprep.subr.bf16.mxu0 %v145
  %616 = vmatpush1.bf16.msra.mxu0 %v144
  %617 = vmatprep.subr.bf16.mxu0 %v147
  %618 = vmatpush1.bf16.msra.mxu0 %v146
  %619 = vmatprep.subr.bf16.mxu0 %v149
  %620 = vmatpush1.bf16.msra.mxu0 %v148
  %621 = vmatprep.subr.bf16.mxu0 0
  %622 = vmatpush1.bf16.msra.mxu0 0
  %623 = vmatprep.subr.bf16.mxu0 0
  %624 = vmatpush1.bf16.msra.mxu0 0
  %625 = vmatprep.subr.bf16.mxu0 0
  %626 = vmatpush1.bf16.msra.mxu0 0
  %627 = vmatprep.subr.bf16.mxu0 0
  %628 = vmatpush1.bf16.msra.mxu0 0
  %629 = vmatprep.subr.bf16.mxu0 0
  %630 = vmatpush1.bf16.msra.mxu0 0
  %631 = vmatprep.subr.bf16.mxu0 0
  %632 = vmatpush1.bf16.msra.mxu0 0
  %633 = vmatprep.subr.bf16.mxu0 0
  %634 = vmatpush1.bf16.msra.mxu0 0
  %635 = vmatprep.subr.bf16.mxu0 0
  %636 = vmatpush1.bf16.msra.mxu0 0
  %637 = vmatprep.subr.bf16.mxu0 0
  %638 = vmatpush1.bf16.msra.mxu0 0
  %639 = vmatprep.subr.bf16.mxu0 0
  %640 = vmatpush1.bf16.msra.mxu0 0
  %641 = vmatprep.subr.bf16.mxu0 0
  %642 = vmatpush1.bf16.msra.mxu0 0
  %643 = vmatprep.subr.bf16.mxu0 0
  %644 = vmatpush1.bf16.msra.mxu0 0
  %645 = vmatprep.mubr.bf16.mxu0 0
  %646 = vmatmul.mubr.bf16.gmra.mrb[0].mxu0 %v611
  %v647 = vpop.f32.mrb[0].mxu0
  %v648 = vadd.f32 0.0, %v647
  %v649 = vpop.f32.mrb[0].mxu0
  %v650 = vadd.f32 0.0, %v649
  %v651 = vpop.f32.mrb[0].mxu0
  %v652 = vpop.f32.mrb[0].mxu0
  %653 = vdwg.mxu0
  %v655 = vsel %vm158, %v607, 0
  %657 = vmatprep.subr.bf16.mxu0 %v228
  %658 = vmatpush1.bf16.msra.mxu0 %v227
  %659 = vmatprep.subr.bf16.mxu0 %v230
  %660 = vmatpush1.bf16.msra.mxu0 %v229
  %661 = vmatprep.subr.bf16.mxu0 %v232
  %662 = vmatpush1.bf16.msra.mxu0 %v231
  %663 = vmatprep.subr.bf16.mxu0 %v234
  %664 = vmatpush1.bf16.msra.mxu0 %v233
  %665 = vmatprep.subr.bf16.mxu0 0
  %666 = vmatpush1.bf16.msra.mxu0 0
  %667 = vmatprep.subr.bf16.mxu0 0
  %668 = vmatpush1.bf16.msra.mxu0 0
  %669 = vmatprep.subr.bf16.mxu0 0
  %670 = vmatpush1.bf16.msra.mxu0 0
  %671 = vmatprep.subr.bf16.mxu0 0
  %672 = vmatpush1.bf16.msra.mxu0 0
  %673 = vmatprep.subr.bf16.mxu0 0
  %674 = vmatpush1.bf16.msra.mxu0 0
  %675 = vmatprep.subr.bf16.mxu0 0
  %676 = vmatpush1.bf16.msra.mxu0 0
  %677 = vmatprep.subr.bf16.mxu0 0
  %678 = vmatpush1.bf16.msra.mxu0 0
  %679 = vmatprep.subr.bf16.mxu0 0
  %680 = vmatpush1.bf16.msra.mxu0 0
  %681 = vmatprep.subr.bf16.mxu0 0
  %682 = vmatpush1.bf16.msra.mxu0 0
  %683 = vmatprep.subr.bf16.mxu0 0
  %684 = vmatpush1.bf16.msra.mxu0 0
  %685 = vmatprep.subr.bf16.mxu0 0
  %686 = vmatpush1.bf16.msra.mxu0 0
  %687 = vmatprep.subr.bf16.mxu0 0
  %688 = vmatpush1.bf16.msra.mxu0 0
  %689 = vmatprep.mubr.bf16.mxu0 0
  %690 = vmatmul.mubr.bf16.gmra.mrb[0].mxu0 %v655
  %v691 = vpop.f32.mrb[0].mxu0
  %v692 = vadd.f32 %v648, %v691
  %v693 = vpop.f32.mrb[0].mxu0
  %v694 = vadd.f32 %v650, %v693
  %v695 = vpop.f32.mrb[0].mxu0
  %v696 = vpop.f32.mrb[0].mxu0
  %697 = vdwg.mxu0
  %v698 = vadd.f32 %v692, %v95
  %v699 = vadd.f32 %v694, %v99
  %700 = vrot.lane.b32.xlu0 %v580, 64
  %v701 = vpop.permute.xlu0 %700
  %v703 = vsel %vm158, %v701, 0
  %705 = vmatprep.subr.bf16.mxu0 %v315
  %706 = vmatpush1.bf16.msra.mxu0 %v314
  %707 = vmatprep.subr.bf16.mxu0 %v317
  %708 = vmatpush1.bf16.msra.mxu0 %v316
  %709 = vmatprep.subr.bf16.mxu0 %v319
  %710 = vmatpush1.bf16.msra.mxu0 %v318
  %711 = vmatprep.subr.bf16.mxu0 %v321
  %712 = vmatpush1.bf16.msra.mxu0 %v320
  %713 = vmatprep.subr.bf16.mxu0 0
  %714 = vmatpush1.bf16.msra.mxu0 0
  %715 = vmatprep.subr.bf16.mxu0 0
  %716 = vmatpush1.bf16.msra.mxu0 0
  %717 = vmatprep.subr.bf16.mxu0 0
  %718 = vmatpush1.bf16.msra.mxu0 0
  %719 = vmatprep.subr.bf16.mxu0 0
  %720 = vmatpush1.bf16.msra.mxu0 0
  %721 = vmatprep.subr.bf16.mxu0 0
  %722 = vmatpush1.bf16.msra.mxu0 0
  %723 = vmatprep.subr.bf16.mxu0 0
  %724 = vmatpush1.bf16.msra.mxu0 0
  %725 = vmatprep.subr.bf16.mxu0 0
  %726 = vmatpush1.bf16.msra.mxu0 0
  %727 = vmatprep.subr.bf16.mxu0 0
  %728 = vmatpush1.bf16.msra.mxu0 0
  %729 = vmatprep.subr.bf16.mxu0 0
  %730 = vmatpush1.bf16.msra.mxu0 0
  %731 = vmatprep.subr.bf16.mxu0 0
  %732 = vmatpush1.bf16.msra.mxu0 0
  %733 = vmatprep.subr.bf16.mxu0 0
  %734 = vmatpush1.bf16.msra.mxu0 0
  %735 = vmatprep.subr.bf16.mxu0 0
  %736 = vmatpush1.bf16.msra.mxu0 0
  %737 = vmatprep.mubr.bf16.mxu0 0
  %738 = vmatmul.mubr.bf16.gmra.mrb[0].mxu0 %v703
  %v739 = vpop.f32.mrb[0].mxu0
  %v740 = vadd.f32 %v107, %v739
  %v741 = vpop.f32.mrb[0].mxu0
  %v742 = vadd.f32 %v111, %v741
  %v743 = vpop.f32.mrb[0].mxu0
  %v744 = vpop.f32.mrb[0].mxu0
  %745 = vdwg.mxu0
  %v746 = vadd.f32 %v698, %v740
  %v747 = vxor.u32 %v746, 2147483648
  %v748 = vmul.f32 %v747, 1.442695
  %v749 = vpow.pop %v748
  %v750 = vadd.f32 %v749, 1.0
  %v751 = vrcp.pop %v750
  %v752 = vmul.f32 1.0, %v751
  %v753 = vmul.f32 %v752, %v742
  %v754 = vadd.f32 %v699, %v753
  %v755 = vtanh.pop %v754
  %v756 = vsub.f32 1.0, %v752
  %758 = vrot.lane.b32.xlu0 %v755, 64
  %v759 = vpop.permute.xlu0 %758
  %v761 = vmul.f32 %v756, %v759
  %v762 = vmul.f32 %v752, %v579
  %v763 = vadd.f32 %v761, %v762
  %v764 = vpack.c.bf16 %v763, %v763
  %v767 = vunpack.c.l.s4 1966171168
  %v768 = vunpack.c.0.s8 %v767
  %v769 = vlaneseq
  %v770 = vshrl.u32 %v769, 7
  %v771 = vsub.s32 %v768, %v770
  %v772 = vrot.slane %v764, %v771
  %v774 = vunpack.c.l.s4 1966171168
  %v775 = vunpack.c.0.s8 %v774
  %v776 = vlaneseq
  %v777 = vshrl.u32 %v776, 7
  %v778 = vsub.s32 %v775, %v777
  %v779 = vrot.slane %v772, %v778
  %780 = vrot.lane.b32.xlu0 %v779, 64
  %v781 = vpop.permute.xlu0 %780
  %s783 = scalar_lea.vmem %s7, 2
  %784 = vst.msk [vmem:[%s783] sm:$0x1] %vm415, %v781
  %785 = vrot.lane.b32.xlu0 %v779, 32
  %v786 = vpop.permute.xlu0 %785
  %s788 = scalar_lea.vmem %s56, 5
  %789 = vst.msk [vmem:[%s788] sm:$0x1] %vm415, %v786
  %s790 = scalar_lea.vmem %s0, 3
  %v791 = vld [vmem:[%s790] sm:$0x1]
  %s792 = scalar_lea.vmem %s49, 4
  %v793 = vld [vmem:[%s792] sm:$0x1]
  %v795 = vsel %vm158, %v793, 0
  %797 = vmatprep.subr.bf16.mxu0 %v143
  %798 = vmatpush1.bf16.msra.mxu0 %v142
  %799 = vmatprep.subr.bf16.mxu0 %v145
  %800 = vmatpush1.bf16.msra.mxu0 %v144
  %801 = vmatprep.subr.bf16.mxu0 %v147
  %802 = vmatpush1.bf16.msra.mxu0 %v146
  %803 = vmatprep.subr.bf16.mxu0 %v149
  %804 = vmatpush1.bf16.msra.mxu0 %v148
  %805 = vmatprep.subr.bf16.mxu0 0
  %806 = vmatpush1.bf16.msra.mxu0 0
  %807 = vmatprep.subr.bf16.mxu0 0
  %808 = vmatpush1.bf16.msra.mxu0 0
  %809 = vmatprep.subr.bf16.mxu0 0
  %810 = vmatpush1.bf16.msra.mxu0 0
  %811 = vmatprep.subr.bf16.mxu0 0
  %812 = vmatpush1.bf16.msra.mxu0 0
  %813 = vmatprep.subr.bf16.mxu0 0
  %814 = vmatpush1.bf16.msra.mxu0 0
  %815 = vmatprep.subr.bf16.mxu0 0
  %816 = vmatpush1.bf16.msra.mxu0 0
  %817 = vmatprep.subr.bf16.mxu0 0
  %818 = vmatpush1.bf16.msra.mxu0 0
  %819 = vmatprep.subr.bf16.mxu0 0
  %820 = vmatpush1.bf16.msra.mxu0 0
  %821 = vmatprep.subr.bf16.mxu0 0
  %822 = vmatpush1.bf16.msra.mxu0 0
  %823 = vmatprep.subr.bf16.mxu0 0
  %824 = vmatpush1.bf16.msra.mxu0 0
  %825 = vmatprep.subr.bf16.mxu0 0
  %826 = vmatpush1.bf16.msra.mxu0 0
  %827 = vmatprep.subr.bf16.mxu0 0
  %828 = vmatpush1.bf16.msra.mxu0 0
  %829 = vmatprep.mubr.bf16.mxu0 0
  %830 = vmatmul.mubr.bf16.gmra.mrb[0].mxu0 %v795
  %v831 = vpop.f32.mrb[0].mxu0
  %v832 = vadd.f32 0.0, %v831
  %v833 = vpop.f32.mrb[0].mxu0
  %v834 = vadd.f32 0.0, %v833
  %v835 = vpop.f32.mrb[0].mxu0
  %v836 = vpop.f32.mrb[0].mxu0
  %837 = vdwg.mxu0
  %v839 = vsel %vm158, %v791, 0
  %841 = vmatprep.subr.bf16.mxu0 %v228
  %842 = vmatpush1.bf16.msra.mxu0 %v227
  %843 = vmatprep.subr.bf16.mxu0 %v230
  %844 = vmatpush1.bf16.msra.mxu0 %v229
  %845 = vmatprep.subr.bf16.mxu0 %v232
  %846 = vmatpush1.bf16.msra.mxu0 %v231
  %847 = vmatprep.subr.bf16.mxu0 %v234
  %848 = vmatpush1.bf16.msra.mxu0 %v233
  %849 = vmatprep.subr.bf16.mxu0 0
  %850 = vmatpush1.bf16.msra.mxu0 0
  %851 = vmatprep.subr.bf16.mxu0 0
  %852 = vmatpush1.bf16.msra.mxu0 0
  %853 = vmatprep.subr.bf16.mxu0 0
  %854 = vmatpush1.bf16.msra.mxu0 0
  %855 = vmatprep.subr.bf16.mxu0 0
  %856 = vmatpush1.bf16.msra.mxu0 0
  %857 = vmatprep.subr.bf16.mxu0 0
  %858 = vmatpush1.bf16.msra.mxu0 0
  %859 = vmatprep.subr.bf16.mxu0 0
  %860 = vmatpush1.bf16.msra.mxu0 0
  %861 = vmatprep.subr.bf16.mxu0 0
  %862 = vmatpush1.bf16.msra.mxu0 0
  %863 = vmatprep.subr.bf16.mxu0 0
  %864 = vmatpush1.bf16.msra.mxu0 0
  %865 = vmatprep.subr.bf16.mxu0 0
  %866 = vmatpush1.bf16.msra.mxu0 0
  %867 = vmatprep.subr.bf16.mxu0 0
  %868 = vmatpush1.bf16.msra.mxu0 0
  %869 = vmatprep.subr.bf16.mxu0 0
  %870 = vmatpush1.bf16.msra.mxu0 0
  %871 = vmatprep.subr.bf16.mxu0 0
  %872 = vmatpush1.bf16.msra.mxu0 0
  %873 = vmatprep.mubr.bf16.mxu0 0
  %874 = vmatmul.mubr.bf16.gmra.mrb[0].mxu0 %v839
  %v875 = vpop.f32.mrb[0].mxu0
  %v876 = vadd.f32 %v832, %v875
  %v877 = vpop.f32.mrb[0].mxu0
  %v878 = vadd.f32 %v834, %v877
  %v879 = vpop.f32.mrb[0].mxu0
  %v880 = vpop.f32.mrb[0].mxu0
  %881 = vdwg.mxu0
  %v882 = vadd.f32 %v876, %v95
  %v883 = vadd.f32 %v878, %v99
  %884 = vrot.lane.b32.xlu0 %v764, 64
  %v885 = vpop.permute.xlu0 %884
  %v887 = vsel %vm158, %v885, 0
  %889 = vmatprep.subr.bf16.mxu0 %v315
  %890 = vmatpush1.bf16.msra.mxu0 %v314
  %891 = vmatprep.subr.bf16.mxu0 %v317
  %892 = vmatpush1.bf16.msra.mxu0 %v316
  %893 = vmatprep.subr.bf16.mxu0 %v319
  %894 = vmatpush1.bf16.msra.mxu0 %v318
  %895 = vmatprep.subr.bf16.mxu0 %v321
  %896 = vmatpush1.bf16.msra.mxu0 %v320
  %897 = vmatprep.subr.bf16.mxu0 0
  %898 = vmatpush1.bf16.msra.mxu0 0
  %899 = vmatprep.subr.bf16.mxu0 0
  %900 = vmatpush1.bf16.msra.mxu0 0
  %901 = vmatprep.subr.bf16.mxu0 0
  %902 = vmatpush1.bf16.msra.mxu0 0
  %903 = vmatprep.subr.bf16.mxu0 0
  %904 = vmatpush1.bf16.msra.mxu0 0
  %905 = vmatprep.subr.bf16.mxu0 0
  %906 = vmatpush1.bf16.msra.mxu0 0
  %907 = vmatprep.subr.bf16.mxu0 0
  %908 = vmatpush1.bf16.msra.mxu0 0
  %909 = vmatprep.subr.bf16.mxu0 0
  %910 = vmatpush1.bf16.msra.mxu0 0
  %911 = vmatprep.subr.bf16.mxu0 0
  %912 = vmatpush1.bf16.msra.mxu0 0
  %913 = vmatprep.subr.bf16.mxu0 0
  %914 = vmatpush1.bf16.msra.mxu0 0
  %915 = vmatprep.subr.bf16.mxu0 0
  %916 = vmatpush1.bf16.msra.mxu0 0
  %917 = vmatprep.subr.bf16.mxu0 0
  %918 = vmatpush1.bf16.msra.mxu0 0
  %919 = vmatprep.subr.bf16.mxu0 0
  %920 = vmatpush1.bf16.msra.mxu0 0
  %921 = vmatprep.mubr.bf16.mxu0 0
  %922 = vmatmul.mubr.bf16.gmra.mrb[0].mxu0 %v887
  %v923 = vpop.f32.mrb[0].mxu0
  %v924 = vadd.f32 %v107, %v923
  %v925 = vpop.f32.mrb[0].mxu0
  %v926 = vadd.f32 %v111, %v925
  %v927 = vpop.f32.mrb[0].mxu0
  %v928 = vpop.f32.mrb[0].mxu0
  %929 = vdwg.mxu0
  %v930 = vadd.f32 %v882, %v924
  %v931 = vxor.u32 %v930, 2147483648
  %v932 = vmul.f32 %v931, 1.442695
  %v933 = vpow.pop %v932
  %v934 = vadd.f32 %v933, 1.0
  %v935 = vrcp.pop %v934
  %v936 = vmul.f32 1.0, %v935
  %v937 = vmul.f32 %v936, %v926
  %v938 = vadd.f32 %v883, %v937
  %v939 = vtanh.pop %v938
  %v940 = vsub.f32 1.0, %v936
  %942 = vrot.lane.b32.xlu0 %v939, 64
  %v943 = vpop.permute.xlu0 %942
  %v945 = vmul.f32 %v940, %v943
  %v946 = vmul.f32 %v936, %v763
  %v947 = vadd.f32 %v945, %v946
  %v948 = vpack.c.bf16 %v947, %v947
  %v951 = vunpack.c.l.s4 1966171168
  %v952 = vunpack.c.0.s8 %v951
  %v953 = vlaneseq
  %v954 = vshrl.u32 %v953, 7
  %v955 = vsub.s32 %v952, %v954
  %v956 = vrot.slane %v948, %v955
  %v958 = vunpack.c.l.s4 1966171168
  %v959 = vunpack.c.0.s8 %v958
  %v960 = vlaneseq
  %v961 = vshrl.u32 %v960, 7
  %v962 = vsub.s32 %v959, %v961
  %v963 = vrot.slane %v956, %v962
  %964 = vrot.lane.b32.xlu0 %v963, 64
  %v965 = vpop.permute.xlu0 %964
  %s967 = scalar_lea.vmem %s7, 3
  %968 = vst.msk [vmem:[%s967] sm:$0x1] %vm415, %v965
  %969 = vrot.lane.b32.xlu0 %v963, 32
  %v970 = vpop.permute.xlu0 %969
  %s972 = scalar_lea.vmem %s56, 4
  %973 = vst.msk [vmem:[%s972] sm:$0x1] %vm415, %v970
  %s974 = scalar_lea.vmem %s0, 4
  %v975 = vld [vmem:[%s974] sm:$0x1]
  %s976 = scalar_lea.vmem %s49, 3
  %v977 = vld [vmem:[%s976] sm:$0x1]
  %v979 = vsel %vm158, %v977, 0
  %981 = vmatprep.subr.bf16.mxu0 %v143
  %982 = vmatpush1.bf16.msra.mxu0 %v142
  %983 = vmatprep.subr.bf16.mxu0 %v145
  %984 = vmatpush1.bf16.msra.mxu0 %v144
  %985 = vmatprep.subr.bf16.mxu0 %v147
  %986 = vmatpush1.bf16.msra.mxu0 %v146
  %987 = vmatprep.subr.bf16.mxu0 %v149
  %988 = vmatpush1.bf16.msra.mxu0 %v148
  %989 = vmatprep.subr.bf16.mxu0 0
  %990 = vmatpush1.bf16.msra.mxu0 0
  %991 = vmatprep.subr.bf16.mxu0 0
  %992 = vmatpush1.bf16.msra.mxu0 0
  %993 = vmatprep.subr.bf16.mxu0 0
  %994 = vmatpush1.bf16.msra.mxu0 0
  %995 = vmatprep.subr.bf16.mxu0 0
  %996 = vmatpush1.bf16.msra.mxu0 0
  %997 = vmatprep.subr.bf16.mxu0 0
  %998 = vmatpush1.bf16.msra.mxu0 0
  %999 = vmatprep.subr.bf16.mxu0 0
  %1000 = vmatpush1.bf16.msra.mxu0 0
  %1001 = vmatprep.subr.bf16.mxu0 0
  %1002 = vmatpush1.bf16.msra.mxu0 0
  %1003 = vmatprep.subr.bf16.mxu0 0
  %1004 = vmatpush1.bf16.msra.mxu0 0
  %1005 = vmatprep.subr.bf16.mxu0 0
  %1006 = vmatpush1.bf16.msra.mxu0 0
  %1007 = vmatprep.subr.bf16.mxu0 0
  %1008 = vmatpush1.bf16.msra.mxu0 0
  %1009 = vmatprep.subr.bf16.mxu0 0
  %1010 = vmatpush1.bf16.msra.mxu0 0
  %1011 = vmatprep.subr.bf16.mxu0 0
  %1012 = vmatpush1.bf16.msra.mxu0 0
  %1013 = vmatprep.mubr.bf16.mxu0 0
  %1014 = vmatmul.mubr.bf16.gmra.mrb[0].mxu0 %v979
  %v1015 = vpop.f32.mrb[0].mxu0
  %v1016 = vadd.f32 0.0, %v1015
  %v1017 = vpop.f32.mrb[0].mxu0
  %v1018 = vadd.f32 0.0, %v1017
  %v1019 = vpop.f32.mrb[0].mxu0
  %v1020 = vpop.f32.mrb[0].mxu0
  %1021 = vdwg.mxu0
  %v1023 = vsel %vm158, %v975, 0
  %1025 = vmatprep.subr.bf16.mxu0 %v228
  %1026 = vmatpush1.bf16.msra.mxu0 %v227
  %1027 = vmatprep.subr.bf16.mxu0 %v230
  %1028 = vmatpush1.bf16.msra.mxu0 %v229
  %1029 = vmatprep.subr.bf16.mxu0 %v232
  %1030 = vmatpush1.bf16.msra.mxu0 %v231
  %1031 = vmatprep.subr.bf16.mxu0 %v234
  %1032 = vmatpush1.bf16.msra.mxu0 %v233
  %1033 = vmatprep.subr.bf16.mxu0 0
  %1034 = vmatpush1.bf16.msra.mxu0 0
  %1035 = vmatprep.subr.bf16.mxu0 0
  %1036 = vmatpush1.bf16.msra.mxu0 0
  %1037 = vmatprep.subr.bf16.mxu0 0
  %1038 = vmatpush1.bf16.msra.mxu0 0
  %1039 = vmatprep.subr.bf16.mxu0 0
  %1040 = vmatpush1.bf16.msra.mxu0 0
  %1041 = vmatprep.subr.bf16.mxu0 0
  %1042 = vmatpush1.bf16.msra.mxu0 0
  %1043 = vmatprep.subr.bf16.mxu0 0
  %1044 = vmatpush1.bf16.msra.mxu0 0
  %1045 = vmatprep.subr.bf16.mxu0 0
  %1046 = vmatpush1.bf16.msra.mxu0 0
  %1047 = vmatprep.subr.bf16.mxu0 0
  %1048 = vmatpush1.bf16.msra.mxu0 0
  %1049 = vmatprep.subr.bf16.mxu0 0
  %1050 = vmatpush1.bf16.msra.mxu0 0
  %1051 = vmatprep.subr.bf16.mxu0 0
  %1052 = vmatpush1.bf16.msra.mxu0 0
  %1053 = vmatprep.subr.bf16.mxu0 0
  %1054 = vmatpush1.bf16.msra.mxu0 0
  %1055 = vmatprep.subr.bf16.mxu0 0
  %1056 = vmatpush1.bf16.msra.mxu0 0
  %1057 = vmatprep.mubr.bf16.mxu0 0
  %1058 = vmatmul.mubr.bf16.gmra.mrb[0].mxu0 %v1023
  %v1059 = vpop.f32.mrb[0].mxu0
  %v1060 = vadd.f32 %v1016, %v1059
  %v1061 = vpop.f32.mrb[0].mxu0
  %v1062 = vadd.f32 %v1018, %v1061
  %v1063 = vpop.f32.mrb[0].mxu0
  %v1064 = vpop.f32.mrb[0].mxu0
  %1065 = vdwg.mxu0
  %v1066 = vadd.f32 %v1060, %v95
  %v1067 = vadd.f32 %v1062, %v99
  %1068 = vrot.lane.b32.xlu0 %v948, 64
  %v1069 = vpop.permute.xlu0 %1068
  %v1071 = vsel %vm158, %v1069, 0
  %1073 = vmatprep.subr.bf16.mxu0 %v315
  %1074 = vmatpush1.bf16.msra.mxu0 %v314
  %1075 = vmatprep.subr.bf16.mxu0 %v317
  %1076 = vmatpush1.bf16.msra.mxu0 %v316
  %1077 = vmatprep.subr.bf16.mxu0 %v319
  %1078 = vmatpush1.bf16.msra.mxu0 %v318
  %1079 = vmatprep.subr.bf16.mxu0 %v321
  %1080 = vmatpush1.bf16.msra.mxu0 %v320
  %1081 = vmatprep.subr.bf16.mxu0 0
  %1082 = vmatpush1.bf16.msra.mxu0 0
  %1083 = vmatprep.subr.bf16.mxu0 0
  %1084 = vmatpush1.bf16.msra.mxu0 0
  %1085 = vmatprep.subr.bf16.mxu0 0
  %1086 = vmatpush1.bf16.msra.mxu0 0
  %1087 = vmatprep.subr.bf16.mxu0 0
  %1088 = vmatpush1.bf16.msra.mxu0 0
  %1089 = vmatprep.subr.bf16.mxu0 0
  %1090 = vmatpush1.bf16.msra.mxu0 0
  %1091 = vmatprep.subr.bf16.mxu0 0
  %1092 = vmatpush1.bf16.msra.mxu0 0
  %1093 = vmatprep.subr.bf16.mxu0 0
  %1094 = vmatpush1.bf16.msra.mxu0 0
  %1095 = vmatprep.subr.bf16.mxu0 0
  %1096 = vmatpush1.bf16.msra.mxu0 0
  %1097 = vmatprep.subr.bf16.mxu0 0
  %1098 = vmatpush1.bf16.msra.mxu0 0
  %1099 = vmatprep.subr.bf16.mxu0 0
  %1100 = vmatpush1.bf16.msra.mxu0 0
  %1101 = vmatprep.subr.bf16.mxu0 0
  %1102 = vmatpush1.bf16.msra.mxu0 0
  %1103 = vmatprep.subr.bf16.mxu0 0
  %1104 = vmatpush1.bf16.msra.mxu0 0
  %1105 = vmatprep.mubr.bf16.mxu0 0
  %1106 = vmatmul.mubr.bf16.gmra.mrb[0].mxu0 %v1071
  %v1107 = vpop.f32.mrb[0].mxu0
  %v1108 = vadd.f32 %v107, %v1107
  %v1109 = vpop.f32.mrb[0].mxu0
  %v1110 = vadd.f32 %v111, %v1109
  %v1111 = vpop.f32.mrb[0].mxu0
  %v1112 = vpop.f32.mrb[0].mxu0
  %1113 = vdwg.mxu0
  %v1114 = vadd.f32 %v1066, %v1108
  %v1115 = vxor.u32 %v1114, 2147483648
  %v1116 = vmul.f32 %v1115, 1.442695
  %v1117 = vpow.pop %v1116
  %v1118 = vadd.f32 %v1117, 1.0
  %v1119 = vrcp.pop %v1118
  %v1120 = vmul.f32 1.0, %v1119
  %v1121 = vmul.f32 %v1120, %v1110
  %v1122 = vadd.f32 %v1067, %v1121
  %v1123 = vtanh.pop %v1122
  %v1124 = vsub.f32 1.0, %v1120
  %1126 = vrot.lane.b32.xlu0 %v1123, 64
  %v1127 = vpop.permute.xlu0 %1126
  %v1129 = vmul.f32 %v1124, %v1127
  %v1130 = vmul.f32 %v1120, %v947
  %v1131 = vadd.f32 %v1129, %v1130
  %v1132 = vpack.c.bf16 %v1131, %v1131
  %v1135 = vunpack.c.l.s4 1966171168
  %v1136 = vunpack.c.0.s8 %v1135
  %v1137 = vlaneseq
  %v1138 = vshrl.u32 %v1137, 7
  %v1139 = vsub.s32 %v1136, %v1138
  %v1140 = vrot.slane %v1132, %v1139
  %v1142 = vunpack.c.l.s4 1966171168
  %v1143 = vunpack.c.0.s8 %v1142
  %v1144 = vlaneseq
  %v1145 = vshrl.u32 %v1144, 7
  %v1146 = vsub.s32 %v1143, %v1145
  %v1147 = vrot.slane %v1140, %v1146
  %1148 = vrot.lane.b32.xlu0 %v1147, 64
  %v1149 = vpop.permute.xlu0 %1148
  %s1151 = scalar_lea.vmem %s7, 4
  %1152 = vst.msk [vmem:[%s1151] sm:$0x1] %vm415, %v1149
  %1153 = vrot.lane.b32.xlu0 %v1147, 32
  %v1154 = vpop.permute.xlu0 %1153
  %s1156 = scalar_lea.vmem %s56, 3
  %1157 = vst.msk [vmem:[%s1156] sm:$0x1] %vm415, %v1154
  %s1158 = scalar_lea.vmem %s0, 5
  %v1159 = vld [vmem:[%s1158] sm:$0x1]
  %s1160 = scalar_lea.vmem %s49, 2
  %v1161 = vld [vmem:[%s1160] sm:$0x1]
  %v1163 = vsel %vm158, %v1161, 0
  %1165 = vmatprep.subr.bf16.mxu0 %v143
  %1166 = vmatpush1.bf16.msra.mxu0 %v142
  %1167 = vmatprep.subr.bf16.mxu0 %v145
  %1168 = vmatpush1.bf16.msra.mxu0 %v144
  %1169 = vmatprep.subr.bf16.mxu0 %v147
  %1170 = vmatpush1.bf16.msra.mxu0 %v146
  %1171 = vmatprep.subr.bf16.mxu0 %v149
  %1172 = vmatpush1.bf16.msra.mxu0 %v148
  %1173 = vmatprep.subr.bf16.mxu0 0
  %1174 = vmatpush1.bf16.msra.mxu0 0
  %1175 = vmatprep.subr.bf16.mxu0 0
  %1176 = vmatpush1.bf16.msra.mxu0 0
  %1177 = vmatprep.subr.bf16.mxu0 0
  %1178 = vmatpush1.bf16.msra.mxu0 0
  %1179 = vmatprep.subr.bf16.mxu0 0
  %1180 = vmatpush1.bf16.msra.mxu0 0
  %1181 = vmatprep.subr.bf16.mxu0 0
  %1182 = vmatpush1.bf16.msra.mxu0 0
  %1183 = vmatprep.subr.bf16.mxu0 0
  %1184 = vmatpush1.bf16.msra.mxu0 0
  %1185 = vmatprep.subr.bf16.mxu0 0
  %1186 = vmatpush1.bf16.msra.mxu0 0
  %1187 = vmatprep.subr.bf16.mxu0 0
  %1188 = vmatpush1.bf16.msra.mxu0 0
  %1189 = vmatprep.subr.bf16.mxu0 0
  %1190 = vmatpush1.bf16.msra.mxu0 0
  %1191 = vmatprep.subr.bf16.mxu0 0
  %1192 = vmatpush1.bf16.msra.mxu0 0
  %1193 = vmatprep.subr.bf16.mxu0 0
  %1194 = vmatpush1.bf16.msra.mxu0 0
  %1195 = vmatprep.subr.bf16.mxu0 0
  %1196 = vmatpush1.bf16.msra.mxu0 0
  %1197 = vmatprep.mubr.bf16.mxu0 0
  %1198 = vmatmul.mubr.bf16.gmra.mrb[0].mxu0 %v1163
  %v1199 = vpop.f32.mrb[0].mxu0
  %v1200 = vadd.f32 0.0, %v1199
  %v1201 = vpop.f32.mrb[0].mxu0
  %v1202 = vadd.f32 0.0, %v1201
  %v1203 = vpop.f32.mrb[0].mxu0
  %v1204 = vpop.f32.mrb[0].mxu0
  %1205 = vdwg.mxu0
  %v1207 = vsel %vm158, %v1159, 0
  %1209 = vmatprep.subr.bf16.mxu0 %v228
  %1210 = vmatpush1.bf16.msra.mxu0 %v227
  %1211 = vmatprep.subr.bf16.mxu0 %v230
  %1212 = vmatpush1.bf16.msra.mxu0 %v229
  %1213 = vmatprep.subr.bf16.mxu0 %v232
  %1214 = vmatpush1.bf16.msra.mxu0 %v231
  %1215 = vmatprep.subr.bf16.mxu0 %v234
  %1216 = vmatpush1.bf16.msra.mxu0 %v233
  %1217 = vmatprep.subr.bf16.mxu0 0
  %1218 = vmatpush1.bf16.msra.mxu0 0
  %1219 = vmatprep.subr.bf16.mxu0 0
  %1220 = vmatpush1.bf16.msra.mxu0 0
  %1221 = vmatprep.subr.bf16.mxu0 0
  %1222 = vmatpush1.bf16.msra.mxu0 0
  %1223 = vmatprep.subr.bf16.mxu0 0
  %1224 = vmatpush1.bf16.msra.mxu0 0
  %1225 = vmatprep.subr.bf16.mxu0 0
  %1226 = vmatpush1.bf16.msra.mxu0 0
  %1227 = vmatprep.subr.bf16.mxu0 0
  %1228 = vmatpush1.bf16.msra.mxu0 0
  %1229 = vmatprep.subr.bf16.mxu0 0
  %1230 = vmatpush1.bf16.msra.mxu0 0
  %1231 = vmatprep.subr.bf16.mxu0 0
  %1232 = vmatpush1.bf16.msra.mxu0 0
  %1233 = vmatprep.subr.bf16.mxu0 0
  %1234 = vmatpush1.bf16.msra.mxu0 0
  %1235 = vmatprep.subr.bf16.mxu0 0
  %1236 = vmatpush1.bf16.msra.mxu0 0
  %1237 = vmatprep.subr.bf16.mxu0 0
  %1238 = vmatpush1.bf16.msra.mxu0 0
  %1239 = vmatprep.subr.bf16.mxu0 0
  %1240 = vmatpush1.bf16.msra.mxu0 0
  %1241 = vmatprep.mubr.bf16.mxu0 0
  %1242 = vmatmul.mubr.bf16.gmra.mrb[0].mxu0 %v1207
  %v1243 = vpop.f32.mrb[0].mxu0
  %v1244 = vadd.f32 %v1200, %v1243
  %v1245 = vpop.f32.mrb[0].mxu0
  %v1246 = vadd.f32 %v1202, %v1245
  %v1247 = vpop.f32.mrb[0].mxu0
  %v1248 = vpop.f32.mrb[0].mxu0
  %1249 = vdwg.mxu0
  %v1250 = vadd.f32 %v1244, %v95
  %v1251 = vadd.f32 %v1246, %v99
  %1252 = vrot.lane.b32.xlu0 %v1132, 64
  %v1253 = vpop.permute.xlu0 %1252
  %v1255 = vsel %vm158, %v1253, 0
  %1257 = vmatprep.subr.bf16.mxu0 %v315
  %1258 = vmatpush1.bf16.msra.mxu0 %v314
  %1259 = vmatprep.subr.bf16.mxu0 %v317
  %1260 = vmatpush1.bf16.msra.mxu0 %v316
  %1261 = vmatprep.subr.bf16.mxu0 %v319
  %1262 = vmatpush1.bf16.msra.mxu0 %v318
  %1263 = vmatprep.subr.bf16.mxu0 %v321
  %1264 = vmatpush1.bf16.msra.mxu0 %v320
  %1265 = vmatprep.subr.bf16.mxu0 0
  %1266 = vmatpush1.bf16.msra.mxu0 0
  %1267 = vmatprep.subr.bf16.mxu0 0
  %1268 = vmatpush1.bf16.msra.mxu0 0
  %1269 = vmatprep.subr.bf16.mxu0 0
  %1270 = vmatpush1.bf16.msra.mxu0 0
  %1271 = vmatprep.subr.bf16.mxu0 0
  %1272 = vmatpush1.bf16.msra.mxu0 0
  %1273 = vmatprep.subr.bf16.mxu0 0
  %1274 = vmatpush1.bf16.msra.mxu0 0
  %1275 = vmatprep.subr.bf16.mxu0 0
  %1276 = vmatpush1.bf16.msra.mxu0 0
  %1277 = vmatprep.subr.bf16.mxu0 0
  %1278 = vmatpush1.bf16.msra.mxu0 0
  %1279 = vmatprep.subr.bf16.mxu0 0
  %1280 = vmatpush1.bf16.msra.mxu0 0
  %1281 = vmatprep.subr.bf16.mxu0 0
  %1282 = vmatpush1.bf16.msra.mxu0 0
  %1283 = vmatprep.subr.bf16.mxu0 0
  %1284 = vmatpush1.bf16.msra.mxu0 0
  %1285 = vmatprep.subr.bf16.mxu0 0
  %1286 = vmatpush1.bf16.msra.mxu0 0
  %1287 = vmatprep.subr.bf16.mxu0 0
  %1288 = vmatpush1.bf16.msra.mxu0 0
  %1289 = vmatprep.mubr.bf16.mxu0 0
  %1290 = vmatmul.mubr.bf16.gmra.mrb[0].mxu0 %v1255
  %v1291 = vpop.f32.mrb[0].mxu0
  %v1292 = vadd.f32 %v107, %v1291
  %v1293 = vpop.f32.mrb[0].mxu0
  %v1294 = vadd.f32 %v111, %v1293
  %v1295 = vpop.f32.mrb[0].mxu0
  %v1296 = vpop.f32.mrb[0].mxu0
  %1297 = vdwg.mxu0
  %v1298 = vadd.f32 %v1250, %v1292
  %v1299 = vxor.u32 %v1298, 2147483648
  %v1300 = vmul.f32 %v1299, 1.442695
  %v1301 = vpow.pop %v1300
  %v1302 = vadd.f32 %v1301, 1.0
  %v1303 = vrcp.pop %v1302
  %v1304 = vmul.f32 1.0, %v1303
  %v1305 = vmul.f32 %v1304, %v1294
  %v1306 = vadd.f32 %v1251, %v1305
  %v1307 = vtanh.pop %v1306
  %v1308 = vsub.f32 1.0, %v1304
  %1310 = vrot.lane.b32.xlu0 %v1307, 64
  %v1311 = vpop.permute.xlu0 %1310
  %v1313 = vmul.f32 %v1308, %v1311
  %v1314 = vmul.f32 %v1304, %v1131
  %v1315 = vadd.f32 %v1313, %v1314
  %v1316 = vpack.c.bf16 %v1315, %v1315
  %v1319 = vunpack.c.l.s4 1966171168
  %v1320 = vunpack.c.0.s8 %v1319
  %v1321 = vlaneseq
  %v1322 = vshrl.u32 %v1321, 7
  %v1323 = vsub.s32 %v1320, %v1322
  %v1324 = vrot.slane %v1316, %v1323
  %v1326 = vunpack.c.l.s4 1966171168
  %v1327 = vunpack.c.0.s8 %v1326
  %v1328 = vlaneseq
  %v1329 = vshrl.u32 %v1328, 7
  %v1330 = vsub.s32 %v1327, %v1329
  %v1331 = vrot.slane %v1324, %v1330
  %1332 = vrot.lane.b32.xlu0 %v1331, 64
  %v1333 = vpop.permute.xlu0 %1332
  %s1335 = scalar_lea.vmem %s7, 5
  %1336 = vst.msk [vmem:[%s1335] sm:$0x1] %vm415, %v1333
  %1337 = vrot.lane.b32.xlu0 %v1331, 32
  %v1338 = vpop.permute.xlu0 %1337
  %s1340 = scalar_lea.vmem %s56, 2
  %1341 = vst.msk [vmem:[%s1340] sm:$0x1] %vm415, %v1338
  %s1342 = scalar_lea.vmem %s0, 6
  %v1343 = vld [vmem:[%s1342] sm:$0x1]
  %s1344 = scalar_lea.vmem %s49, 1
  %v1345 = vld [vmem:[%s1344] sm:$0x1]
  %v1347 = vsel %vm158, %v1345, 0
  %1349 = vmatprep.subr.bf16.mxu0 %v143
  %1350 = vmatpush1.bf16.msra.mxu0 %v142
  %1351 = vmatprep.subr.bf16.mxu0 %v145
  %1352 = vmatpush1.bf16.msra.mxu0 %v144
  %1353 = vmatprep.subr.bf16.mxu0 %v147
  %1354 = vmatpush1.bf16.msra.mxu0 %v146
  %1355 = vmatprep.subr.bf16.mxu0 %v149
  %1356 = vmatpush1.bf16.msra.mxu0 %v148
  %1357 = vmatprep.subr.bf16.mxu0 0
  %1358 = vmatpush1.bf16.msra.mxu0 0
  %1359 = vmatprep.subr.bf16.mxu0 0
  %1360 = vmatpush1.bf16.msra.mxu0 0
  %1361 = vmatprep.subr.bf16.mxu0 0
  %1362 = vmatpush1.bf16.msra.mxu0 0
  %1363 = vmatprep.subr.bf16.mxu0 0
  %1364 = vmatpush1.bf16.msra.mxu0 0
  %1365 = vmatprep.subr.bf16.mxu0 0
  %1366 = vmatpush1.bf16.msra.mxu0 0
  %1367 = vmatprep.subr.bf16.mxu0 0
  %1368 = vmatpush1.bf16.msra.mxu0 0
  %1369 = vmatprep.subr.bf16.mxu0 0
  %1370 = vmatpush1.bf16.msra.mxu0 0
  %1371 = vmatprep.subr.bf16.mxu0 0
  %1372 = vmatpush1.bf16.msra.mxu0 0
  %1373 = vmatprep.subr.bf16.mxu0 0
  %1374 = vmatpush1.bf16.msra.mxu0 0
  %1375 = vmatprep.subr.bf16.mxu0 0
  %1376 = vmatpush1.bf16.msra.mxu0 0
  %1377 = vmatprep.subr.bf16.mxu0 0
  %1378 = vmatpush1.bf16.msra.mxu0 0
  %1379 = vmatprep.subr.bf16.mxu0 0
  %1380 = vmatpush1.bf16.msra.mxu0 0
  %1381 = vmatprep.mubr.bf16.mxu0 0
  %1382 = vmatmul.mubr.bf16.gmra.mrb[0].mxu0 %v1347
  %v1383 = vpop.f32.mrb[0].mxu0
  %v1384 = vadd.f32 0.0, %v1383
  %v1385 = vpop.f32.mrb[0].mxu0
  %v1386 = vadd.f32 0.0, %v1385
  %v1387 = vpop.f32.mrb[0].mxu0
  %v1388 = vpop.f32.mrb[0].mxu0
  %1389 = vdwg.mxu0
  %v1391 = vsel %vm158, %v1343, 0
  %1393 = vmatprep.subr.bf16.mxu0 %v228
  %1394 = vmatpush1.bf16.msra.mxu0 %v227
  %1395 = vmatprep.subr.bf16.mxu0 %v230
  %1396 = vmatpush1.bf16.msra.mxu0 %v229
  %1397 = vmatprep.subr.bf16.mxu0 %v232
  %1398 = vmatpush1.bf16.msra.mxu0 %v231
  %1399 = vmatprep.subr.bf16.mxu0 %v234
  %1400 = vmatpush1.bf16.msra.mxu0 %v233
  %1401 = vmatprep.subr.bf16.mxu0 0
  %1402 = vmatpush1.bf16.msra.mxu0 0
  %1403 = vmatprep.subr.bf16.mxu0 0
  %1404 = vmatpush1.bf16.msra.mxu0 0
  %1405 = vmatprep.subr.bf16.mxu0 0
  %1406 = vmatpush1.bf16.msra.mxu0 0
  %1407 = vmatprep.subr.bf16.mxu0 0
  %1408 = vmatpush1.bf16.msra.mxu0 0
  %1409 = vmatprep.subr.bf16.mxu0 0
  %1410 = vmatpush1.bf16.msra.mxu0 0
  %1411 = vmatprep.subr.bf16.mxu0 0
  %1412 = vmatpush1.bf16.msra.mxu0 0
  %1413 = vmatprep.subr.bf16.mxu0 0
  %1414 = vmatpush1.bf16.msra.mxu0 0
  %1415 = vmatprep.subr.bf16.mxu0 0
  %1416 = vmatpush1.bf16.msra.mxu0 0
  %1417 = vmatprep.subr.bf16.mxu0 0
  %1418 = vmatpush1.bf16.msra.mxu0 0
  %1419 = vmatprep.subr.bf16.mxu0 0
  %1420 = vmatpush1.bf16.msra.mxu0 0
  %1421 = vmatprep.subr.bf16.mxu0 0
  %1422 = vmatpush1.bf16.msra.mxu0 0
  %1423 = vmatprep.subr.bf16.mxu0 0
  %1424 = vmatpush1.bf16.msra.mxu0 0
  %1425 = vmatprep.mubr.bf16.mxu0 0
  %1426 = vmatmul.mubr.bf16.gmra.mrb[0].mxu0 %v1391
  %v1427 = vpop.f32.mrb[0].mxu0
  %v1428 = vadd.f32 %v1384, %v1427
  %v1429 = vpop.f32.mrb[0].mxu0
  %v1430 = vadd.f32 %v1386, %v1429
  %v1431 = vpop.f32.mrb[0].mxu0
  %v1432 = vpop.f32.mrb[0].mxu0
  %1433 = vdwg.mxu0
  %v1434 = vadd.f32 %v1428, %v95
  %v1435 = vadd.f32 %v1430, %v99
  %1436 = vrot.lane.b32.xlu0 %v1316, 64
  %v1437 = vpop.permute.xlu0 %1436
  %v1439 = vsel %vm158, %v1437, 0
  %1441 = vmatprep.subr.bf16.mxu0 %v315
  %1442 = vmatpush1.bf16.msra.mxu0 %v314
  %1443 = vmatprep.subr.bf16.mxu0 %v317
  %1444 = vmatpush1.bf16.msra.mxu0 %v316
  %1445 = vmatprep.subr.bf16.mxu0 %v319
  %1446 = vmatpush1.bf16.msra.mxu0 %v318
  %1447 = vmatprep.subr.bf16.mxu0 %v321
  %1448 = vmatpush1.bf16.msra.mxu0 %v320
  %1449 = vmatprep.subr.bf16.mxu0 0
  %1450 = vmatpush1.bf16.msra.mxu0 0
  %1451 = vmatprep.subr.bf16.mxu0 0
  %1452 = vmatpush1.bf16.msra.mxu0 0
  %1453 = vmatprep.subr.bf16.mxu0 0
  %1454 = vmatpush1.bf16.msra.mxu0 0
  %1455 = vmatprep.subr.bf16.mxu0 0
  %1456 = vmatpush1.bf16.msra.mxu0 0
  %1457 = vmatprep.subr.bf16.mxu0 0
  %1458 = vmatpush1.bf16.msra.mxu0 0
  %1459 = vmatprep.subr.bf16.mxu0 0
  %1460 = vmatpush1.bf16.msra.mxu0 0
  %1461 = vmatprep.subr.bf16.mxu0 0
  %1462 = vmatpush1.bf16.msra.mxu0 0
  %1463 = vmatprep.subr.bf16.mxu0 0
  %1464 = vmatpush1.bf16.msra.mxu0 0
  %1465 = vmatprep.subr.bf16.mxu0 0
  %1466 = vmatpush1.bf16.msra.mxu0 0
  %1467 = vmatprep.subr.bf16.mxu0 0
  %1468 = vmatpush1.bf16.msra.mxu0 0
  %1469 = vmatprep.subr.bf16.mxu0 0
  %1470 = vmatpush1.bf16.msra.mxu0 0
  %1471 = vmatprep.subr.bf16.mxu0 0
  %1472 = vmatpush1.bf16.msra.mxu0 0
  %1473 = vmatprep.mubr.bf16.mxu0 0
  %1474 = vmatmul.mubr.bf16.gmra.mrb[0].mxu0 %v1439
  %v1475 = vpop.f32.mrb[0].mxu0
  %v1476 = vadd.f32 %v107, %v1475
  %v1477 = vpop.f32.mrb[0].mxu0
  %v1478 = vadd.f32 %v111, %v1477
  %v1479 = vpop.f32.mrb[0].mxu0
  %v1480 = vpop.f32.mrb[0].mxu0
  %1481 = vdwg.mxu0
  %v1482 = vadd.f32 %v1434, %v1476
  %v1483 = vxor.u32 %v1482, 2147483648
  %v1484 = vmul.f32 %v1483, 1.442695
  %v1485 = vpow.pop %v1484
  %v1486 = vadd.f32 %v1485, 1.0
  %v1487 = vrcp.pop %v1486
  %v1488 = vmul.f32 1.0, %v1487
  %v1489 = vmul.f32 %v1488, %v1478
  %v1490 = vadd.f32 %v1435, %v1489
  %v1491 = vtanh.pop %v1490
  %v1492 = vsub.f32 1.0, %v1488
  %1494 = vrot.lane.b32.xlu0 %v1491, 64
  %v1495 = vpop.permute.xlu0 %1494
  %v1497 = vmul.f32 %v1492, %v1495
  %v1498 = vmul.f32 %v1488, %v1315
  %v1499 = vadd.f32 %v1497, %v1498
  %v1500 = vpack.c.bf16 %v1499, %v1499
  %v1503 = vunpack.c.l.s4 1966171168
  %v1504 = vunpack.c.0.s8 %v1503
  %v1505 = vlaneseq
  %v1506 = vshrl.u32 %v1505, 7
  %v1507 = vsub.s32 %v1504, %v1506
  %v1508 = vrot.slane %v1500, %v1507
  %v1510 = vunpack.c.l.s4 1966171168
  %v1511 = vunpack.c.0.s8 %v1510
  %v1512 = vlaneseq
  %v1513 = vshrl.u32 %v1512, 7
  %v1514 = vsub.s32 %v1511, %v1513
  %v1515 = vrot.slane %v1508, %v1514
  %1516 = vrot.lane.b32.xlu0 %v1515, 64
  %v1517 = vpop.permute.xlu0 %1516
  %s1519 = scalar_lea.vmem %s7, 6
  %1520 = vst.msk [vmem:[%s1519] sm:$0x1] %vm415, %v1517
  %1521 = vrot.lane.b32.xlu0 %v1515, 32
  %v1522 = vpop.permute.xlu0 %1521
  %s1524 = scalar_lea.vmem %s56, 1
  %1525 = vst.msk [vmem:[%s1524] sm:$0x1] %vm415, %v1522
  %s1526 = scalar_lea.vmem %s0, 7
  %v1527 = vld [vmem:[%s1526] sm:$0x1]
  %v1528 = vld [vmem:[%s49] sm:$0x1]
  %v1530 = vsel %vm158, %v1528, 0
  %1532 = vmatprep.subr.bf16.mxu0 %v143
  %1533 = vmatpush1.bf16.msra.mxu0 %v142
  %1534 = vmatprep.subr.bf16.mxu0 %v145
  %1535 = vmatpush1.bf16.msra.mxu0 %v144
  %1536 = vmatprep.subr.bf16.mxu0 %v147
  %1537 = vmatpush1.bf16.msra.mxu0 %v146
  %1538 = vmatprep.subr.bf16.mxu0 %v149
  %1539 = vmatpush1.bf16.msra.mxu0 %v148
  %1540 = vmatprep.subr.bf16.mxu0 0
  %1541 = vmatpush1.bf16.msra.mxu0 0
  %1542 = vmatprep.subr.bf16.mxu0 0
  %1543 = vmatpush1.bf16.msra.mxu0 0
  %1544 = vmatprep.subr.bf16.mxu0 0
  %1545 = vmatpush1.bf16.msra.mxu0 0
  %1546 = vmatprep.subr.bf16.mxu0 0
  %1547 = vmatpush1.bf16.msra.mxu0 0
  %1548 = vmatprep.subr.bf16.mxu0 0
  %1549 = vmatpush1.bf16.msra.mxu0 0
  %1550 = vmatprep.subr.bf16.mxu0 0
  %1551 = vmatpush1.bf16.msra.mxu0 0
  %1552 = vmatprep.subr.bf16.mxu0 0
  %1553 = vmatpush1.bf16.msra.mxu0 0
  %1554 = vmatprep.subr.bf16.mxu0 0
  %1555 = vmatpush1.bf16.msra.mxu0 0
  %1556 = vmatprep.subr.bf16.mxu0 0
  %1557 = vmatpush1.bf16.msra.mxu0 0
  %1558 = vmatprep.subr.bf16.mxu0 0
  %1559 = vmatpush1.bf16.msra.mxu0 0
  %1560 = vmatprep.subr.bf16.mxu0 0
  %1561 = vmatpush1.bf16.msra.mxu0 0
  %1562 = vmatprep.subr.bf16.mxu0 0
  %1563 = vmatpush1.bf16.msra.mxu0 0
  %1564 = vmatprep.mubr.bf16.mxu0 0
  %1565 = vmatmul.mubr.bf16.gmra.mrb[0].mxu0 %v1530
  %v1566 = vpop.f32.mrb[0].mxu0
  %v1567 = vadd.f32 0.0, %v1566
  %v1568 = vpop.f32.mrb[0].mxu0
  %v1569 = vadd.f32 0.0, %v1568
  %v1570 = vpop.f32.mrb[0].mxu0
  %v1571 = vpop.f32.mrb[0].mxu0
  %1572 = vdwg.mxu0
  %v1574 = vsel %vm158, %v1527, 0
  %1576 = vmatprep.subr.bf16.mxu0 %v228
  %1577 = vmatpush1.bf16.msra.mxu0 %v227
  %1578 = vmatprep.subr.bf16.mxu0 %v230
  %1579 = vmatpush1.bf16.msra.mxu0 %v229
  %1580 = vmatprep.subr.bf16.mxu0 %v232
  %1581 = vmatpush1.bf16.msra.mxu0 %v231
  %1582 = vmatprep.subr.bf16.mxu0 %v234
  %1583 = vmatpush1.bf16.msra.mxu0 %v233
  %1584 = vmatprep.subr.bf16.mxu0 0
  %1585 = vmatpush1.bf16.msra.mxu0 0
  %1586 = vmatprep.subr.bf16.mxu0 0
  %1587 = vmatpush1.bf16.msra.mxu0 0
  %1588 = vmatprep.subr.bf16.mxu0 0
  %1589 = vmatpush1.bf16.msra.mxu0 0
  %1590 = vmatprep.subr.bf16.mxu0 0
  %1591 = vmatpush1.bf16.msra.mxu0 0
  %1592 = vmatprep.subr.bf16.mxu0 0
  %1593 = vmatpush1.bf16.msra.mxu0 0
  %1594 = vmatprep.subr.bf16.mxu0 0
  %1595 = vmatpush1.bf16.msra.mxu0 0
  %1596 = vmatprep.subr.bf16.mxu0 0
  %1597 = vmatpush1.bf16.msra.mxu0 0
  %1598 = vmatprep.subr.bf16.mxu0 0
  %1599 = vmatpush1.bf16.msra.mxu0 0
  %1600 = vmatprep.subr.bf16.mxu0 0
  %1601 = vmatpush1.bf16.msra.mxu0 0
  %1602 = vmatprep.subr.bf16.mxu0 0
  %1603 = vmatpush1.bf16.msra.mxu0 0
  %1604 = vmatprep.subr.bf16.mxu0 0
  %1605 = vmatpush1.bf16.msra.mxu0 0
  %1606 = vmatprep.subr.bf16.mxu0 0
  %1607 = vmatpush1.bf16.msra.mxu0 0
  %1608 = vmatprep.mubr.bf16.mxu0 0
  %1609 = vmatmul.mubr.bf16.gmra.mrb[0].mxu0 %v1574
  %v1610 = vpop.f32.mrb[0].mxu0
  %v1611 = vadd.f32 %v1567, %v1610
  %v1612 = vpop.f32.mrb[0].mxu0
  %v1613 = vadd.f32 %v1569, %v1612
  %v1614 = vpop.f32.mrb[0].mxu0
  %v1615 = vpop.f32.mrb[0].mxu0
  %1616 = vdwg.mxu0
  %v1617 = vadd.f32 %v1611, %v95
  %v1618 = vadd.f32 %v1613, %v99
  %1619 = vrot.lane.b32.xlu0 %v1500, 64
  %v1620 = vpop.permute.xlu0 %1619
  %v1622 = vsel %vm158, %v1620, 0
  %1624 = vmatprep.subr.bf16.mxu0 %v315
  %1625 = vmatpush1.bf16.msra.mxu0 %v314
  %1626 = vmatprep.subr.bf16.mxu0 %v317
  %1627 = vmatpush1.bf16.msra.mxu0 %v316
  %1628 = vmatprep.subr.bf16.mxu0 %v319
  %1629 = vmatpush1.bf16.msra.mxu0 %v318
  %1630 = vmatprep.subr.bf16.mxu0 %v321
  %1631 = vmatpush1.bf16.msra.mxu0 %v320
  %1632 = vmatprep.subr.bf16.mxu0 0
  %1633 = vmatpush1.bf16.msra.mxu0 0
  %1634 = vmatprep.subr.bf16.mxu0 0
  %1635 = vmatpush1.bf16.msra.mxu0 0
  %1636 = vmatprep.subr.bf16.mxu0 0
  %1637 = vmatpush1.bf16.msra.mxu0 0
  %1638 = vmatprep.subr.bf16.mxu0 0
  %1639 = vmatpush1.bf16.msra.mxu0 0
  %1640 = vmatprep.subr.bf16.mxu0 0
  %1641 = vmatpush1.bf16.msra.mxu0 0
  %1642 = vmatprep.subr.bf16.mxu0 0
  %1643 = vmatpush1.bf16.msra.mxu0 0
  %1644 = vmatprep.subr.bf16.mxu0 0
  %1645 = vmatpush1.bf16.msra.mxu0 0
  %1646 = vmatprep.subr.bf16.mxu0 0
  %1647 = vmatpush1.bf16.msra.mxu0 0
  %1648 = vmatprep.subr.bf16.mxu0 0
  %1649 = vmatpush1.bf16.msra.mxu0 0
  %1650 = vmatprep.subr.bf16.mxu0 0
  %1651 = vmatpush1.bf16.msra.mxu0 0
  %1652 = vmatprep.subr.bf16.mxu0 0
  %1653 = vmatpush1.bf16.msra.mxu0 0
  %1654 = vmatprep.subr.bf16.mxu0 0
  %1655 = vmatpush1.bf16.msra.mxu0 0
  %1656 = vmatprep.mubr.bf16.mxu0 0
  %1657 = vmatmul.mubr.bf16.gmra.mrb[0].mxu0 %v1622
  %v1658 = vpop.f32.mrb[0].mxu0
  %v1659 = vadd.f32 %v107, %v1658
  %v1660 = vpop.f32.mrb[0].mxu0
  %v1661 = vadd.f32 %v111, %v1660
  %v1662 = vpop.f32.mrb[0].mxu0
  %v1663 = vpop.f32.mrb[0].mxu0
  %1664 = vdwg.mxu0
  %v1665 = vadd.f32 %v1617, %v1659
  %v1666 = vxor.u32 %v1665, 2147483648
  %v1667 = vmul.f32 %v1666, 1.442695
  %v1668 = vpow.pop %v1667
  %v1669 = vadd.f32 %v1668, 1.0
  %v1670 = vrcp.pop %v1669
  %v1671 = vmul.f32 1.0, %v1670
  %v1672 = vmul.f32 %v1671, %v1661
  %v1673 = vadd.f32 %v1618, %v1672
  %v1674 = vtanh.pop %v1673
  %v1675 = vsub.f32 1.0, %v1671
  %1677 = vrot.lane.b32.xlu0 %v1674, 64
  %v1678 = vpop.permute.xlu0 %1677
  %v1680 = vmul.f32 %v1675, %v1678
  %v1681 = vmul.f32 %v1671, %v1499
  %v1682 = vadd.f32 %v1680, %v1681
  %v1683 = vpack.c.bf16 %v1682, %v1682
  %v1686 = vunpack.c.l.s4 1966171168
  %v1687 = vunpack.c.0.s8 %v1686
  %v1688 = vlaneseq
  %v1689 = vshrl.u32 %v1688, 7
  %v1690 = vsub.s32 %v1687, %v1689
  %v1691 = vrot.slane %v1683, %v1690
  %v1693 = vunpack.c.l.s4 1966171168
  %v1694 = vunpack.c.0.s8 %v1693
  %v1695 = vlaneseq
  %v1696 = vshrl.u32 %v1695, 7
  %v1697 = vsub.s32 %v1694, %v1696
  %v1698 = vrot.slane %v1691, %v1697
  %1699 = vrot.lane.b32.xlu0 %v1698, 64
  %v1700 = vpop.permute.xlu0 %1699
  %s1702 = scalar_lea.vmem %s7, 7
  %1703 = vst.msk [vmem:[%s1702] sm:$0x1] %vm415, %v1700
  %1704 = vrot.lane.b32.xlu0 %v1698, 32
  %v1705 = vpop.permute.xlu0 %1704
  %1707 = vst.msk [vmem:[%s56] sm:$0x1] %vm415, %v1705
  %1709 = vrot.lane.b32.xlu0 %v1682, 64
  %v1710 = vpop.permute.xlu0 %1709
  %vm1712 = vcmask 517120
  %1713 = vst.msk [vmem:[#allocation2] sm:$0x3] %vm1712, %v1710
  %s1714 = ssub.s32 0, 0
  %s1715 = smul.u32 8, %s1714
  %p1716 = scmp.lt.s32.totalorder %s1715, 7
  %s1717 = scalar_select %p1716, %s1715, 7
  %s1718 = scalar_lea.vmem %s8, %s1717
  // Predicated region
  $region34: #{birnn_gru_forward.4} parent=0 // pred_check
    _
  $region35: #{birnn_gru_forward.4} parent=0 // pred_check_branch
    %1720 = sbr.rel (0) target = $region37
  $region36: #{birnn_gru_forward.4} parent=0 // pred_region
    _
  $region37: #{birnn_gru_forward.4} parent=0 // pred_fallthru
    _
  // Predicated region
  $region38: #{birnn_gru_forward.4} parent=0 // pred_check
    _
  $region39: #{birnn_gru_forward.4} parent=0 // pred_check_branch
    %1722 = sbr.rel (0) target = $region41
  $region40: #{birnn_gru_forward.4} parent=0 // pred_region
    %s1723 = ssub.s32 0, 0
    %s1724 = smul.u32 8, %s1723
  $region41: #{birnn_gru_forward.4} parent=0 // pred_fallthru
    _
  // Predicated region
  $region42: #{birnn_gru_forward.4} parent=0 // pred_check
    _
  $region43: #{birnn_gru_forward.4} parent=0 // pred_check_branch
    %1726 = sbr.rel (0) target = $region45
  $region44: #{birnn_gru_forward.4} parent=0 // pred_region
    _
  $region45: #{birnn_gru_forward.4} parent=0 // pred_fallthru
    _
  // Predicated region
  $region46: #{birnn_gru_forward.4} parent=0 // pred_check
    _
  $region47: #{birnn_gru_forward.4} parent=0 // pred_check_branch
    %1728 = sbr.rel (0) target = $region49
  $region48: #{birnn_gru_forward.4} parent=0 // pred_region
    %s1729 = ssub.s32 0, 0
    %s1730 = smul.u32 8, %s1729
    %p1731 = scmp.lt.s32.totalorder %s1730, 7
    %s1732 = scalar_select %p1731, %s1730, 7
    %s1733 = scalar_lea.vmem %s8, %s1732
  $region49: #{birnn_gru_forward.4} parent=0 // pred_fallthru
    _

</llo_original>
